<compile_context>
chip_gen: v7x
topology: tpu7x:2x2x1
jax: 0.10.0
libtpu: 0.0.40
codegen_flags: <defaults>
</compile_context>

<pallas_src>
import functools

import jax
import jax.numpy as jnp
from jax import lax
from jax.experimental import pallas as pl
from jax.experimental.pallas import tpu as pltpu


def _im2col_3x3_flat(a, H, W, left_ok, right_ok):
    """(H*W, C) flattened activation -> (H*W, 9*C) patch matrix, 'same' pad.

    Taps are ordered (ky, kx) row-major with channels innermost, matching a
    (3, 3, Cin, Cout) HWIO weight reshaped to (9*Cin, Cout).  `a` should
    already be in the matmul dtype (bf16) so the shifts/concat move half the
    bytes and the cast is not repeated 9x.
    """
    HW, C = a.shape
    P = W + 1  # zero rows covering the largest flat shift (|dy*W + dx| <= W+1)
    zpad = jnp.zeros((P, C), dtype=a.dtype)
    buf = jnp.concatenate([zpad, a, zpad], axis=0)        # (HW + 2P, C)

    taps = []
    for dy in (-1, 0, 1):
        for dx in (-1, 0, 1):
            off = P + dy * W + dx                         # static Python int >= 0
            t = buf[off:off + HW, :]                      # shifted (HW, C) slice
            # Vertical (dy) out-of-range reads land in the zero padding; only
            # the horizontal row-wrap (dx) needs masking.
            if dx == -1:
                t = jnp.where(left_ok, t, jnp.zeros_like(t))
            elif dx == 1:
                t = jnp.where(right_ok, t, jnp.zeros_like(t))
            taps.append(t)
    return jnp.concatenate(taps, axis=-1)                 # (HW, 9*C)


def _dip_fused_kernel(p1_ref, w1_ref, b1_ref, w2_ref, b2_ref, w3_ref, b3_ref,
                      o_ref, *, H, W):
    """Whole DIPModel forward for one batch element, resident in VMEM.

    p1_ref: (1, H*W, 27)   bf16  im2col'd input (layer-1 patches)
    wK_ref: (9*Cin_K, Cout_K) bf16 reshaped weights
    bK_ref: (1, Cout_K)    f32   biases
    o_ref : (1, H*W, 3)    f32   output
    """
    HW = H * W
    # x-coordinate of every flattened output row; the two horizontal edge
    # masks are computed once and reused by both in-kernel im2cols.
    x_idx = lax.broadcasted_iota(jnp.int32, (HW, 1), 0) % W
    left_ok = x_idx > 0
    right_ok = x_idx < W - 1

    # ---- layer 1: 3 -> 64, ReLU (K = 27, im2col done in wrapper) ----
    a1 = jnp.dot(p1_ref[0], w1_ref[...], preferred_element_type=jnp.float32)
    a1 = jnp.maximum(a1 + b1_ref[...], 0.0).astype(jnp.bfloat16)   # (HW, 64)

    # ---- layer 2: 64 -> 128, ReLU (single K = 576 matmul) ----
    p2 = _im2col_3x3_flat(a1, H, W, left_ok, right_ok)             # (HW, 576)
    a2 = jnp.dot(p2, w2_ref[...], preferred_element_type=jnp.float32)
    a2 = jnp.maximum(a2 + b2_ref[...], 0.0).astype(jnp.bfloat16)   # (HW, 128)

    # ---- layer 3: 128 -> 3 (single K = 1152 matmul, no ReLU) ----
    p3 = _im2col_3x3_flat(a2, H, W, left_ok, right_ok)             # (HW, 1152)
    a3 = jnp.dot(p3, w3_ref[...], preferred_element_type=jnp.float32)
    o_ref[0] = (a3 + b3_ref[...]).astype(o_ref.dtype)              # (HW, 3)


def _im2col_input(x_nhwc):
    """(N, H, W, Cin) -> (N, H*W, 9*Cin) 'same'-padded 3x3 patch matrix."""
    N, H, W, Cin = x_nhwc.shape
    xp = jnp.pad(x_nhwc, ((0, 0), (1, 1), (1, 1), (0, 0)))
    taps = [xp[:, ky:ky + H, kx:kx + W, :]
            for ky in range(3) for kx in range(3)]
    return jnp.concatenate(taps, axis=-1).reshape(N, H * W, 9 * Cin)


def dip_model_forward(x_nchw, params):
    """Forward pass of DIPModel.  x_nchw: (N, 3, H, W) -> (N, 3, H, W)."""
    (w1, b1), (w2, b2), (w3, b3) = params
    N, Cin, H, W = x_nchw.shape
    HW = H * W
    c1, c2, c3 = w1.shape[-1], w2.shape[-1], w3.shape[-1]

    x_nhwc = jnp.transpose(x_nchw, (0, 2, 3, 1))                  # once
    p1 = _im2col_input(x_nhwc).astype(jnp.bfloat16)               # (N, HW, 27)

    # (3,3,Cin,Cout) -> (9*Cin, Cout); row order (ky, kx, cin) matches im2col.
    w1r = w1.reshape(-1, c1).astype(jnp.bfloat16)
    w2r = w2.reshape(-1, c2).astype(jnp.bfloat16)
    w3r = w3.reshape(-1, c3).astype(jnp.bfloat16)
    b1r, b2r, b3r = b1.reshape(1, c1), b2.reshape(1, c2), b3.reshape(1, c3)

    kernel = functools.partial(_dip_fused_kernel, H=H, W=W)

    out_flat = pl.pallas_call(
        kernel,
        out_shape=jax.ShapeDtypeStruct((N, HW, c3), jnp.float32),
        grid_spec=pltpu.PrefetchScalarGridSpec(
            num_scalar_prefetch=0,
            grid=(N,),
            in_specs=[
                pl.BlockSpec((1, HW, 9 * Cin), lambda n: (n, 0, 0)),
                pl.BlockSpec(w1r.shape, lambda n: (0, 0)),
                pl.BlockSpec(b1r.shape, lambda n: (0, 0)),
                pl.BlockSpec(w2r.shape, lambda n: (0, 0)),
                pl.BlockSpec(b2r.shape, lambda n: (0, 0)),
                pl.BlockSpec(w3r.shape, lambda n: (0, 0)),
                pl.BlockSpec(b3r.shape, lambda n: (0, 0)),
            ],
            out_specs=pl.BlockSpec((1, HW, c3), lambda n: (n, 0, 0)),
        ),
        compiler_params=pltpu.CompilerParams(
            dimension_semantics=("parallel",)),
    )(p1, w1r, b1r, w2r, b2r, w3r, b3r)

    out_nhwc = out_flat.reshape(N, H, W, c3)
    return jnp.transpose(out_nhwc, (0, 3, 1, 2))                  # once


def init_conv_params(key, cin, cout, ksize=3):
    """PyTorch Conv2d default init: uniform +/- 1/sqrt(fan_in), HWIO layout."""
    fan_in = cin * ksize * ksize
    bound = 1.0 / jnp.sqrt(float(fan_in))
    kw, kb = jax.random.split(key)
    w = jax.random.uniform(kw, (ksize, ksize, cin, cout), jnp.float32,
                           minval=-bound, maxval=bound)
    b = jax.random.uniform(kb, (cout,), jnp.float32, minval=-bound, maxval=bound)
    return w, b


def _reference_forward(x_nchw, params):
    """Pure-JAX f32 reference (lax.conv) for a numerical sanity check."""
    (w1, b1), (w2, b2), (w3, b3) = params
    dn = ('NHWC', 'HWIO', 'NHWC')
    x = jnp.transpose(x_nchw, (0, 2, 3, 1))
    x = jax.nn.relu(lax.conv_general_dilated(x, w1, (1, 1), 'SAME',
                                             dimension_numbers=dn) + b1)
    x = jax.nn.relu(lax.conv_general_dilated(x, w2, (1, 1), 'SAME',
                                             dimension_numbers=dn) + b2)
    x = lax.conv_general_dilated(x, w3, (1, 1), 'SAME',
                                 dimension_numbers=dn) + b3
    return jnp.transpose(x, (0, 3, 1, 2))


if __name__ == "__main__":
    key = jax.random.PRNGKey(0)
    kx, k1, k2, k3 = jax.random.split(key, 4)

    # Small shapes consistent with the module: batch=2, 3 channels, 16x16.
    x = jax.random.normal(kx, (2, 3, 16, 16), dtype=jnp.float32)

    params = (
        init_conv_params(k1, 3, 64),
        init_conv_params(k2, 64, 128),
        init_conv_params(k3, 128, 3),
    )

    out = jax.jit(dip_model_forward)(x, params)
    jax.block_until_ready(out)
    assert out.shape == (2, 3, 16, 16), out.shape

    # bf16-matmul / f32-accumulate vs. f32 reference: generous tolerance.
    ref = _reference_forward(x, params)
    err = float(jnp.max(jnp.abs(out - ref)))
    assert err < 5e-2, f"max abs error vs f32 reference: {err}"

    print("KERNEL_OK")
</pallas_src>

<mosaic_0001>
module attributes {stable_mosaic.version = 11 : i64} {
  func.func @_dip_fused_kernel(%arg0: i32, %arg1: memref<1x256x27xbf16, #tpu.memory_space<vmem>>, %arg2: memref<27x64xbf16, #tpu.memory_space<vmem>>, %arg3: memref<1x64xf32, #tpu.memory_space<vmem>>, %arg4: memref<576x128xbf16, #tpu.memory_space<vmem>>, %arg5: memref<1x128xf32, #tpu.memory_space<vmem>>, %arg6: memref<1152x3xbf16, #tpu.memory_space<vmem>>, %arg7: memref<1x3xf32, #tpu.memory_space<vmem>>, %arg8: memref<1x256x3xf32, #tpu.memory_space<vmem>>) attributes {dimension_semantics = [#tpu.dimension_semantics<parallel>], iteration_bounds = array<i64: 2>, scalar_prefetch = 0 : i64, scratch_operands = 0 : i64, tpu.core_type = #tpu.core_type<tc>, window_params = [{transform_indices = @transform_0, window_bounds = array<i64: 1, 256, 27>}, {pipeline_mode = #tpu.pipeline_mode<synchronous>, transform_indices = @transform_1, window_bounds = array<i64: 27, 64>}, {pipeline_mode = #tpu.pipeline_mode<synchronous>, transform_indices = @transform_2, window_bounds = array<i64: 1, 64>}, {pipeline_mode = #tpu.pipeline_mode<synchronous>, transform_indices = @transform_3, window_bounds = array<i64: 576, 128>}, {pipeline_mode = #tpu.pipeline_mode<synchronous>, transform_indices = @transform_4, window_bounds = array<i64: 1, 128>}, {pipeline_mode = #tpu.pipeline_mode<synchronous>, transform_indices = @transform_5, window_bounds = array<i64: 1152, 3>}, {pipeline_mode = #tpu.pipeline_mode<synchronous>, transform_indices = @transform_6, window_bounds = array<i64: 1, 3>}, {transform_indices = @transform_7, window_bounds = array<i64: 1, 256, 3>}]} {
    %0 = tpu.iota {dimensions = array<i32: 0>} : vector<256x1xi32>
    %c16_i32 = arith.constant 16 : i32
    %c0_i32 = arith.constant 0 : i32
    %1 = arith.cmpi eq, %c16_i32, %c0_i32 : i32
    %c1_i32 = arith.constant 1 : i32
    %2 = arith.select %1, %c1_i32, %c16_i32 : i32
    %3 = vector.broadcast %2 : i32 to vector<256x1xi32>
    %4 = arith.remsi %0, %3 : vector<256x1xi32>
    %c0_i32_0 = arith.constant 0 : i32
    %5 = vector.broadcast %c0_i32_0 : i32 to vector<256x1xi32>
    %6 = arith.cmpi ne, %4, %5 : vector<256x1xi32>
    %c0_i32_1 = arith.constant 0 : i32
    %7 = vector.broadcast %c0_i32_1 : i32 to vector<256x1xi32>
    %8 = arith.cmpi slt, %4, %7 : vector<256x1xi32>
    %c0_i32_2 = arith.constant 0 : i32
    %9 = arith.cmpi slt, %2, %c0_i32_2 : i32
    %10 = vector.broadcast %9 : i1 to vector<256x1xi1>
    %11 = vector.broadcast %10 : vector<256x1xi1> to vector<256x1xi1>
    %12 = arith.xori %8, %11 : vector<256x1xi1>
    %13 = arith.andi %12, %6 : vector<256x1xi1>
    %14 = vector.broadcast %2 : i32 to vector<256x1xi32>
    %15 = arith.addi %4, %14 : vector<256x1xi32>
    %16 = arith.select %13, %15, %4 : vector<256x1xi1>, vector<256x1xi32>
    %c0_i32_3 = arith.constant 0 : i32
    %17 = vector.broadcast %c0_i32_3 : i32 to vector<256x1xi32>
    %18 = arith.cmpi sgt, %16, %17 : vector<256x1xi32>
    %c15_i32 = arith.constant 15 : i32
    %19 = vector.broadcast %c15_i32 : i32 to vector<256x1xi32>
    %20 = arith.cmpi slt, %16, %19 : vector<256x1xi32>
    %c0 = arith.constant 0 : index
    %c0_4 = arith.constant 0 : index
    %c0_5 = arith.constant 0 : index
    %21 = vector.load %arg1[%c0, %c0_4, %c0_5] : memref<1x256x27xbf16, #tpu.memory_space<vmem>>, vector<1x256x27xbf16>
    %22 = vector.shape_cast %21 : vector<1x256x27xbf16> to vector<256x27xbf16>
    %c0_6 = arith.constant 0 : index
    %c0_7 = arith.constant 0 : index
    %23 = vector.load %arg2[%c0_6, %c0_7] : memref<27x64xbf16, #tpu.memory_space<vmem>>, vector<27x64xbf16>
    %cst = arith.constant dense<0.000000e+00> : vector<256x64xf32>
    %24 = tpu.matmul %22, %23, %cst {dimension_numbers = #tpu.dot_dimension_numbers<[1], [0], [0], [1], [0, 0, 1, 1], [], []>} : vector<256x27xbf16>, vector<27x64xbf16>, vector<256x64xf32> -> vector<256x64xf32>
    %c0_8 = arith.constant 0 : index
    %c0_9 = arith.constant 0 : index
    %25 = vector.load %arg3[%c0_8, %c0_9] : memref<1x64xf32, #tpu.memory_space<vmem>>, vector<1x64xf32>
    %26 = vector.broadcast %25 : vector<1x64xf32> to vector<256x64xf32>
    %27 = arith.addf %24, %26 : vector<256x64xf32>
    %cst_10 = arith.constant 0.000000e+00 : f32
    %28 = vector.broadcast %cst_10 : f32 to vector<256x64xf32>
    %29 = arith.maximumf %27, %28 : vector<256x64xf32>
    %30 = arith.truncf %29 : vector<256x64xf32> to vector<256x64xbf16>
    %cst_11 = arith.constant 0.000000e+00 : bf16
    %31 = vector.broadcast %cst_11 : bf16 to vector<17x64xbf16>
    %32 = tpu.concatenate %31, %30, %31 in 0 : vector<17x64xbf16>, vector<256x64xbf16>, vector<17x64xbf16> -> vector<290x64xbf16>
    %33 = vector.extract_strided_slice %32 {offsets = [0, 0], sizes = [256, 64], strides = [1, 1]} : vector<290x64xbf16> to vector<256x64xbf16>
    %cst_12 = arith.constant 0.000000e+00 : bf16
    %34 = vector.broadcast %cst_12 : bf16 to vector<256x64xbf16>
    %35 = vector.shape_cast %18 : vector<256x1xi1> to vector<256x1xi1>
    %36 = vector.broadcast %35 : vector<256x1xi1> to vector<256x64xi1>
    %37 = arith.select %36, %33, %34 : vector<256x64xi1>, vector<256x64xbf16>
    %38 = vector.extract_strided_slice %32 {offsets = [1, 0], sizes = [256, 64], strides = [1, 1]} : vector<290x64xbf16> to vector<256x64xbf16>
    %39 = vector.extract_strided_slice %32 {offsets = [2, 0], sizes = [256, 64], strides = [1, 1]} : vector<290x64xbf16> to vector<256x64xbf16>
    %cst_13 = arith.constant 0.000000e+00 : bf16
    %40 = vector.broadcast %cst_13 : bf16 to vector<256x64xbf16>
    %41 = vector.shape_cast %20 : vector<256x1xi1> to vector<256x1xi1>
    %42 = vector.broadcast %41 : vector<256x1xi1> to vector<256x64xi1>
    %43 = arith.select %42, %39, %40 : vector<256x64xi1>, vector<256x64xbf16>
    %44 = vector.extract_strided_slice %32 {offsets = [16, 0], sizes = [256, 64], strides = [1, 1]} : vector<290x64xbf16> to vector<256x64xbf16>
    %cst_14 = arith.constant 0.000000e+00 : bf16
    %45 = vector.broadcast %cst_14 : bf16 to vector<256x64xbf16>
    %46 = vector.shape_cast %18 : vector<256x1xi1> to vector<256x1xi1>
    %47 = vector.broadcast %46 : vector<256x1xi1> to vector<256x64xi1>
    %48 = arith.select %47, %44, %45 : vector<256x64xi1>, vector<256x64xbf16>
    %49 = vector.extract_strided_slice %32 {offsets = [17, 0], sizes = [256, 64], strides = [1, 1]} : vector<290x64xbf16> to vector<256x64xbf16>
    %50 = vector.extract_strided_slice %32 {offsets = [18, 0], sizes = [256, 64], strides = [1, 1]} : vector<290x64xbf16> to vector<256x64xbf16>
    %cst_15 = arith.constant 0.000000e+00 : bf16
    %51 = vector.broadcast %cst_15 : bf16 to vector<256x64xbf16>
    %52 = vector.shape_cast %20 : vector<256x1xi1> to vector<256x1xi1>
    %53 = vector.broadcast %52 : vector<256x1xi1> to vector<256x64xi1>
    %54 = arith.select %53, %50, %51 : vector<256x64xi1>, vector<256x64xbf16>
    %55 = vector.extract_strided_slice %32 {offsets = [32, 0], sizes = [256, 64], strides = [1, 1]} : vector<290x64xbf16> to vector<256x64xbf16>
    %cst_16 = arith.constant 0.000000e+00 : bf16
    %56 = vector.broadcast %cst_16 : bf16 to vector<256x64xbf16>
    %57 = vector.shape_cast %18 : vector<256x1xi1> to vector<256x1xi1>
    %58 = vector.broadcast %57 : vector<256x1xi1> to vector<256x64xi1>
    %59 = arith.select %58, %55, %56 : vector<256x64xi1>, vector<256x64xbf16>
    %60 = vector.extract_strided_slice %32 {offsets = [33, 0], sizes = [256, 64], strides = [1, 1]} : vector<290x64xbf16> to vector<256x64xbf16>
    %61 = vector.extract_strided_slice %32 {offsets = [34, 0], sizes = [256, 64], strides = [1, 1]} : vector<290x64xbf16> to vector<256x64xbf16>
    %cst_17 = arith.constant 0.000000e+00 : bf16
    %62 = vector.broadcast %cst_17 : bf16 to vector<256x64xbf16>
    %63 = vector.shape_cast %20 : vector<256x1xi1> to vector<256x1xi1>
    %64 = vector.broadcast %63 : vector<256x1xi1> to vector<256x64xi1>
    %65 = arith.select %64, %61, %62 : vector<256x64xi1>, vector<256x64xbf16>
    %66 = tpu.concatenate %37, %38, %43, %48, %49, %54, %59, %60, %65 in 1 : vector<256x64xbf16>, vector<256x64xbf16>, vector<256x64xbf16>, vector<256x64xbf16>, vector<256x64xbf16>, vector<256x64xbf16>, vector<256x64xbf16>, vector<256x64xbf16>, vector<256x64xbf16> -> vector<256x576xbf16>
    %c0_18 = arith.constant 0 : index
    %c0_19 = arith.constant 0 : index
    %67 = vector.load %arg4[%c0_18, %c0_19] : memref<576x128xbf16, #tpu.memory_space<vmem>>, vector<576x128xbf16>
    %cst_20 = arith.constant dense<0.000000e+00> : vector<256x128xf32>
    %68 = tpu.matmul %66, %67, %cst_20 {dimension_numbers = #tpu.dot_dimension_numbers<[1], [0], [0], [1], [0, 0, 1, 1], [], []>} : vector<256x576xbf16>, vector<576x128xbf16>, vector<256x128xf32> -> vector<256x128xf32>
    %c0_21 = arith.constant 0 : index
    %c0_22 = arith.constant 0 : index
    %69 = vector.load %arg5[%c0_21, %c0_22] : memref<1x128xf32, #tpu.memory_space<vmem>>, vector<1x128xf32>
    %70 = vector.broadcast %69 : vector<1x128xf32> to vector<256x128xf32>
    %71 = arith.addf %68, %70 : vector<256x128xf32>
    %cst_23 = arith.constant 0.000000e+00 : f32
    %72 = vector.broadcast %cst_23 : f32 to vector<256x128xf32>
    %73 = arith.maximumf %71, %72 : vector<256x128xf32>
    %74 = arith.truncf %73 : vector<256x128xf32> to vector<256x128xbf16>
    %cst_24 = arith.constant 0.000000e+00 : bf16
    %75 = vector.broadcast %cst_24 : bf16 to vector<17x128xbf16>
    %76 = tpu.concatenate %75, %74, %75 in 0 : vector<17x128xbf16>, vector<256x128xbf16>, vector<17x128xbf16> -> vector<290x128xbf16>
    %77 = vector.extract_strided_slice %76 {offsets = [0, 0], sizes = [256, 128], strides = [1, 1]} : vector<290x128xbf16> to vector<256x128xbf16>
    %cst_25 = arith.constant 0.000000e+00 : bf16
    %78 = vector.broadcast %cst_25 : bf16 to vector<256x128xbf16>
    %79 = vector.shape_cast %18 : vector<256x1xi1> to vector<256x1xi1>
    %80 = vector.broadcast %79 : vector<256x1xi1> to vector<256x128xi1>
    %81 = arith.select %80, %77, %78 : vector<256x128xi1>, vector<256x128xbf16>
    %82 = vector.extract_strided_slice %76 {offsets = [1, 0], sizes = [256, 128], strides = [1, 1]} : vector<290x128xbf16> to vector<256x128xbf16>
    %83 = vector.extract_strided_slice %76 {offsets = [2, 0], sizes = [256, 128], strides = [1, 1]} : vector<290x128xbf16> to vector<256x128xbf16>
    %cst_26 = arith.constant 0.000000e+00 : bf16
    %84 = vector.broadcast %cst_26 : bf16 to vector<256x128xbf16>
    %85 = vector.shape_cast %20 : vector<256x1xi1> to vector<256x1xi1>
    %86 = vector.broadcast %85 : vector<256x1xi1> to vector<256x128xi1>
    %87 = arith.select %86, %83, %84 : vector<256x128xi1>, vector<256x128xbf16>
    %88 = vector.extract_strided_slice %76 {offsets = [16, 0], sizes = [256, 128], strides = [1, 1]} : vector<290x128xbf16> to vector<256x128xbf16>
    %cst_27 = arith.constant 0.000000e+00 : bf16
    %89 = vector.broadcast %cst_27 : bf16 to vector<256x128xbf16>
    %90 = vector.shape_cast %18 : vector<256x1xi1> to vector<256x1xi1>
    %91 = vector.broadcast %90 : vector<256x1xi1> to vector<256x128xi1>
    %92 = arith.select %91, %88, %89 : vector<256x128xi1>, vector<256x128xbf16>
    %93 = vector.extract_strided_slice %76 {offsets = [17, 0], sizes = [256, 128], strides = [1, 1]} : vector<290x128xbf16> to vector<256x128xbf16>
    %94 = vector.extract_strided_slice %76 {offsets = [18, 0], sizes = [256, 128], strides = [1, 1]} : vector<290x128xbf16> to vector<256x128xbf16>
    %cst_28 = arith.constant 0.000000e+00 : bf16
    %95 = vector.broadcast %cst_28 : bf16 to vector<256x128xbf16>
    %96 = vector.shape_cast %20 : vector<256x1xi1> to vector<256x1xi1>
    %97 = vector.broadcast %96 : vector<256x1xi1> to vector<256x128xi1>
    %98 = arith.select %97, %94, %95 : vector<256x128xi1>, vector<256x128xbf16>
    %99 = vector.extract_strided_slice %76 {offsets = [32, 0], sizes = [256, 128], strides = [1, 1]} : vector<290x128xbf16> to vector<256x128xbf16>
    %cst_29 = arith.constant 0.000000e+00 : bf16
    %100 = vector.broadcast %cst_29 : bf16 to vector<256x128xbf16>
    %101 = vector.shape_cast %18 : vector<256x1xi1> to vector<256x1xi1>
    %102 = vector.broadcast %101 : vector<256x1xi1> to vector<256x128xi1>
    %103 = arith.select %102, %99, %100 : vector<256x128xi1>, vector<256x128xbf16>
    %104 = vector.extract_strided_slice %76 {offsets = [33, 0], sizes = [256, 128], strides = [1, 1]} : vector<290x128xbf16> to vector<256x128xbf16>
    %105 = vector.extract_strided_slice %76 {offsets = [34, 0], sizes = [256, 128], strides = [1, 1]} : vector<290x128xbf16> to vector<256x128xbf16>
    %cst_30 = arith.constant 0.000000e+00 : bf16
    %106 = vector.broadcast %cst_30 : bf16 to vector<256x128xbf16>
    %107 = vector.shape_cast %20 : vector<256x1xi1> to vector<256x1xi1>
    %108 = vector.broadcast %107 : vector<256x1xi1> to vector<256x128xi1>
    %109 = arith.select %108, %105, %106 : vector<256x128xi1>, vector<256x128xbf16>
    %110 = tpu.concatenate %81, %82, %87, %92, %93, %98, %103, %104, %109 in 1 : vector<256x128xbf16>, vector<256x128xbf16>, vector<256x128xbf16>, vector<256x128xbf16>, vector<256x128xbf16>, vector<256x128xbf16>, vector<256x128xbf16>, vector<256x128xbf16>, vector<256x128xbf16> -> vector<256x1152xbf16>
    %c0_31 = arith.constant 0 : index
    %c0_32 = arith.constant 0 : index
    %111 = vector.load %arg6[%c0_31, %c0_32] : memref<1152x3xbf16, #tpu.memory_space<vmem>>, vector<1152x3xbf16>
    %cst_33 = arith.constant dense<0.000000e+00> : vector<256x3xf32>
    %112 = tpu.matmul %110, %111, %cst_33 {dimension_numbers = #tpu.dot_dimension_numbers<[1], [0], [0], [1], [0, 0, 1, 1], [], []>} : vector<256x1152xbf16>, vector<1152x3xbf16>, vector<256x3xf32> -> vector<256x3xf32>
    %c0_34 = arith.constant 0 : index
    %c0_35 = arith.constant 0 : index
    %113 = vector.load %arg7[%c0_34, %c0_35] : memref<1x3xf32, #tpu.memory_space<vmem>>, vector<1x3xf32>
    %114 = vector.broadcast %113 : vector<1x3xf32> to vector<256x3xf32>
    %115 = arith.addf %112, %114 : vector<256x3xf32>
    %c0_36 = arith.constant 0 : index
    %c0_37 = arith.constant 0 : index
    %c0_38 = arith.constant 0 : index
    %116 = vector.load %arg8[%c0_36, %c0_37, %c0_38] : memref<1x256x3xf32, #tpu.memory_space<vmem>>, vector<1x256x3xf32>
    %117 = vector.shape_cast %116 : vector<1x256x3xf32> to vector<256x3xf32>
    %118 = vector.shape_cast %115 : vector<256x3xf32> to vector<1x256x3xf32>
    tpu.vector_store %arg8[%c0_36, %c0_37, %c0_38], %118 {strides = array<i32>} : memref<1x256x3xf32, #tpu.memory_space<vmem>>, vector<1x256x3xf32>,
    return
  }
  func.func @transform_0(%arg0: i32) -> (i32, i32, i32) {
    %c0_i32 = arith.constant 0 : i32
    %c0_i32_0 = arith.constant 0 : i32
    %c0_i32_1 = arith.constant 0 : i32
    return %arg0, %c0_i32, %c0_i32_0 : i32, i32, i32
  }
  func.func @transform_1(%arg0: i32) -> (i32, i32) {
    %c0_i32 = arith.constant 0 : i32
    %c0_i32_0 = arith.constant 0 : i32
    %c0_i32_1 = arith.constant 0 : i32
    return %c0_i32, %c0_i32_0 : i32, i32
  }
  func.func @transform_2(%arg0: i32) -> (i32, i32) {
    %c0_i32 = arith.constant 0 : i32
    %c0_i32_0 = arith.constant 0 : i32
    %c0_i32_1 = arith.constant 0 : i32
    return %c0_i32, %c0_i32_0 : i32, i32
  }
  func.func @transform_3(%arg0: i32) -> (i32, i32) {
    %c0_i32 = arith.constant 0 : i32
    %c0_i32_0 = arith.constant 0 : i32
    %c0_i32_1 = arith.constant 0 : i32
    return %c0_i32, %c0_i32_0 : i32, i32
  }
  func.func @transform_4(%arg0: i32) -> (i32, i32) {
    %c0_i32 = arith.constant 0 : i32
    %c0_i32_0 = arith.constant 0 : i32
    %c0_i32_1 = arith.constant 0 : i32
    return %c0_i32, %c0_i32_0 : i32, i32
  }
  func.func @transform_5(%arg0: i32) -> (i32, i32) {
    %c0_i32 = arith.constant 0 : i32
    %c0_i32_0 = arith.constant 0 : i32
    %c0_i32_1 = arith.constant 0 : i32
    return %c0_i32, %c0_i32_0 : i32, i32
  }
  func.func @transform_6(%arg0: i32) -> (i32, i32) {
    %c0_i32 = arith.constant 0 : i32
    %c0_i32_0 = arith.constant 0 : i32
    %c0_i32_1 = arith.constant 0 : i32
    return %c0_i32, %c0_i32_0 : i32, i32
  }
  func.func @transform_7(%arg0: i32) -> (i32, i32, i32) {
    %c0_i32 = arith.constant 0 : i32
    %c0_i32_0 = arith.constant 0 : i32
    %c0_i32_1 = arith.constant 0 : i32
    return %arg0, %c0_i32, %c0_i32_0 : i32, i32, i32
  }
}

</mosaic_0001>

<llo_original>
// kernel: dip_model_forward.1
$region0: #{dip_model_forward.1}
  #allocation0 [shape = 'u32[]', space=smem, size = 0x4, offset = 0x4, fixed_abs, tag = 'smem constant byte address 0x4 - core index']
  #allocation1 [shape = 'u32[144,128]{1,0:T(1,128)}', space=vmem, size = 0x12000, scoped, tag = 'internal scratch']
  %s0 = inlined_call_operand.vmem [shape: bf16[2,256,27], index: 0, kind: input, shape index: {}]
  %s1 = inlined_call_operand.vmem [shape: bf16[27,64], index: 1, kind: input, shape index: {}]
  %s2 = inlined_call_operand.vmem [shape: f32[1,64], index: 2, kind: input, shape index: {}]
  %s3 = inlined_call_operand.vmem [shape: bf16[576,128], index: 3, kind: input, shape index: {}]
  %s4 = inlined_call_operand.vmem [shape: f32[1,128], index: 4, kind: input, shape index: {}]
  %s5 = inlined_call_operand.vmem [shape: bf16[1152,3], index: 5, kind: input, shape index: {}]
  %s6 = inlined_call_operand.vmem [shape: f32[1,3], index: 6, kind: input, shape index: {}]
  %s7 = inlined_call_operand.vmem [shape: f32[2,256,3], index: 7, kind: output, shape index: {}]
  %s8 = sld [smem:[#allocation0]]
  $region61: #{dip_model_forward.1} parent=0
    _
  %s10 = ssub.s32 1, %s8
  %s11 = scalar_select 0, %s10, %s8
  loop: start=0, step=1, limit=4
  $region2: #{dip_model_forward.1} parent=0 // loop_pre_header
    _
  $region3: #{dip_model_forward.1} parent=0 // loop_header
    %s13 = sphi 0, %s17
    %p14 = scmp.ge.s32.totalorder %s13, 4
    %s23 = sphi 0, %s25
    %s26 = sphi 0, %s23
    %s27 = sphi 0, %s26
    %s43 = sphi 0, %s27
    %s47 = sphi 0, %s47
    %s49 = sphi 0, %s47
    %s50 = sphi 0, %s49
    %s64 = sphi 0, %s50
    %s68 = sphi 0, %s68
    %s70 = sphi 0, %s68
    %s71 = sphi 0, %s70
    %s85 = sphi 0, %s71
    %s89 = sphi 0, %s89
    %s91 = sphi 0, %s89
    %s92 = sphi 0, %s91
    %s106 = sphi 0, %s92
    %s110 = sphi 0, %s110
    %s112 = sphi 0, %s110
    %s113 = sphi 0, %s112
    %s127 = sphi 0, %s113
    %s131 = sphi 0, %s131
    %s133 = sphi 0, %s131
    %s134 = sphi 0, %s133
    %s148 = sphi 0, %s134
    %s152 = sphi 0, %s152
    %s154 = sphi 0, %s152
    %s155 = sphi 0, %s154
    %s169 = sphi 0, %s155
    %s175 = sphi 0, %s177
    %s178 = sphi 0, %s175
    %s179 = sphi 0, %s178
    %s195 = sphi 0, %s179
  $region4: #{dip_model_forward.1} parent=0 // loop_header_branch
    %16 = sbr.rel (%p14) target = $region8
  $region5: #{dip_model_forward.1} parent=0 // loop_body
    %s18 = ssub.s32 %s13, 1
    %s19 = ssub.s32 %s13, 2
    %s20 = sadd.s32 %s13, 1
    %s21 = ssub.s32 %s13, %s20
    %p22 = scmp.eq.s32.totalorder %s21, 0
    %s24 = sadd.s32 %s23, 1
    %s25 = scalar_select %p22, %s23, %s24
    %p28 = pneg %p22
    %p29 = scmp.eq.s32.totalorder %s13, 1
    %p30 = por %p28, %p29
    %p31 = scmp.ne.s32.totalorder %s23, %s26
    %p32 = scmp.eq.s32.totalorder %s13, 0
    %p33 = por %p31, %p32
    %p34 = scmp.ne.s32.totalorder %s23, %s26
    %p35 = scmp.eq.s32.totalorder %s18, 1
    %p36 = por %p34, %p35
    %p37 = scmp.ne.s32.totalorder %s26, %s27
    %p38 = scmp.eq.s32.totalorder %s18, 0
    %p39 = por %p37, %p38
    %p40 = scmp.ne.s32.totalorder %s26, %s27
    %p41 = scmp.eq.s32.totalorder %s19, 1
    %p42 = por %p40, %p41
    %p44 = scmp.ne.s32.totalorder %s27, %s43
    %p45 = scmp.eq.s32.totalorder %s19, 0
    %p46 = por %p44, %p45
    %s48 = sadd.s32 %s47, 1
    %p51 = scmp.eq.s32.totalorder %s13, 1
    %p52 = scmp.ne.s32.totalorder %s47, %s49
    %p53 = scmp.eq.s32.totalorder %s13, 0
    %p54 = por %p52, %p53
    %p55 = scmp.ne.s32.totalorder %s47, %s49
    %p56 = scmp.eq.s32.totalorder %s18, 1
    %p57 = por %p55, %p56
    %p58 = scmp.ne.s32.totalorder %s49, %s50
    %p59 = scmp.eq.s32.totalorder %s18, 0
    %p60 = por %p58, %p59
    %p61 = scmp.ne.s32.totalorder %s49, %s50
    %p62 = scmp.eq.s32.totalorder %s19, 1
    %p63 = por %p61, %p62
    %p65 = scmp.ne.s32.totalorder %s50, %s64
    %p66 = scmp.eq.s32.totalorder %s19, 0
    %p67 = por %p65, %p66
    %s69 = sadd.s32 %s68, 1
    %p72 = scmp.eq.s32.totalorder %s13, 1
    %p73 = scmp.ne.s32.totalorder %s68, %s70
    %p74 = scmp.eq.s32.totalorder %s13, 0
    %p75 = por %p73, %p74
    %p76 = scmp.ne.s32.totalorder %s68, %s70
    %p77 = scmp.eq.s32.totalorder %s18, 1
    %p78 = por %p76, %p77
    %p79 = scmp.ne.s32.totalorder %s70, %s71
    %p80 = scmp.eq.s32.totalorder %s18, 0
    %p81 = por %p79, %p80
    %p82 = scmp.ne.s32.totalorder %s70, %s71
    %p83 = scmp.eq.s32.totalorder %s19, 1
    %p84 = por %p82, %p83
    %p86 = scmp.ne.s32.totalorder %s71, %s85
    %p87 = scmp.eq.s32.totalorder %s19, 0
    %p88 = por %p86, %p87
    %s90 = sadd.s32 %s89, 1
    %p93 = scmp.eq.s32.totalorder %s13, 1
    %p94 = scmp.ne.s32.totalorder %s89, %s91
    %p95 = scmp.eq.s32.totalorder %s13, 0
    %p96 = por %p94, %p95
    %p97 = scmp.ne.s32.totalorder %s89, %s91
    %p98 = scmp.eq.s32.totalorder %s18, 1
    %p99 = por %p97, %p98
    %p100 = scmp.ne.s32.totalorder %s91, %s92
    %p101 = scmp.eq.s32.totalorder %s18, 0
    %p102 = por %p100, %p101
    %p103 = scmp.ne.s32.totalorder %s91, %s92
    %p104 = scmp.eq.s32.totalorder %s19, 1
    %p105 = por %p103, %p104
    %p107 = scmp.ne.s32.totalorder %s92, %s106
    %p108 = scmp.eq.s32.totalorder %s19, 0
    %p109 = por %p107, %p108
    %s111 = sadd.s32 %s110, 1
    %p114 = scmp.eq.s32.totalorder %s13, 1
    %p115 = scmp.ne.s32.totalorder %s110, %s112
    %p116 = scmp.eq.s32.totalorder %s13, 0
    %p117 = por %p115, %p116
    %p118 = scmp.ne.s32.totalorder %s110, %s112
    %p119 = scmp.eq.s32.totalorder %s18, 1
    %p120 = por %p118, %p119
    %p121 = scmp.ne.s32.totalorder %s112, %s113
    %p122 = scmp.eq.s32.totalorder %s18, 0
    %p123 = por %p121, %p122
    %p124 = scmp.ne.s32.totalorder %s112, %s113
    %p125 = scmp.eq.s32.totalorder %s19, 1
    %p126 = por %p124, %p125
    %p128 = scmp.ne.s32.totalorder %s113, %s127
    %p129 = scmp.eq.s32.totalorder %s19, 0
    %p130 = por %p128, %p129
    %s132 = sadd.s32 %s131, 1
    %p135 = scmp.eq.s32.totalorder %s13, 1
    %p136 = scmp.ne.s32.totalorder %s131, %s133
    %p137 = scmp.eq.s32.totalorder %s13, 0
    %p138 = por %p136, %p137
    %p139 = scmp.ne.s32.totalorder %s131, %s133
    %p140 = scmp.eq.s32.totalorder %s18, 1
    %p141 = por %p139, %p140
    %p142 = scmp.ne.s32.totalorder %s133, %s134
    %p143 = scmp.eq.s32.totalorder %s18, 0
    %p144 = por %p142, %p143
    %p145 = scmp.ne.s32.totalorder %s133, %s134
    %p146 = scmp.eq.s32.totalorder %s19, 1
    %p147 = por %p145, %p146
    %p149 = scmp.ne.s32.totalorder %s134, %s148
    %p150 = scmp.eq.s32.totalorder %s19, 0
    %p151 = por %p149, %p150
    %s153 = sadd.s32 %s152, 1
    %p156 = scmp.eq.s32.totalorder %s13, 1
    %p157 = scmp.ne.s32.totalorder %s152, %s154
    %p158 = scmp.eq.s32.totalorder %s13, 0
    %p159 = por %p157, %p158
    %p160 = scmp.ne.s32.totalorder %s152, %s154
    %p161 = scmp.eq.s32.totalorder %s18, 1
    %p162 = por %p160, %p161
    %p163 = scmp.ne.s32.totalorder %s154, %s155
    %p164 = scmp.eq.s32.totalorder %s18, 0
    %p165 = por %p163, %p164
    %p166 = scmp.ne.s32.totalorder %s154, %s155
    %p167 = scmp.eq.s32.totalorder %s19, 1
    %p168 = por %p166, %p167
    %p170 = scmp.ne.s32.totalorder %s155, %s169
    %p171 = scmp.eq.s32.totalorder %s19, 0
    %p172 = por %p170, %p171
    %s173 = ssub.s32 %s13, %s20
    %p174 = scmp.eq.s32.totalorder %s173, 0
    %s176 = sadd.s32 %s175, 1
    %s177 = scalar_select %p174, %s175, %s176
    %p180 = pneg %p174
    %p181 = scmp.eq.s32.totalorder %s13, 1
    %p182 = por %p180, %p181
    %p183 = scmp.ne.s32.totalorder %s175, %s178
    %p184 = scmp.eq.s32.totalorder %s13, 0
    %p185 = por %p183, %p184
    %p186 = scmp.ne.s32.totalorder %s175, %s178
    %p187 = scmp.eq.s32.totalorder %s18, 1
    %p188 = por %p186, %p187
    %p189 = scmp.ne.s32.totalorder %s178, %s179
    %p190 = scmp.eq.s32.totalorder %s18, 0
    %p191 = por %p189, %p190
    %p192 = scmp.ne.s32.totalorder %s178, %s179
    %p193 = scmp.eq.s32.totalorder %s19, 1
    %p194 = por %p192, %p193
    %p196 = scmp.ne.s32.totalorder %s179, %s195
    %p197 = scmp.eq.s32.totalorder %s19, 0
    %p198 = por %p196, %p197
    %p199 = scmp.le.s32.totalorder 1, %s13
    %p200 = scmp.lt.s32.totalorder %s13, 3
    %p201 = pnand %p199, %p200
    %p202 = pneg %p201
    // Predicated region
    $region9: #{dip_model_forward.1} parent=5 // pred_check
      _
    $region10: #{dip_model_forward.1} parent=5 // pred_check_branch
      %204 = sbr.rel (%p201) target = $region12
    $region11: #{dip_model_forward.1} parent=5 // pred_region
      %s205 = ssub.s32 %s13, 1
      // Predicated region
      $region13: #{dip_model_forward.1} parent=11 // pred_check
        %p206 = pneg %p60
      $region14: #{dip_model_forward.1} parent=11 // pred_check_branch
        %208 = sbr.rel (%p206) target = $region16
      $region15: #{dip_model_forward.1} parent=11 // pred_region
        _
      $region16: #{dip_model_forward.1} parent=11 // pred_fallthru
        _
      // Predicated region
      $region17: #{dip_model_forward.1} parent=11 // pred_check
        %p209 = pneg %p81
      $region18: #{dip_model_forward.1} parent=11 // pred_check_branch
        %211 = sbr.rel (%p209) target = $region20
      $region19: #{dip_model_forward.1} parent=11 // pred_region
        _
      $region20: #{dip_model_forward.1} parent=11 // pred_fallthru
        _
      // Predicated region
      $region21: #{dip_model_forward.1} parent=11 // pred_check
        %p212 = pneg %p102
      $region22: #{dip_model_forward.1} parent=11 // pred_check_branch
        %214 = sbr.rel (%p212) target = $region24
      $region23: #{dip_model_forward.1} parent=11 // pred_region
        _
      $region24: #{dip_model_forward.1} parent=11 // pred_fallthru
        _
      // Predicated region
      $region25: #{dip_model_forward.1} parent=11 // pred_check
        %p215 = pneg %p123
      $region26: #{dip_model_forward.1} parent=11 // pred_check_branch
        %217 = sbr.rel (%p215) target = $region28
      $region27: #{dip_model_forward.1} parent=11 // pred_region
        _
      $region28: #{dip_model_forward.1} parent=11 // pred_fallthru
        _
      // Predicated region
      $region29: #{dip_model_forward.1} parent=11 // pred_check
        %p218 = pneg %p144
      $region30: #{dip_model_forward.1} parent=11 // pred_check_branch
        %220 = sbr.rel (%p218) target = $region32
      $region31: #{dip_model_forward.1} parent=11 // pred_region
        _
      $region32: #{dip_model_forward.1} parent=11 // pred_fallthru
        _
      // Predicated region
      $region33: #{dip_model_forward.1} parent=11 // pred_check
        %p221 = pneg %p165
      $region34: #{dip_model_forward.1} parent=11 // pred_check_branch
        %223 = sbr.rel (%p221) target = $region36
      $region35: #{dip_model_forward.1} parent=11 // pred_region
        _
      $region36: #{dip_model_forward.1} parent=11 // pred_fallthru
        _
    $region12: #{dip_model_forward.1} parent=5 // pred_fallthru
      _
    %p224 = scmp.lt.s32.totalorder %s13, 2
    // Predicated region
    $region37: #{dip_model_forward.1} parent=5 // pred_check
      %p225 = pneg %p224
    $region38: #{dip_model_forward.1} parent=5 // pred_check_branch
      %227 = sbr.rel (%p225) target = $region40
    $region39: #{dip_model_forward.1} parent=5 // pred_region
      // Predicated region
      $region41: #{dip_model_forward.1} parent=39 // pred_check
        %p228 = pneg %p33
      $region42: #{dip_model_forward.1} parent=39 // pred_check_branch
        %230 = sbr.rel (%p228) target = $region44
      $region43: #{dip_model_forward.1} parent=39 // pred_region
        %p231 = scmp.lt.s32.totalorder %s13, 1
        %s232 = scalar_select %p231, %s13, 1
        %s233 = smul.addr %s232, 32
        %s234 = smul.addr %s233, 4
        %s235 = scalar_lea.vmem %s0, %s234
      $region44: #{dip_model_forward.1} parent=39 // pred_fallthru
        _
    $region40: #{dip_model_forward.1} parent=5 // pred_fallthru
      _
    %p236 = scmp.le.s32.totalorder 1, %s13
    %p237 = scmp.lt.s32.totalorder %s13, 3
    %p238 = pnand %p236, %p237
    %p239 = pneg %p238
    // Predicated region
    $region45: #{dip_model_forward.1} parent=5 // pred_check
      _
    $region46: #{dip_model_forward.1} parent=5 // pred_check_branch
      %241 = sbr.rel (%p238) target = $region48
    $region47: #{dip_model_forward.1} parent=5 // pred_region
      %s242 = ssub.s32 %s13, 1
      %p243 = scmp.lt.s32.totalorder %s18, 1
      %s244 = scalar_select %p243, %s18, 1
      %s245 = smul.addr %s244, 32
      %s246 = smul.addr %s245, 4
      %s247 = scalar_lea.vmem %s0, %s246
      %p248 = pneg %p39
      %p249 = pneg %p36
      %p250 = pneg %p60
      %p251 = pneg %p57
      %p252 = pneg %p81
      %p253 = pneg %p78
      %p254 = pneg %p102
      %p255 = pneg %p99
      %p256 = pneg %p123
      %p257 = pneg %p120
      %p258 = pneg %p144
      %p259 = pneg %p141
      %p260 = pneg %p165
      %p261 = pneg %p162
      %p262 = pneg %p191
      %p263 = pneg %p188
      %p264 = scmp.lt.s32.totalorder %s18, 1
      %s265 = scalar_select %p264, %s18, 1
      %s266 = smul.addr %s265, 32
      %s267 = smul.addr %s266, 8
      %s268 = scalar_lea.vmem %s7, %s267
      %p269 = scmp.lt.s32.totalorder %s18, 1
      %s270 = scalar_select %p269, %s18, 1
      %s271 = smul.addr %s270, 32
      %s272 = smul.addr %s271, 4
      %s273 = scalar_lea.vmem %s0, %s272
      %p274 = scmp.lt.s32.totalorder %s18, 1
      %s275 = scalar_select %p274, %s18, 1
      %s276 = smul.addr %s275, 32
      %s277 = smul.addr %s276, 8
      %s278 = scalar_lea.vmem %s7, %s277
      %v282 = vlaneseq
      %v283 = vshrl.u32 %v282, 7
      %v284 = vadd.s32 %v283, 8
      %v285 = vadd.s32 %v283, 16
      %v286 = vadd.s32 %v283, 24
      %v287 = vadd.s32 %v283, 32
      %v288 = vadd.s32 %v283, 40
      %v289 = vadd.s32 %v283, 48
      %v290 = vadd.s32 %v283, 56
      %v291 = vadd.s32 %v283, 64
      %v292 = vadd.s32 %v283, 72
      %v293 = vadd.s32 %v283, 80
      %v294 = vadd.s32 %v283, 88
      %v295 = vadd.s32 %v283, 96
      %v296 = vadd.s32 %v283, 104
      %v297 = vadd.s32 %v283, 112
      %v298 = vadd.s32 %v283, 120
      %v299 = vadd.s32 %v283, 128
      %v300 = vadd.s32 %v283, 136
      %v301 = vadd.s32 %v283, 144
      %v302 = vadd.s32 %v283, 152
      %v303 = vadd.s32 %v283, 160
      %v304 = vadd.s32 %v283, 168
      %v305 = vadd.s32 %v283, 176
      %v306 = vadd.s32 %v283, 184
      %v307 = vadd.s32 %v283, 192
      %v308 = vadd.s32 %v283, 200
      %v309 = vadd.s32 %v283, 208
      %v310 = vadd.s32 %v283, 216
      %v311 = vadd.s32 %v283, 224
      %v312 = vadd.s32 %v283, 232
      %v313 = vadd.s32 %v283, 240
      %v314 = vadd.s32 %v283, 248
      %vm315 = vcmp.lt.s32.totalorder %v283, 0
      %v316 = vsub.s32 0, %v283
      %v317 = vsel %vm315, %v316, %v283
      %v318 = vshrl.u32 %v317, 4
      %v319 = vand.u32 %v317, 15
      %v320 = vsub.s32 0, %v319
      %v321 = vsel %vm315, %v320, %v319
      %vm322 = vcmp.lt.s32.totalorder %v284, 0
      %v323 = vsub.s32 0, %v284
      %v324 = vsel %vm322, %v323, %v284
      %v325 = vshrl.u32 %v324, 4
      %v326 = vand.u32 %v324, 15
      %v327 = vsub.s32 0, %v326
      %v328 = vsel %vm322, %v327, %v326
      %vm329 = vcmp.lt.s32.totalorder %v285, 0
      %v330 = vsub.s32 0, %v285
      %v331 = vsel %vm329, %v330, %v285
      %v332 = vshrl.u32 %v331, 4
      %v333 = vand.u32 %v331, 15
      %v334 = vsub.s32 0, %v333
      %v335 = vsel %vm329, %v334, %v333
      %vm336 = vcmp.lt.s32.totalorder %v286, 0
      %v337 = vsub.s32 0, %v286
      %v338 = vsel %vm336, %v337, %v286
      %v339 = vshrl.u32 %v338, 4
      %v340 = vand.u32 %v338, 15
      %v341 = vsub.s32 0, %v340
      %v342 = vsel %vm336, %v341, %v340
      %vm343 = vcmp.lt.s32.totalorder %v287, 0
      %v344 = vsub.s32 0, %v287
      %v345 = vsel %vm343, %v344, %v287
      %v346 = vshrl.u32 %v345, 4
      %v347 = vand.u32 %v345, 15
      %v348 = vsub.s32 0, %v347
      %v349 = vsel %vm343, %v348, %v347
      %vm350 = vcmp.lt.s32.totalorder %v288, 0
      %v351 = vsub.s32 0, %v288
      %v352 = vsel %vm350, %v351, %v288
      %v353 = vshrl.u32 %v352, 4
      %v354 = vand.u32 %v352, 15
      %v355 = vsub.s32 0, %v354
      %v356 = vsel %vm350, %v355, %v354
      %vm357 = vcmp.lt.s32.totalorder %v289, 0
      %v358 = vsub.s32 0, %v289
      %v359 = vsel %vm357, %v358, %v289
      %v360 = vshrl.u32 %v359, 4
      %v361 = vand.u32 %v359, 15
      %v362 = vsub.s32 0, %v361
      %v363 = vsel %vm357, %v362, %v361
      %vm364 = vcmp.lt.s32.totalorder %v290, 0
      %v365 = vsub.s32 0, %v290
      %v366 = vsel %vm364, %v365, %v290
      %v367 = vshrl.u32 %v366, 4
      %v368 = vand.u32 %v366, 15
      %v369 = vsub.s32 0, %v368
      %v370 = vsel %vm364, %v369, %v368
      %vm371 = vcmp.lt.s32.totalorder %v291, 0
      %v372 = vsub.s32 0, %v291
      %v373 = vsel %vm371, %v372, %v291
      %v374 = vshrl.u32 %v373, 4
      %v375 = vand.u32 %v373, 15
      %v376 = vsub.s32 0, %v375
      %v377 = vsel %vm371, %v376, %v375
      %vm378 = vcmp.lt.s32.totalorder %v292, 0
      %v379 = vsub.s32 0, %v292
      %v380 = vsel %vm378, %v379, %v292
      %v381 = vshrl.u32 %v380, 4
      %v382 = vand.u32 %v380, 15
      %v383 = vsub.s32 0, %v382
      %v384 = vsel %vm378, %v383, %v382
      %vm385 = vcmp.lt.s32.totalorder %v293, 0
      %v386 = vsub.s32 0, %v293
      %v387 = vsel %vm385, %v386, %v293
      %v388 = vshrl.u32 %v387, 4
      %v389 = vand.u32 %v387, 15
      %v390 = vsub.s32 0, %v389
      %v391 = vsel %vm385, %v390, %v389
      %vm392 = vcmp.lt.s32.totalorder %v294, 0
      %v393 = vsub.s32 0, %v294
      %v394 = vsel %vm392, %v393, %v294
      %v395 = vshrl.u32 %v394, 4
      %v396 = vand.u32 %v394, 15
      %v397 = vsub.s32 0, %v396
      %v398 = vsel %vm392, %v397, %v396
      %vm399 = vcmp.lt.s32.totalorder %v295, 0
      %v400 = vsub.s32 0, %v295
      %v401 = vsel %vm399, %v400, %v295
      %v402 = vshrl.u32 %v401, 4
      %v403 = vand.u32 %v401, 15
      %v404 = vsub.s32 0, %v403
      %v405 = vsel %vm399, %v404, %v403
      %vm406 = vcmp.lt.s32.totalorder %v296, 0
      %v407 = vsub.s32 0, %v296
      %v408 = vsel %vm406, %v407, %v296
      %v409 = vshrl.u32 %v408, 4
      %v410 = vand.u32 %v408, 15
      %v411 = vsub.s32 0, %v410
      %v412 = vsel %vm406, %v411, %v410
      %vm413 = vcmp.lt.s32.totalorder %v297, 0
      %v414 = vsub.s32 0, %v297
      %v415 = vsel %vm413, %v414, %v297
      %v416 = vshrl.u32 %v415, 4
      %v417 = vand.u32 %v415, 15
      %v418 = vsub.s32 0, %v417
      %v419 = vsel %vm413, %v418, %v417
      %vm420 = vcmp.lt.s32.totalorder %v298, 0
      %v421 = vsub.s32 0, %v298
      %v422 = vsel %vm420, %v421, %v298
      %v423 = vshrl.u32 %v422, 4
      %v424 = vand.u32 %v422, 15
      %v425 = vsub.s32 0, %v424
      %v426 = vsel %vm420, %v425, %v424
      %vm427 = vcmp.lt.s32.totalorder %v299, 0
      %v428 = vsub.s32 0, %v299
      %v429 = vsel %vm427, %v428, %v299
      %v430 = vshrl.u32 %v429, 4
      %v431 = vand.u32 %v429, 15
      %v432 = vsub.s32 0, %v431
      %v433 = vsel %vm427, %v432, %v431
      %vm434 = vcmp.lt.s32.totalorder %v300, 0
      %v435 = vsub.s32 0, %v300
      %v436 = vsel %vm434, %v435, %v300
      %v437 = vshrl.u32 %v436, 4
      %v438 = vand.u32 %v436, 15
      %v439 = vsub.s32 0, %v438
      %v440 = vsel %vm434, %v439, %v438
      %vm441 = vcmp.lt.s32.totalorder %v301, 0
      %v442 = vsub.s32 0, %v301
      %v443 = vsel %vm441, %v442, %v301
      %v444 = vshrl.u32 %v443, 4
      %v445 = vand.u32 %v443, 15
      %v446 = vsub.s32 0, %v445
      %v447 = vsel %vm441, %v446, %v445
      %vm448 = vcmp.lt.s32.totalorder %v302, 0
      %v449 = vsub.s32 0, %v302
      %v450 = vsel %vm448, %v449, %v302
      %v451 = vshrl.u32 %v450, 4
      %v452 = vand.u32 %v450, 15
      %v453 = vsub.s32 0, %v452
      %v454 = vsel %vm448, %v453, %v452
      %vm455 = vcmp.lt.s32.totalorder %v303, 0
      %v456 = vsub.s32 0, %v303
      %v457 = vsel %vm455, %v456, %v303
      %v458 = vshrl.u32 %v457, 4
      %v459 = vand.u32 %v457, 15
      %v460 = vsub.s32 0, %v459
      %v461 = vsel %vm455, %v460, %v459
      %vm462 = vcmp.lt.s32.totalorder %v304, 0
      %v463 = vsub.s32 0, %v304
      %v464 = vsel %vm462, %v463, %v304
      %v465 = vshrl.u32 %v464, 4
      %v466 = vand.u32 %v464, 15
      %v467 = vsub.s32 0, %v466
      %v468 = vsel %vm462, %v467, %v466
      %vm469 = vcmp.lt.s32.totalorder %v305, 0
      %v470 = vsub.s32 0, %v305
      %v471 = vsel %vm469, %v470, %v305
      %v472 = vshrl.u32 %v471, 4
      %v473 = vand.u32 %v471, 15
      %v474 = vsub.s32 0, %v473
      %v475 = vsel %vm469, %v474, %v473
      %vm476 = vcmp.lt.s32.totalorder %v306, 0
      %v477 = vsub.s32 0, %v306
      %v478 = vsel %vm476, %v477, %v306
      %v479 = vshrl.u32 %v478, 4
      %v480 = vand.u32 %v478, 15
      %v481 = vsub.s32 0, %v480
      %v482 = vsel %vm476, %v481, %v480
      %vm483 = vcmp.lt.s32.totalorder %v307, 0
      %v484 = vsub.s32 0, %v307
      %v485 = vsel %vm483, %v484, %v307
      %v486 = vshrl.u32 %v485, 4
      %v487 = vand.u32 %v485, 15
      %v488 = vsub.s32 0, %v487
      %v489 = vsel %vm483, %v488, %v487
      %vm490 = vcmp.lt.s32.totalorder %v308, 0
      %v491 = vsub.s32 0, %v308
      %v492 = vsel %vm490, %v491, %v308
      %v493 = vshrl.u32 %v492, 4
      %v494 = vand.u32 %v492, 15
      %v495 = vsub.s32 0, %v494
      %v496 = vsel %vm490, %v495, %v494
      %vm497 = vcmp.lt.s32.totalorder %v309, 0
      %v498 = vsub.s32 0, %v309
      %v499 = vsel %vm497, %v498, %v309
      %v500 = vshrl.u32 %v499, 4
      %v501 = vand.u32 %v499, 15
      %v502 = vsub.s32 0, %v501
      %v503 = vsel %vm497, %v502, %v501
      %vm504 = vcmp.lt.s32.totalorder %v310, 0
      %v505 = vsub.s32 0, %v310
      %v506 = vsel %vm504, %v505, %v310
      %v507 = vshrl.u32 %v506, 4
      %v508 = vand.u32 %v506, 15
      %v509 = vsub.s32 0, %v508
      %v510 = vsel %vm504, %v509, %v508
      %vm511 = vcmp.lt.s32.totalorder %v311, 0
      %v512 = vsub.s32 0, %v311
      %v513 = vsel %vm511, %v512, %v311
      %v514 = vshrl.u32 %v513, 4
      %v515 = vand.u32 %v513, 15
      %v516 = vsub.s32 0, %v515
      %v517 = vsel %vm511, %v516, %v515
      %vm518 = vcmp.lt.s32.totalorder %v312, 0
      %v519 = vsub.s32 0, %v312
      %v520 = vsel %vm518, %v519, %v312
      %v521 = vshrl.u32 %v520, 4
      %v522 = vand.u32 %v520, 15
      %v523 = vsub.s32 0, %v522
      %v524 = vsel %vm518, %v523, %v522
      %vm525 = vcmp.lt.s32.totalorder %v313, 0
      %v526 = vsub.s32 0, %v313
      %v527 = vsel %vm525, %v526, %v313
      %v528 = vshrl.u32 %v527, 4
      %v529 = vand.u32 %v527, 15
      %v530 = vsub.s32 0, %v529
      %v531 = vsel %vm525, %v530, %v529
      %vm532 = vcmp.lt.s32.totalorder %v314, 0
      %v533 = vsub.s32 0, %v314
      %v534 = vsel %vm532, %v533, %v314
      %v535 = vshrl.u32 %v534, 4
      %v536 = vand.u32 %v534, 15
      %v537 = vsub.s32 0, %v536
      %v538 = vsel %vm532, %v537, %v536
      %vm539 = vcmp.ne.s32.totalorder %v321, 0
      %vm540 = vcmp.ne.s32.totalorder %v328, 0
      %vm541 = vcmp.ne.s32.totalorder %v335, 0
      %vm542 = vcmp.ne.s32.totalorder %v342, 0
      %vm543 = vcmp.ne.s32.totalorder %v349, 0
      %vm544 = vcmp.ne.s32.totalorder %v356, 0
      %vm545 = vcmp.ne.s32.totalorder %v363, 0
      %vm546 = vcmp.ne.s32.totalorder %v370, 0
      %vm547 = vcmp.ne.s32.totalorder %v377, 0
      %vm548 = vcmp.ne.s32.totalorder %v384, 0
      %vm549 = vcmp.ne.s32.totalorder %v391, 0
      %vm550 = vcmp.ne.s32.totalorder %v398, 0
      %vm551 = vcmp.ne.s32.totalorder %v405, 0
      %vm552 = vcmp.ne.s32.totalorder %v412, 0
      %vm553 = vcmp.ne.s32.totalorder %v419, 0
      %vm554 = vcmp.ne.s32.totalorder %v426, 0
      %vm555 = vcmp.ne.s32.totalorder %v433, 0
      %vm556 = vcmp.ne.s32.totalorder %v440, 0
      %vm557 = vcmp.ne.s32.totalorder %v447, 0
      %vm558 = vcmp.ne.s32.totalorder %v454, 0
      %vm559 = vcmp.ne.s32.totalorder %v461, 0
      %vm560 = vcmp.ne.s32.totalorder %v468, 0
      %vm561 = vcmp.ne.s32.totalorder %v475, 0
      %vm562 = vcmp.ne.s32.totalorder %v482, 0
      %vm563 = vcmp.ne.s32.totalorder %v489, 0
      %vm564 = vcmp.ne.s32.totalorder %v496, 0
      %vm565 = vcmp.ne.s32.totalorder %v503, 0
      %vm566 = vcmp.ne.s32.totalorder %v510, 0
      %vm567 = vcmp.ne.s32.totalorder %v517, 0
      %vm568 = vcmp.ne.s32.totalorder %v524, 0
      %vm569 = vcmp.ne.s32.totalorder %v531, 0
      %vm570 = vcmp.ne.s32.totalorder %v538, 0
      %vm571 = vcmp.lt.s32.totalorder %v321, 0
      %vm572 = vcmp.lt.s32.totalorder %v328, 0
      %vm573 = vcmp.lt.s32.totalorder %v335, 0
      %vm574 = vcmp.lt.s32.totalorder %v342, 0
      %vm575 = vcmp.lt.s32.totalorder %v349, 0
      %vm576 = vcmp.lt.s32.totalorder %v356, 0
      %vm577 = vcmp.lt.s32.totalorder %v363, 0
      %vm578 = vcmp.lt.s32.totalorder %v370, 0
      %vm579 = vcmp.lt.s32.totalorder %v377, 0
      %vm580 = vcmp.lt.s32.totalorder %v384, 0
      %vm581 = vcmp.lt.s32.totalorder %v391, 0
      %vm582 = vcmp.lt.s32.totalorder %v398, 0
      %vm583 = vcmp.lt.s32.totalorder %v405, 0
      %vm584 = vcmp.lt.s32.totalorder %v412, 0
      %vm585 = vcmp.lt.s32.totalorder %v419, 0
      %vm586 = vcmp.lt.s32.totalorder %v426, 0
      %vm587 = vcmp.lt.s32.totalorder %v433, 0
      %vm588 = vcmp.lt.s32.totalorder %v440, 0
      %vm589 = vcmp.lt.s32.totalorder %v447, 0
      %vm590 = vcmp.lt.s32.totalorder %v454, 0
      %vm591 = vcmp.lt.s32.totalorder %v461, 0
      %vm592 = vcmp.lt.s32.totalorder %v468, 0
      %vm593 = vcmp.lt.s32.totalorder %v475, 0
      %vm594 = vcmp.lt.s32.totalorder %v482, 0
      %vm595 = vcmp.lt.s32.totalorder %v489, 0
      %vm596 = vcmp.lt.s32.totalorder %v496, 0
      %vm597 = vcmp.lt.s32.totalorder %v503, 0
      %vm598 = vcmp.lt.s32.totalorder %v510, 0
      %vm599 = vcmp.lt.s32.totalorder %v517, 0
      %vm600 = vcmp.lt.s32.totalorder %v524, 0
      %vm601 = vcmp.lt.s32.totalorder %v531, 0
      %vm602 = vcmp.lt.s32.totalorder %v538, 0
      %vm603 = vmand %vm571, %vm539
      %vm604 = vmand %vm572, %vm540
      %vm605 = vmand %vm573, %vm541
      %vm606 = vmand %vm574, %vm542
      %vm607 = vmand %vm575, %vm543
      %vm608 = vmand %vm576, %vm544
      %vm609 = vmand %vm577, %vm545
      %vm610 = vmand %vm578, %vm546
      %vm611 = vmand %vm579, %vm547
      %vm612 = vmand %vm580, %vm548
      %vm613 = vmand %vm581, %vm549
      %vm614 = vmand %vm582, %vm550
      %vm615 = vmand %vm583, %vm551
      %vm616 = vmand %vm584, %vm552
      %vm617 = vmand %vm585, %vm553
      %vm618 = vmand %vm586, %vm554
      %vm619 = vmand %vm587, %vm555
      %vm620 = vmand %vm588, %vm556
      %vm621 = vmand %vm589, %vm557
      %vm622 = vmand %vm590, %vm558
      %vm623 = vmand %vm591, %vm559
      %vm624 = vmand %vm592, %vm560
      %vm625 = vmand %vm593, %vm561
      %vm626 = vmand %vm594, %vm562
      %vm627 = vmand %vm595, %vm563
      %vm628 = vmand %vm596, %vm564
      %vm629 = vmand %vm597, %vm565
      %vm630 = vmand %vm598, %vm566
      %vm631 = vmand %vm599, %vm567
      %vm632 = vmand %vm600, %vm568
      %vm633 = vmand %vm601, %vm569
      %vm634 = vmand %vm602, %vm570
      %v635 = vadd.s32 %v321, 16
      %v636 = vadd.s32 %v328, 16
      %v637 = vadd.s32 %v335, 16
      %v638 = vadd.s32 %v342, 16
      %v639 = vadd.s32 %v349, 16
      %v640 = vadd.s32 %v356, 16
      %v641 = vadd.s32 %v363, 16
      %v642 = vadd.s32 %v370, 16
      %v643 = vadd.s32 %v377, 16
      %v644 = vadd.s32 %v384, 16
      %v645 = vadd.s32 %v391, 16
      %v646 = vadd.s32 %v398, 16
      %v647 = vadd.s32 %v405, 16
      %v648 = vadd.s32 %v412, 16
      %v649 = vadd.s32 %v419, 16
      %v650 = vadd.s32 %v426, 16
      %v651 = vadd.s32 %v433, 16
      %v652 = vadd.s32 %v440, 16
      %v653 = vadd.s32 %v447, 16
      %v654 = vadd.s32 %v454, 16
      %v655 = vadd.s32 %v461, 16
      %v656 = vadd.s32 %v468, 16
      %v657 = vadd.s32 %v475, 16
      %v658 = vadd.s32 %v482, 16
      %v659 = vadd.s32 %v489, 16
      %v660 = vadd.s32 %v496, 16
      %v661 = vadd.s32 %v503, 16
      %v662 = vadd.s32 %v510, 16
      %v663 = vadd.s32 %v517, 16
      %v664 = vadd.s32 %v524, 16
      %v665 = vadd.s32 %v531, 16
      %v666 = vadd.s32 %v538, 16
      %v667 = vsel %vm603, %v635, %v321
      %v668 = vsel %vm604, %v636, %v328
      %v669 = vsel %vm605, %v637, %v335
      %v670 = vsel %vm606, %v638, %v342
      %v671 = vsel %vm607, %v639, %v349
      %v672 = vsel %vm608, %v640, %v356
      %v673 = vsel %vm609, %v641, %v363
      %v674 = vsel %vm610, %v642, %v370
      %v675 = vsel %vm611, %v643, %v377
      %v676 = vsel %vm612, %v644, %v384
      %v677 = vsel %vm613, %v645, %v391
      %v678 = vsel %vm614, %v646, %v398
      %v679 = vsel %vm615, %v647, %v405
      %v680 = vsel %vm616, %v648, %v412
      %v681 = vsel %vm617, %v649, %v419
      %v682 = vsel %vm618, %v650, %v426
      %v683 = vsel %vm619, %v651, %v433
      %v684 = vsel %vm620, %v652, %v440
      %v685 = vsel %vm621, %v653, %v447
      %v686 = vsel %vm622, %v654, %v454
      %v687 = vsel %vm623, %v655, %v461
      %v688 = vsel %vm624, %v656, %v468
      %v689 = vsel %vm625, %v657, %v475
      %v690 = vsel %vm626, %v658, %v482
      %v691 = vsel %vm627, %v659, %v489
      %v692 = vsel %vm628, %v660, %v496
      %v693 = vsel %vm629, %v661, %v503
      %v694 = vsel %vm630, %v662, %v510
      %v695 = vsel %vm631, %v663, %v517
      %v696 = vsel %vm632, %v664, %v524
      %v697 = vsel %vm633, %v665, %v531
      %v698 = vsel %vm634, %v666, %v538
      %vm699 = vcmp.gt.s32.totalorder %v667, 0
      %vm700 = vcmp.gt.s32.totalorder %v668, 0
      %vm701 = vcmp.gt.s32.totalorder %v669, 0
      %vm702 = vcmp.gt.s32.totalorder %v670, 0
      %vm703 = vcmp.gt.s32.totalorder %v671, 0
      %vm704 = vcmp.gt.s32.totalorder %v672, 0
      %vm705 = vcmp.gt.s32.totalorder %v673, 0
      %vm706 = vcmp.gt.s32.totalorder %v674, 0
      %vm707 = vcmp.gt.s32.totalorder %v675, 0
      %vm708 = vcmp.gt.s32.totalorder %v676, 0
      %vm709 = vcmp.gt.s32.totalorder %v677, 0
      %vm710 = vcmp.gt.s32.totalorder %v678, 0
      %vm711 = vcmp.gt.s32.totalorder %v679, 0
      %vm712 = vcmp.gt.s32.totalorder %v680, 0
      %vm713 = vcmp.gt.s32.totalorder %v681, 0
      %vm714 = vcmp.gt.s32.totalorder %v682, 0
      %vm715 = vcmp.gt.s32.totalorder %v683, 0
      %vm716 = vcmp.gt.s32.totalorder %v684, 0
      %vm717 = vcmp.gt.s32.totalorder %v685, 0
      %vm718 = vcmp.gt.s32.totalorder %v686, 0
      %vm719 = vcmp.gt.s32.totalorder %v687, 0
      %vm720 = vcmp.gt.s32.totalorder %v688, 0
      %vm721 = vcmp.gt.s32.totalorder %v689, 0
      %vm722 = vcmp.gt.s32.totalorder %v690, 0
      %vm723 = vcmp.gt.s32.totalorder %v691, 0
      %vm724 = vcmp.gt.s32.totalorder %v692, 0
      %vm725 = vcmp.gt.s32.totalorder %v693, 0
      %vm726 = vcmp.gt.s32.totalorder %v694, 0
      %vm727 = vcmp.gt.s32.totalorder %v695, 0
      %vm728 = vcmp.gt.s32.totalorder %v696, 0
      %vm729 = vcmp.gt.s32.totalorder %v697, 0
      %vm730 = vcmp.gt.s32.totalorder %v698, 0
      %vm731 = vcmp.lt.s32.totalorder %v667, 15
      %vm732 = vcmp.lt.s32.totalorder %v668, 15
      %vm733 = vcmp.lt.s32.totalorder %v669, 15
      %vm734 = vcmp.lt.s32.totalorder %v670, 15
      %vm735 = vcmp.lt.s32.totalorder %v671, 15
      %vm736 = vcmp.lt.s32.totalorder %v672, 15
      %vm737 = vcmp.lt.s32.totalorder %v673, 15
      %vm738 = vcmp.lt.s32.totalorder %v674, 15
      %vm739 = vcmp.lt.s32.totalorder %v675, 15
      %vm740 = vcmp.lt.s32.totalorder %v676, 15
      %vm741 = vcmp.lt.s32.totalorder %v677, 15
      %vm742 = vcmp.lt.s32.totalorder %v678, 15
      %vm743 = vcmp.lt.s32.totalorder %v679, 15
      %vm744 = vcmp.lt.s32.totalorder %v680, 15
      %vm745 = vcmp.lt.s32.totalorder %v681, 15
      %vm746 = vcmp.lt.s32.totalorder %v682, 15
      %vm747 = vcmp.lt.s32.totalorder %v683, 15
      %vm748 = vcmp.lt.s32.totalorder %v684, 15
      %vm749 = vcmp.lt.s32.totalorder %v685, 15
      %vm750 = vcmp.lt.s32.totalorder %v686, 15
      %vm751 = vcmp.lt.s32.totalorder %v687, 15
      %vm752 = vcmp.lt.s32.totalorder %v688, 15
      %vm753 = vcmp.lt.s32.totalorder %v689, 15
      %vm754 = vcmp.lt.s32.totalorder %v690, 15
      %vm755 = vcmp.lt.s32.totalorder %v691, 15
      %vm756 = vcmp.lt.s32.totalorder %v692, 15
      %vm757 = vcmp.lt.s32.totalorder %v693, 15
      %vm758 = vcmp.lt.s32.totalorder %v694, 15
      %vm759 = vcmp.lt.s32.totalorder %v695, 15
      %vm760 = vcmp.lt.s32.totalorder %v696, 15
      %vm761 = vcmp.lt.s32.totalorder %v697, 15
      %vm762 = vcmp.lt.s32.totalorder %v698, 15
      %v763 = vld [vmem:[%s273] sm:$0xf]
      %v764 = vld [vmem:[%s273 + $0x4] sm:$0xf]
      %v765 = vld [vmem:[%s273 + $0x8] sm:$0xf]
      %v766 = vld [vmem:[%s273 + $0xc] sm:$0xf]
      %v767 = vld [vmem:[%s273 + $0x10] sm:$0xf]
      %v768 = vld [vmem:[%s273 + $0x14] sm:$0xf]
      %v769 = vld [vmem:[%s273 + $0x18] sm:$0xf]
      %v770 = vld [vmem:[%s273 + $0x1c] sm:$0xf]
      %v771 = vld [vmem:[%s273 + $0x20] sm:$0xf]
      %v772 = vld [vmem:[%s273 + $0x24] sm:$0xf]
      %v773 = vld [vmem:[%s273 + $0x28] sm:$0xf]
      %v774 = vld [vmem:[%s273 + $0x2c] sm:$0xf]
      %v775 = vld [vmem:[%s273 + $0x30] sm:$0xf]
      %v776 = vld [vmem:[%s273 + $0x34] sm:$0xf]
      %v777 = vld [vmem:[%s273 + $0x38] sm:$0xf]
      %v778 = vld [vmem:[%s273 + $0x3c] sm:$0xf]
      %v779 = vld [vmem:[%s273 + $0x40] sm:$0xf]
      %v780 = vld [vmem:[%s273 + $0x44] sm:$0xf]
      %v781 = vld [vmem:[%s273 + $0x48] sm:$0xf]
      %v782 = vld [vmem:[%s273 + $0x4c] sm:$0xf]
      %v783 = vld [vmem:[%s273 + $0x50] sm:$0xf]
      %v784 = vld [vmem:[%s273 + $0x54] sm:$0xf]
      %v785 = vld [vmem:[%s273 + $0x58] sm:$0xf]
      %v786 = vld [vmem:[%s273 + $0x5c] sm:$0xf]
      %v787 = vld [vmem:[%s273 + $0x60] sm:$0xf]
      %v788 = vld [vmem:[%s273 + $0x64] sm:$0xf]
      %v789 = vld [vmem:[%s273 + $0x68] sm:$0xf]
      %v790 = vld [vmem:[%s273 + $0x6c] sm:$0xf]
      %v791 = vld [vmem:[%s273 + $0x70] sm:$0xf]
      %v792 = vld [vmem:[%s273 + $0x74] sm:$0xf]
      %v793 = vld [vmem:[%s273 + $0x78] sm:$0xf]
      %v794 = vld [vmem:[%s273 + $0x7c] sm:$0xf]
      %v795 = vld [vmem:[%s1] sm:$0xf]
      %v796 = vld [vmem:[%s1 + $0x4] sm:$0xf]
      %v797 = vld [vmem:[%s1 + $0x8] sm:$0xf]
      %v798 = vld [vmem:[%s1 + $0xc] sm:$0x3]
      %v799 = vld [vmem:[%s2] sm:$0x1]
      %v801 = vlaneseq
      %v802 = vshrl.u32 %v801, 7
      %v803 = vsub.s32 0, %v802
      %v804 = vrot.slane %v799, %v803
      %v838 = vunpack.c.l.b16 %v763
      %v839 = vunpack.c.l.b16 %v764
      %v840 = vunpack.c.l.b16 %v765
      %v841 = vunpack.c.l.b16 %v766
      %v842 = vunpack.c.l.b16 %v767
      %v843 = vunpack.c.l.b16 %v768
      %v844 = vunpack.c.l.b16 %v769
      %v845 = vunpack.c.l.b16 %v770
      %v846 = vunpack.c.l.b16 %v771
      %v847 = vunpack.c.l.b16 %v772
      %v848 = vunpack.c.l.b16 %v773
      %v849 = vunpack.c.l.b16 %v774
      %v850 = vunpack.c.l.b16 %v775
      %v851 = vunpack.c.l.b16 %v776
      %v852 = vunpack.c.l.b16 %v777
      %v853 = vunpack.c.l.b16 %v778
      %v854 = vunpack.c.l.b16 %v779
      %v855 = vunpack.c.l.b16 %v780
      %v856 = vunpack.c.l.b16 %v781
      %v857 = vunpack.c.l.b16 %v782
      %v858 = vunpack.c.l.b16 %v783
      %v859 = vunpack.c.l.b16 %v784
      %v860 = vunpack.c.l.b16 %v785
      %v861 = vunpack.c.l.b16 %v786
      %v862 = vunpack.c.l.b16 %v787
      %v863 = vunpack.c.l.b16 %v788
      %v864 = vunpack.c.l.b16 %v789
      %v865 = vunpack.c.l.b16 %v790
      %v866 = vunpack.c.l.b16 %v791
      %v867 = vunpack.c.l.b16 %v792
      %v868 = vunpack.c.l.b16 %v793
      %v869 = vunpack.c.l.b16 %v794
      %v870 = vpack.c.b16 %v839, %v838
      %v871 = vpack.c.b16 %v841, %v840
      %v872 = vpack.c.b16 %v843, %v842
      %v873 = vpack.c.b16 %v845, %v844
      %v874 = vpack.c.b16 %v847, %v846
      %v875 = vpack.c.b16 %v849, %v848
      %v876 = vpack.c.b16 %v851, %v850
      %v877 = vpack.c.b16 %v853, %v852
      %v878 = vpack.c.b16 %v855, %v854
      %v879 = vpack.c.b16 %v857, %v856
      %v880 = vpack.c.b16 %v859, %v858
      %v881 = vpack.c.b16 %v861, %v860
      %v882 = vpack.c.b16 %v863, %v862
      %v883 = vpack.c.b16 %v865, %v864
      %v884 = vpack.c.b16 %v867, %v866
      %v885 = vpack.c.b16 %v869, %v868
      %v890 = vunpack.c.l.b16 %v795
      %v891 = vunpack.c.l.b16 %v796
      %v892 = vunpack.c.l.b16 %v797
      %v893 = vunpack.c.l.b16 %v798
      %v894 = vpack.c.b16 %v891, %v890
      %v895 = vpack.c.b16 %v893, %v892
      %vm897 = vcmask 220160
      %v899 = vsel %vm897, %v870, 0
      %v902 = vsel %vm897, %v871, 0
      %v905 = vsel %vm897, %v872, 0
      %v908 = vsel %vm897, %v873, 0
      %v911 = vsel %vm897, %v874, 0
      %v914 = vsel %vm897, %v875, 0
      %v917 = vsel %vm897, %v876, 0
      %v920 = vsel %vm897, %v877, 0
      %v923 = vsel %vm897, %v878, 0
      %v926 = vsel %vm897, %v879, 0
      %v929 = vsel %vm897, %v880, 0
      %v932 = vsel %vm897, %v881, 0
      %v935 = vsel %vm897, %v882, 0
      %v938 = vsel %vm897, %v883, 0
      %v941 = vsel %vm897, %v884, 0
      %v944 = vsel %vm897, %v885, 0
      %vm946 = vcmask 1044480
      %vm947 = vcmask 1045504
      %v948 = vsel %vm946, 4294967295, 65535
      %v949 = vsel %vm947, %v948, 0
      %v951 = vand.u32 %v895, %v949
      %953 = vmatprep.subr.bf16.mxu0 0
      %954 = vmatpush1.bf16.msra.mxu0 %v894
      %955 = vmatprep.subr.bf16.mxu0 0
      %956 = vmatpush1.bf16.msra.mxu0 %v951
      %957 = vmatprep.subr.bf16.mxu0 0
      %958 = vmatpush1.bf16.msra.mxu0 0
      %959 = vmatprep.subr.bf16.mxu0 0
      %960 = vmatpush1.bf16.msra.mxu0 0
      %961 = vmatprep.subr.bf16.mxu0 0
      %962 = vmatpush1.bf16.msra.mxu0 0
      %963 = vmatprep.subr.bf16.mxu0 0
      %964 = vmatpush1.bf16.msra.mxu0 0
      %965 = vmatprep.subr.bf16.mxu0 0
      %966 = vmatpush1.bf16.msra.mxu0 0
      %967 = vmatprep.subr.bf16.mxu0 0
      %968 = vmatpush1.bf16.msra.mxu0 0
      %969 = vmatprep.subr.bf16.mxu0 0
      %970 = vmatpush1.bf16.msra.mxu0 0
      %971 = vmatprep.subr.bf16.mxu0 0
      %972 = vmatpush1.bf16.msra.mxu0 0
      %973 = vmatprep.subr.bf16.mxu0 0
      %974 = vmatpush1.bf16.msra.mxu0 0
      %975 = vmatprep.subr.bf16.mxu0 0
      %976 = vmatpush1.bf16.msra.mxu0 0
      %977 = vmatprep.subr.bf16.mxu0 0
      %978 = vmatpush1.bf16.msra.mxu0 0
      %979 = vmatprep.subr.bf16.mxu0 0
      %980 = vmatpush1.bf16.msra.mxu0 0
      %981 = vmatprep.subr.bf16.mxu0 0
      %982 = vmatpush1.bf16.msra.mxu0 0
      %983 = vmatprep.subr.bf16.mxu0 0
      %984 = vmatpush1.bf16.msra.mxu0 0
      %985 = vmatprep.mubr.bf16.mxu0 0
      %986 = vmatmul.mubr.bf16.gmra.mrb[0].mxu0 %v899
      %v987 = vpop.f32.mrb[0].mxu0
      %v988 = vadd.f32 %v804, %v987
      %v989 = vpop.f32.mrb[0].mxu0
      %v990 = vpop.f32.mrb[0].mxu0
      %v991 = vadd.f32 %v804, %v990
      %v992 = vpop.f32.mrb[0].mxu0
      %993 = vmatprep.mubr.bf16.mxu0 0
      %994 = vmatmul.mubr.bf16.gmra.mrb[0].mxu0 %v902
      %v995 = vpop.f32.mrb[0].mxu0
      %v996 = vadd.f32 %v804, %v995
      %v997 = vpop.f32.mrb[0].mxu0
      %v998 = vpop.f32.mrb[0].mxu0
      %v999 = vadd.f32 %v804, %v998
      %v1000 = vpop.f32.mrb[0].mxu0
      %1001 = vmatprep.mubr.bf16.mxu0 0
      %1002 = vmatmul.mubr.bf16.gmra.mrb[0].mxu0 %v905
      %v1003 = vpop.f32.mrb[0].mxu0
      %v1004 = vadd.f32 %v804, %v1003
      %v1005 = vpop.f32.mrb[0].mxu0
      %v1006 = vpop.f32.mrb[0].mxu0
      %v1007 = vadd.f32 %v804, %v1006
      %v1008 = vpop.f32.mrb[0].mxu0
      %1009 = vmatprep.mubr.bf16.mxu0 0
      %1010 = vmatmul.mubr.bf16.gmra.mrb[0].mxu0 %v908
      %v1011 = vpop.f32.mrb[0].mxu0
      %v1012 = vadd.f32 %v804, %v1011
      %v1013 = vpop.f32.mrb[0].mxu0
      %v1014 = vpop.f32.mrb[0].mxu0
      %v1015 = vadd.f32 %v804, %v1014
      %v1016 = vpop.f32.mrb[0].mxu0
      %1017 = vmatprep.mubr.bf16.mxu0 0
      %1018 = vmatmul.mubr.bf16.gmra.mrb[0].mxu0 %v911
      %v1019 = vpop.f32.mrb[0].mxu0
      %v1020 = vadd.f32 %v804, %v1019
      %v1021 = vpop.f32.mrb[0].mxu0
      %v1022 = vpop.f32.mrb[0].mxu0
      %v1023 = vadd.f32 %v804, %v1022
      %v1024 = vpop.f32.mrb[0].mxu0
      %1025 = vmatprep.mubr.bf16.mxu0 0
      %1026 = vmatmul.mubr.bf16.gmra.mrb[0].mxu0 %v914
      %v1027 = vpop.f32.mrb[0].mxu0
      %v1028 = vadd.f32 %v804, %v1027
      %v1029 = vpop.f32.mrb[0].mxu0
      %v1030 = vpop.f32.mrb[0].mxu0
      %v1031 = vadd.f32 %v804, %v1030
      %v1032 = vpop.f32.mrb[0].mxu0
      %1033 = vmatprep.mubr.bf16.mxu0 0
      %1034 = vmatmul.mubr.bf16.gmra.mrb[0].mxu0 %v917
      %v1035 = vpop.f32.mrb[0].mxu0
      %v1036 = vadd.f32 %v804, %v1035
      %v1037 = vpop.f32.mrb[0].mxu0
      %v1038 = vpop.f32.mrb[0].mxu0
      %v1039 = vadd.f32 %v804, %v1038
      %v1040 = vpop.f32.mrb[0].mxu0
      %1041 = vmatprep.mubr.bf16.mxu0 0
      %1042 = vmatmul.mubr.bf16.gmra.mrb[0].mxu0 %v920
      %v1043 = vpop.f32.mrb[0].mxu0
      %v1044 = vadd.f32 %v804, %v1043
      %v1045 = vpop.f32.mrb[0].mxu0
      %v1046 = vpop.f32.mrb[0].mxu0
      %v1047 = vadd.f32 %v804, %v1046
      %v1048 = vpop.f32.mrb[0].mxu0
      %1049 = vmatprep.mubr.bf16.mxu0 0
      %1050 = vmatmul.mubr.bf16.gmra.mrb[0].mxu0 %v923
      %v1051 = vpop.f32.mrb[0].mxu0
      %v1052 = vadd.f32 %v804, %v1051
      %v1053 = vpop.f32.mrb[0].mxu0
      %v1054 = vpop.f32.mrb[0].mxu0
      %v1055 = vadd.f32 %v804, %v1054
      %v1056 = vpop.f32.mrb[0].mxu0
      %1057 = vmatprep.mubr.bf16.mxu0 0
      %1058 = vmatmul.mubr.bf16.gmra.mrb[0].mxu0 %v926
      %v1059 = vpop.f32.mrb[0].mxu0
      %v1060 = vadd.f32 %v804, %v1059
      %v1061 = vpop.f32.mrb[0].mxu0
      %v1062 = vpop.f32.mrb[0].mxu0
      %v1063 = vadd.f32 %v804, %v1062
      %v1064 = vpop.f32.mrb[0].mxu0
      %1065 = vmatprep.mubr.bf16.mxu0 0
      %1066 = vmatmul.mubr.bf16.gmra.mrb[0].mxu0 %v929
      %v1067 = vpop.f32.mrb[0].mxu0
      %v1068 = vadd.f32 %v804, %v1067
      %v1069 = vpop.f32.mrb[0].mxu0
      %v1070 = vpop.f32.mrb[0].mxu0
      %v1071 = vadd.f32 %v804, %v1070
      %v1072 = vpop.f32.mrb[0].mxu0
      %1073 = vmatprep.mubr.bf16.mxu0 0
      %1074 = vmatmul.mubr.bf16.gmra.mrb[0].mxu0 %v932
      %v1075 = vpop.f32.mrb[0].mxu0
      %v1076 = vadd.f32 %v804, %v1075
      %v1077 = vpop.f32.mrb[0].mxu0
      %v1078 = vpop.f32.mrb[0].mxu0
      %v1079 = vadd.f32 %v804, %v1078
      %v1080 = vpop.f32.mrb[0].mxu0
      %1081 = vmatprep.mubr.bf16.mxu0 0
      %1082 = vmatmul.mubr.bf16.gmra.mrb[0].mxu0 %v935
      %v1083 = vpop.f32.mrb[0].mxu0
      %v1084 = vadd.f32 %v804, %v1083
      %v1085 = vpop.f32.mrb[0].mxu0
      %v1086 = vpop.f32.mrb[0].mxu0
      %v1087 = vadd.f32 %v804, %v1086
      %v1088 = vpop.f32.mrb[0].mxu0
      %1089 = vmatprep.mubr.bf16.mxu0 0
      %1090 = vmatmul.mubr.bf16.gmra.mrb[0].mxu0 %v938
      %v1091 = vpop.f32.mrb[0].mxu0
      %v1092 = vadd.f32 %v804, %v1091
      %v1093 = vpop.f32.mrb[0].mxu0
      %v1094 = vpop.f32.mrb[0].mxu0
      %v1095 = vadd.f32 %v804, %v1094
      %v1096 = vpop.f32.mrb[0].mxu0
      %1097 = vmatprep.mubr.bf16.mxu0 0
      %1098 = vmatmul.mubr.bf16.gmra.mrb[0].mxu0 %v941
      %v1099 = vpop.f32.mrb[0].mxu0
      %v1100 = vadd.f32 %v804, %v1099
      %v1101 = vpop.f32.mrb[0].mxu0
      %v1102 = vpop.f32.mrb[0].mxu0
      %v1103 = vadd.f32 %v804, %v1102
      %v1104 = vpop.f32.mrb[0].mxu0
      %1105 = vmatprep.mubr.bf16.mxu0 0
      %1106 = vmatmul.mubr.bf16.gmra.mrb[0].mxu0 %v944
      %v1107 = vpop.f32.mrb[0].mxu0
      %v1108 = vadd.f32 %v804, %v1107
      %v1109 = vpop.f32.mrb[0].mxu0
      %v1110 = vpop.f32.mrb[0].mxu0
      %v1111 = vadd.f32 %v804, %v1110
      %v1112 = vpop.f32.mrb[0].mxu0
      %1113 = vdwg.mxu0
      %v1114 = vmax.f32 %v988, 0.0
      %v1115 = vmax.f32 %v991, 0.0
      %v1116 = vmax.f32 %v996, 0.0
      %v1117 = vmax.f32 %v999, 0.0
      %v1118 = vmax.f32 %v1004, 0.0
      %v1119 = vmax.f32 %v1007, 0.0
      %v1120 = vmax.f32 %v1012, 0.0
      %v1121 = vmax.f32 %v1015, 0.0
      %v1122 = vmax.f32 %v1020, 0.0
      %v1123 = vmax.f32 %v1023, 0.0
      %v1124 = vmax.f32 %v1028, 0.0
      %v1125 = vmax.f32 %v1031, 0.0
      %v1126 = vmax.f32 %v1036, 0.0
      %v1127 = vmax.f32 %v1039, 0.0
      %v1128 = vmax.f32 %v1044, 0.0
      %v1129 = vmax.f32 %v1047, 0.0
      %v1130 = vmax.f32 %v1052, 0.0
      %v1131 = vmax.f32 %v1055, 0.0
      %v1132 = vmax.f32 %v1060, 0.0
      %v1133 = vmax.f32 %v1063, 0.0
      %v1134 = vmax.f32 %v1068, 0.0
      %v1135 = vmax.f32 %v1071, 0.0
      %v1136 = vmax.f32 %v1076, 0.0
      %v1137 = vmax.f32 %v1079, 0.0
      %v1138 = vmax.f32 %v1084, 0.0
      %v1139 = vmax.f32 %v1087, 0.0
      %v1140 = vmax.f32 %v1092, 0.0
      %v1141 = vmax.f32 %v1095, 0.0
      %v1142 = vmax.f32 %v1100, 0.0
      %v1143 = vmax.f32 %v1103, 0.0
      %v1144 = vmax.f32 %v1108, 0.0
      %v1145 = vmax.f32 %v1111, 0.0
      %v1146 = vpack.c.bf16 %v1115, %v1114
      %v1147 = vpack.c.bf16 %v1117, %v1116
      %v1148 = vpack.c.bf16 %v1119, %v1118
      %v1149 = vpack.c.bf16 %v1121, %v1120
      %v1150 = vpack.c.bf16 %v1123, %v1122
      %v1151 = vpack.c.bf16 %v1125, %v1124
      %v1152 = vpack.c.bf16 %v1127, %v1126
      %v1153 = vpack.c.bf16 %v1129, %v1128
      %v1154 = vpack.c.bf16 %v1131, %v1130
      %v1155 = vpack.c.bf16 %v1133, %v1132
      %v1156 = vpack.c.bf16 %v1135, %v1134
      %v1157 = vpack.c.bf16 %v1137, %v1136
      %v1158 = vpack.c.bf16 %v1139, %v1138
      %v1159 = vpack.c.bf16 %v1141, %v1140
      %v1160 = vpack.c.bf16 %v1143, %v1142
      %v1161 = vpack.c.bf16 %v1145, %v1144
      %vm1162 = vsmask.f32 256
      %v1164 = vshrl.u32 %v1146, 16
      %v1166 = vrot.slane %v1164, 7
      %v1167 = vshll.u32 %v1146, 16
      %v1169 = vor.u32 %v1166, %v1167
      %v1171 = vshrl.u32 %v1147, 16
      %v1173 = vrot.slane %v1171, 7
      %v1174 = vshll.u32 %v1147, 16
      %v1176 = vor.u32 %v1173, %v1174
      %v1177 = vsel %vm1162, %v1166, %v1176
      %v1179 = vshrl.u32 %v1148, 16
      %v1181 = vrot.slane %v1179, 7
      %v1182 = vshll.u32 %v1148, 16
      %v1184 = vor.u32 %v1181, %v1182
      %v1185 = vsel %vm1162, %v1173, %v1184
      %v1187 = vshrl.u32 %v1149, 16
      %v1189 = vrot.slane %v1187, 7
      %v1190 = vshll.u32 %v1149, 16
      %v1192 = vor.u32 %v1189, %v1190
      %v1193 = vsel %vm1162, %v1181, %v1192
      %v1195 = vshrl.u32 %v1150, 16
      %v1197 = vrot.slane %v1195, 7
      %v1198 = vshll.u32 %v1150, 16
      %v1200 = vor.u32 %v1197, %v1198
      %v1201 = vsel %vm1162, %v1189, %v1200
      %v1203 = vshrl.u32 %v1151, 16
      %v1205 = vrot.slane %v1203, 7
      %v1206 = vshll.u32 %v1151, 16
      %v1208 = vor.u32 %v1205, %v1206
      %v1209 = vsel %vm1162, %v1197, %v1208
      %v1211 = vshrl.u32 %v1152, 16
      %v1213 = vrot.slane %v1211, 7
      %v1214 = vshll.u32 %v1152, 16
      %v1216 = vor.u32 %v1213, %v1214
      %v1217 = vsel %vm1162, %v1205, %v1216
      %v1219 = vshrl.u32 %v1153, 16
      %v1221 = vrot.slane %v1219, 7
      %v1222 = vshll.u32 %v1153, 16
      %v1224 = vor.u32 %v1221, %v1222
      %v1225 = vsel %vm1162, %v1213, %v1224
      %v1227 = vshrl.u32 %v1154, 16
      %v1229 = vrot.slane %v1227, 7
      %v1230 = vshll.u32 %v1154, 16
      %v1232 = vor.u32 %v1229, %v1230
      %v1233 = vsel %vm1162, %v1221, %v1232
      %v1235 = vshrl.u32 %v1155, 16
      %v1237 = vrot.slane %v1235, 7
      %v1238 = vshll.u32 %v1155, 16
      %v1240 = vor.u32 %v1237, %v1238
      %v1241 = vsel %vm1162, %v1229, %v1240
      %v1243 = vshrl.u32 %v1156, 16
      %v1245 = vrot.slane %v1243, 7
      %v1246 = vshll.u32 %v1156, 16
      %v1248 = vor.u32 %v1245, %v1246
      %v1249 = vsel %vm1162, %v1237, %v1248
      %v1251 = vshrl.u32 %v1157, 16
      %v1253 = vrot.slane %v1251, 7
      %v1254 = vshll.u32 %v1157, 16
      %v1256 = vor.u32 %v1253, %v1254
      %v1257 = vsel %vm1162, %v1245, %v1256
      %v1259 = vshrl.u32 %v1158, 16
      %v1261 = vrot.slane %v1259, 7
      %v1262 = vshll.u32 %v1158, 16
      %v1264 = vor.u32 %v1261, %v1262
      %v1265 = vsel %vm1162, %v1253, %v1264
      %v1267 = vshrl.u32 %v1159, 16
      %v1269 = vrot.slane %v1267, 7
      %v1270 = vshll.u32 %v1159, 16
      %v1272 = vor.u32 %v1269, %v1270
      %v1273 = vsel %vm1162, %v1261, %v1272
      %v1275 = vshrl.u32 %v1160, 16
      %v1277 = vrot.slane %v1275, 7
      %v1278 = vshll.u32 %v1160, 16
      %v1280 = vor.u32 %v1277, %v1278
      %v1281 = vsel %vm1162, %v1269, %v1280
      %v1283 = vshrl.u32 %v1161, 16
      %v1285 = vrot.slane %v1283, 7
      %v1286 = vshll.u32 %v1161, 16
      %v1288 = vor.u32 %v1285, %v1286
      %v1289 = vsel %vm1162, %v1277, %v1288
      %vm1307 = vcmask 1040384
      %vm1308 = vmand %vm1307, %vm1162
      %v1309 = vsel %vm1308, 0, %v1169
      %v1310 = vsel %vm1308, %v1285, 0
      %v1311 = vsel %vm699, 1, 0
      %v1312 = vsel %vm700, 1, 0
      %v1313 = vsel %vm701, 1, 0
      %v1314 = vsel %vm702, 1, 0
      %v1315 = vsel %vm703, 1, 0
      %v1316 = vsel %vm704, 1, 0
      %v1317 = vsel %vm705, 1, 0
      %v1318 = vsel %vm706, 1, 0
      %v1319 = vsel %vm707, 1, 0
      %v1320 = vsel %vm708, 1, 0
      %v1321 = vsel %vm709, 1, 0
      %v1322 = vsel %vm710, 1, 0
      %v1323 = vsel %vm711, 1, 0
      %v1324 = vsel %vm712, 1, 0
      %v1325 = vsel %vm713, 1, 0
      %v1326 = vsel %vm714, 1, 0
      %v1327 = vsel %vm715, 1, 0
      %v1328 = vsel %vm716, 1, 0
      %v1329 = vsel %vm717, 1, 0
      %v1330 = vsel %vm718, 1, 0
      %v1331 = vsel %vm719, 1, 0
      %v1332 = vsel %vm720, 1, 0
      %v1333 = vsel %vm721, 1, 0
      %v1334 = vsel %vm722, 1, 0
      %v1335 = vsel %vm723, 1, 0
      %v1336 = vsel %vm724, 1, 0
      %v1337 = vsel %vm725, 1, 0
      %v1338 = vsel %vm726, 1, 0
      %v1339 = vsel %vm727, 1, 0
      %v1340 = vsel %vm728, 1, 0
      %v1341 = vsel %vm729, 1, 0
      %v1342 = vsel %vm730, 1, 0
      %vm1343 = vcmp.eq.s32.totalorder %v1311, 1
      %vm1344 = vcmp.eq.s32.totalorder %v1312, 1
      %vm1345 = vcmp.eq.s32.totalorder %v1313, 1
      %vm1346 = vcmp.eq.s32.totalorder %v1314, 1
      %vm1347 = vcmp.eq.s32.totalorder %v1315, 1
      %vm1348 = vcmp.eq.s32.totalorder %v1316, 1
      %vm1349 = vcmp.eq.s32.totalorder %v1317, 1
      %vm1350 = vcmp.eq.s32.totalorder %v1318, 1
      %vm1351 = vcmp.eq.s32.totalorder %v1319, 1
      %vm1352 = vcmp.eq.s32.totalorder %v1320, 1
      %vm1353 = vcmp.eq.s32.totalorder %v1321, 1
      %vm1354 = vcmp.eq.s32.totalorder %v1322, 1
      %vm1355 = vcmp.eq.s32.totalorder %v1323, 1
      %vm1356 = vcmp.eq.s32.totalorder %v1324, 1
      %vm1357 = vcmp.eq.s32.totalorder %v1325, 1
      %vm1358 = vcmp.eq.s32.totalorder %v1326, 1
      %vm1359 = vcmp.eq.s32.totalorder %v1327, 1
      %vm1360 = vcmp.eq.s32.totalorder %v1328, 1
      %vm1361 = vcmp.eq.s32.totalorder %v1329, 1
      %vm1362 = vcmp.eq.s32.totalorder %v1330, 1
      %vm1363 = vcmp.eq.s32.totalorder %v1331, 1
      %vm1364 = vcmp.eq.s32.totalorder %v1332, 1
      %vm1365 = vcmp.eq.s32.totalorder %v1333, 1
      %vm1366 = vcmp.eq.s32.totalorder %v1334, 1
      %vm1367 = vcmp.eq.s32.totalorder %v1335, 1
      %vm1368 = vcmp.eq.s32.totalorder %v1336, 1
      %vm1369 = vcmp.eq.s32.totalorder %v1337, 1
      %vm1370 = vcmp.eq.s32.totalorder %v1338, 1
      %vm1371 = vcmp.eq.s32.totalorder %v1339, 1
      %vm1372 = vcmp.eq.s32.totalorder %v1340, 1
      %vm1373 = vcmp.eq.s32.totalorder %v1341, 1
      %vm1374 = vcmp.eq.s32.totalorder %v1342, 1
      %vm1375 = vmpackc.low %vm1345, %vm1345
      %vm1376 = vmpackc.low %vm1346, %vm1346
      %vm1377 = vmpackc.low %vm1347, %vm1347
      %vm1378 = vmpackc.low %vm1348, %vm1348
      %vm1379 = vmpackc.low %vm1349, %vm1349
      %vm1380 = vmpackc.low %vm1350, %vm1350
      %vm1381 = vmpackc.low %vm1351, %vm1351
      %vm1382 = vmpackc.low %vm1352, %vm1352
      %vm1383 = vmpackc.low %vm1353, %vm1353
      %vm1384 = vmpackc.low %vm1354, %vm1354
      %vm1385 = vmpackc.low %vm1355, %vm1355
      %vm1386 = vmpackc.low %vm1356, %vm1356
      %vm1387 = vmpackc.low %vm1357, %vm1357
      %vm1388 = vmpackc.low %vm1358, %vm1358
      %vm1389 = vmpackc.low %vm1359, %vm1359
      %vm1390 = vmpackc.low %vm1360, %vm1360
      %vm1391 = vmpackc.low %vm1361, %vm1361
      %vm1392 = vmpackc.low %vm1362, %vm1362
      %vm1393 = vmpackc.low %vm1363, %vm1363
      %vm1394 = vmpackc.low %vm1364, %vm1364
      %vm1395 = vmpackc.low %vm1365, %vm1365
      %vm1396 = vmpackc.low %vm1366, %vm1366
      %vm1397 = vmpackc.low %vm1367, %vm1367
      %vm1398 = vmpackc.low %vm1368, %vm1368
      %vm1399 = vmpackc.low %vm1369, %vm1369
      %vm1400 = vmpackc.low %vm1370, %vm1370
      %vm1401 = vmpackc.low %vm1371, %vm1371
      %vm1402 = vmpackc.low %vm1372, %vm1372
      %vm1403 = vmpackc.low %vm1373, %vm1373
      %vm1404 = vmpackc.low %vm1374, %vm1374
      %v1405 = vsel %vm1375, 65537, 0
      %v1406 = vsel %vm1376, 65537, 0
      %v1407 = vsel %vm1377, 65537, 0
      %v1408 = vsel %vm1378, 65537, 0
      %v1409 = vsel %vm1379, 65537, 0
      %v1410 = vsel %vm1380, 65537, 0
      %v1411 = vsel %vm1381, 65537, 0
      %v1412 = vsel %vm1382, 65537, 0
      %v1413 = vsel %vm1383, 65537, 0
      %v1414 = vsel %vm1384, 65537, 0
      %v1415 = vsel %vm1385, 65537, 0
      %v1416 = vsel %vm1386, 65537, 0
      %v1417 = vsel %vm1387, 65537, 0
      %v1418 = vsel %vm1388, 65537, 0
      %v1419 = vsel %vm1389, 65537, 0
      %v1420 = vsel %vm1390, 65537, 0
      %v1421 = vsel %vm1391, 65537, 0
      %v1422 = vsel %vm1392, 65537, 0
      %v1423 = vsel %vm1393, 65537, 0
      %v1424 = vsel %vm1394, 65537, 0
      %v1425 = vsel %vm1395, 65537, 0
      %v1426 = vsel %vm1396, 65537, 0
      %v1427 = vsel %vm1397, 65537, 0
      %v1428 = vsel %vm1398, 65537, 0
      %v1429 = vsel %vm1399, 65537, 0
      %v1430 = vsel %vm1400, 65537, 0
      %v1431 = vsel %vm1401, 65537, 0
      %v1432 = vsel %vm1402, 65537, 0
      %v1433 = vsel %vm1403, 65537, 0
      %v1434 = vsel %vm1404, 65537, 0
      %v1435 = vunpack.c.l.b16 %v1405
      %v1436 = vunpack.c.l.b16 %v1406
      %v1437 = vunpack.c.l.b16 %v1407
      %v1438 = vunpack.c.l.b16 %v1408
      %v1439 = vunpack.c.l.b16 %v1409
      %v1440 = vunpack.c.l.b16 %v1410
      %v1441 = vunpack.c.l.b16 %v1411
      %v1442 = vunpack.c.l.b16 %v1412
      %v1443 = vunpack.c.l.b16 %v1413
      %v1444 = vunpack.c.l.b16 %v1414
      %v1445 = vunpack.c.l.b16 %v1415
      %v1446 = vunpack.c.l.b16 %v1416
      %v1447 = vunpack.c.l.b16 %v1417
      %v1448 = vunpack.c.l.b16 %v1418
      %v1449 = vunpack.c.l.b16 %v1419
      %v1450 = vunpack.c.l.b16 %v1420
      %v1451 = vunpack.c.l.b16 %v1421
      %v1452 = vunpack.c.l.b16 %v1422
      %v1453 = vunpack.c.l.b16 %v1423
      %v1454 = vunpack.c.l.b16 %v1424
      %v1455 = vunpack.c.l.b16 %v1425
      %v1456 = vunpack.c.l.b16 %v1426
      %v1457 = vunpack.c.l.b16 %v1427
      %v1458 = vunpack.c.l.b16 %v1428
      %v1459 = vunpack.c.l.b16 %v1429
      %v1460 = vunpack.c.l.b16 %v1430
      %v1461 = vunpack.c.l.b16 %v1431
      %v1462 = vunpack.c.l.b16 %v1432
      %v1463 = vunpack.c.l.b16 %v1433
      %v1464 = vunpack.c.l.b16 %v1434
      %v1465 = vpack.c.b16 %v1436, %v1435
      %v1466 = vpack.c.b16 %v1438, %v1437
      %v1467 = vpack.c.b16 %v1440, %v1439
      %v1468 = vpack.c.b16 %v1442, %v1441
      %v1469 = vpack.c.b16 %v1444, %v1443
      %v1470 = vpack.c.b16 %v1446, %v1445
      %v1471 = vpack.c.b16 %v1448, %v1447
      %v1472 = vpack.c.b16 %v1450, %v1449
      %v1473 = vpack.c.b16 %v1452, %v1451
      %v1474 = vpack.c.b16 %v1454, %v1453
      %v1475 = vpack.c.b16 %v1456, %v1455
      %v1476 = vpack.c.b16 %v1458, %v1457
      %v1477 = vpack.c.b16 %v1460, %v1459
      %v1478 = vpack.c.b16 %v1462, %v1461
      %v1479 = vpack.c.b16 %v1464, %v1463
      %vm1480 = vcmp.ne.s16.totalorder %v1465, 0
      %vm1481 = vcmp.ne.s16.totalorder %v1466, 0
      %vm1482 = vcmp.ne.s16.totalorder %v1467, 0
      %vm1483 = vcmp.ne.s16.totalorder %v1468, 0
      %vm1484 = vcmp.ne.s16.totalorder %v1469, 0
      %vm1485 = vcmp.ne.s16.totalorder %v1470, 0
      %vm1486 = vcmp.ne.s16.totalorder %v1471, 0
      %vm1487 = vcmp.ne.s16.totalorder %v1472, 0
      %vm1488 = vcmp.ne.s16.totalorder %v1473, 0
      %vm1489 = vcmp.ne.s16.totalorder %v1474, 0
      %vm1490 = vcmp.ne.s16.totalorder %v1475, 0
      %vm1491 = vcmp.ne.s16.totalorder %v1476, 0
      %vm1492 = vcmp.ne.s16.totalorder %v1477, 0
      %vm1493 = vcmp.ne.s16.totalorder %v1478, 0
      %vm1494 = vcmp.ne.s16.totalorder %v1479, 0
      %v1495 = vsel %vm1480, %v1309, 0
      %v1496 = vsel %vm1481, %v1177, 0
      %v1497 = vsel %vm1482, %v1185, 0
      %v1498 = vsel %vm1483, %v1193, 0
      %v1499 = vsel %vm1484, %v1201, 0
      %v1500 = vsel %vm1485, %v1209, 0
      %v1501 = vsel %vm1486, %v1217, 0
      %v1502 = vsel %vm1487, %v1225, 0
      %v1503 = vsel %vm1488, %v1233, 0
      %v1504 = vsel %vm1489, %v1241, 0
      %v1505 = vsel %vm1490, %v1249, 0
      %v1506 = vsel %vm1491, %v1257, 0
      %v1507 = vsel %vm1492, %v1265, 0
      %v1508 = vsel %vm1493, %v1273, 0
      %v1509 = vsel %vm1494, %v1281, 0
      %v1510 = vsel %vm731, 1, 0
      %v1511 = vsel %vm732, 1, 0
      %v1512 = vsel %vm733, 1, 0
      %v1513 = vsel %vm734, 1, 0
      %v1514 = vsel %vm735, 1, 0
      %v1515 = vsel %vm736, 1, 0
      %v1516 = vsel %vm737, 1, 0
      %v1517 = vsel %vm738, 1, 0
      %v1518 = vsel %vm739, 1, 0
      %v1519 = vsel %vm740, 1, 0
      %v1520 = vsel %vm741, 1, 0
      %v1521 = vsel %vm742, 1, 0
      %v1522 = vsel %vm743, 1, 0
      %v1523 = vsel %vm744, 1, 0
      %v1524 = vsel %vm745, 1, 0
      %v1525 = vsel %vm746, 1, 0
      %v1526 = vsel %vm747, 1, 0
      %v1527 = vsel %vm748, 1, 0
      %v1528 = vsel %vm749, 1, 0
      %v1529 = vsel %vm750, 1, 0
      %v1530 = vsel %vm751, 1, 0
      %v1531 = vsel %vm752, 1, 0
      %v1532 = vsel %vm753, 1, 0
      %v1533 = vsel %vm754, 1, 0
      %v1534 = vsel %vm755, 1, 0
      %v1535 = vsel %vm756, 1, 0
      %v1536 = vsel %vm757, 1, 0
      %v1537 = vsel %vm758, 1, 0
      %v1538 = vsel %vm759, 1, 0
      %v1539 = vsel %vm760, 1, 0
      %v1540 = vsel %vm761, 1, 0
      %v1541 = vsel %vm762, 1, 0
      %vm1542 = vcmp.eq.s32.totalorder %v1510, 1
      %vm1543 = vcmp.eq.s32.totalorder %v1511, 1
      %vm1544 = vcmp.eq.s32.totalorder %v1512, 1
      %vm1545 = vcmp.eq.s32.totalorder %v1513, 1
      %vm1546 = vcmp.eq.s32.totalorder %v1514, 1
      %vm1547 = vcmp.eq.s32.totalorder %v1515, 1
      %vm1548 = vcmp.eq.s32.totalorder %v1516, 1
      %vm1549 = vcmp.eq.s32.totalorder %v1517, 1
      %vm1550 = vcmp.eq.s32.totalorder %v1518, 1
      %vm1551 = vcmp.eq.s32.totalorder %v1519, 1
      %vm1552 = vcmp.eq.s32.totalorder %v1520, 1
      %vm1553 = vcmp.eq.s32.totalorder %v1521, 1
      %vm1554 = vcmp.eq.s32.totalorder %v1522, 1
      %vm1555 = vcmp.eq.s32.totalorder %v1523, 1
      %vm1556 = vcmp.eq.s32.totalorder %v1524, 1
      %vm1557 = vcmp.eq.s32.totalorder %v1525, 1
      %vm1558 = vcmp.eq.s32.totalorder %v1526, 1
      %vm1559 = vcmp.eq.s32.totalorder %v1527, 1
      %vm1560 = vcmp.eq.s32.totalorder %v1528, 1
      %vm1561 = vcmp.eq.s32.totalorder %v1529, 1
      %vm1562 = vcmp.eq.s32.totalorder %v1530, 1
      %vm1563 = vcmp.eq.s32.totalorder %v1531, 1
      %vm1564 = vcmp.eq.s32.totalorder %v1532, 1
      %vm1565 = vcmp.eq.s32.totalorder %v1533, 1
      %vm1566 = vcmp.eq.s32.totalorder %v1534, 1
      %vm1567 = vcmp.eq.s32.totalorder %v1535, 1
      %vm1568 = vcmp.eq.s32.totalorder %v1536, 1
      %vm1569 = vcmp.eq.s32.totalorder %v1537, 1
      %vm1570 = vcmp.eq.s32.totalorder %v1538, 1
      %vm1571 = vcmp.eq.s32.totalorder %v1539, 1
      %vm1572 = vcmp.eq.s32.totalorder %v1540, 1
      %vm1573 = vcmp.eq.s32.totalorder %v1541, 1
      %vm1574 = vmpackc.low %vm1542, %vm1542
      %vm1575 = vmpackc.low %vm1543, %vm1543
      %vm1576 = vmpackc.low %vm1544, %vm1544
      %vm1577 = vmpackc.low %vm1545, %vm1545
      %vm1578 = vmpackc.low %vm1546, %vm1546
      %vm1579 = vmpackc.low %vm1547, %vm1547
      %vm1580 = vmpackc.low %vm1548, %vm1548
      %vm1581 = vmpackc.low %vm1549, %vm1549
      %vm1582 = vmpackc.low %vm1550, %vm1550
      %vm1583 = vmpackc.low %vm1551, %vm1551
      %vm1584 = vmpackc.low %vm1552, %vm1552
      %vm1585 = vmpackc.low %vm1553, %vm1553
      %vm1586 = vmpackc.low %vm1554, %vm1554
      %vm1587 = vmpackc.low %vm1555, %vm1555
      %vm1588 = vmpackc.low %vm1556, %vm1556
      %vm1589 = vmpackc.low %vm1557, %vm1557
      %vm1590 = vmpackc.low %vm1558, %vm1558
      %vm1591 = vmpackc.low %vm1559, %vm1559
      %vm1592 = vmpackc.low %vm1560, %vm1560
      %vm1593 = vmpackc.low %vm1561, %vm1561
      %vm1594 = vmpackc.low %vm1562, %vm1562
      %vm1595 = vmpackc.low %vm1563, %vm1563
      %vm1596 = vmpackc.low %vm1564, %vm1564
      %vm1597 = vmpackc.low %vm1565, %vm1565
      %vm1598 = vmpackc.low %vm1566, %vm1566
      %vm1599 = vmpackc.low %vm1567, %vm1567
      %vm1600 = vmpackc.low %vm1568, %vm1568
      %vm1601 = vmpackc.low %vm1569, %vm1569
      %vm1602 = vmpackc.low %vm1570, %vm1570
      %vm1603 = vmpackc.low %vm1571, %vm1571
      %vm1604 = vmpackc.low %vm1572, %vm1572
      %vm1605 = vmpackc.low %vm1573, %vm1573
      %v1606 = vsel %vm1574, 65537, 0
      %v1607 = vsel %vm1575, 65537, 0
      %v1608 = vsel %vm1576, 65537, 0
      %v1609 = vsel %vm1577, 65537, 0
      %v1610 = vsel %vm1578, 65537, 0
      %v1611 = vsel %vm1579, 65537, 0
      %v1612 = vsel %vm1580, 65537, 0
      %v1613 = vsel %vm1581, 65537, 0
      %v1614 = vsel %vm1582, 65537, 0
      %v1615 = vsel %vm1583, 65537, 0
      %v1616 = vsel %vm1584, 65537, 0
      %v1617 = vsel %vm1585, 65537, 0
      %v1618 = vsel %vm1586, 65537, 0
      %v1619 = vsel %vm1587, 65537, 0
      %v1620 = vsel %vm1588, 65537, 0
      %v1621 = vsel %vm1589, 65537, 0
      %v1622 = vsel %vm1590, 65537, 0
      %v1623 = vsel %vm1591, 65537, 0
      %v1624 = vsel %vm1592, 65537, 0
      %v1625 = vsel %vm1593, 65537, 0
      %v1626 = vsel %vm1594, 65537, 0
      %v1627 = vsel %vm1595, 65537, 0
      %v1628 = vsel %vm1596, 65537, 0
      %v1629 = vsel %vm1597, 65537, 0
      %v1630 = vsel %vm1598, 65537, 0
      %v1631 = vsel %vm1599, 65537, 0
      %v1632 = vsel %vm1600, 65537, 0
      %v1633 = vsel %vm1601, 65537, 0
      %v1634 = vsel %vm1602, 65537, 0
      %v1635 = vsel %vm1603, 65537, 0
      %v1636 = vsel %vm1604, 65537, 0
      %v1637 = vsel %vm1605, 65537, 0
      %v1638 = vunpack.c.l.b16 %v1606
      %v1639 = vunpack.c.l.b16 %v1607
      %v1640 = vunpack.c.l.b16 %v1608
      %v1641 = vunpack.c.l.b16 %v1609
      %v1642 = vunpack.c.l.b16 %v1610
      %v1643 = vunpack.c.l.b16 %v1611
      %v1644 = vunpack.c.l.b16 %v1612
      %v1645 = vunpack.c.l.b16 %v1613
      %v1646 = vunpack.c.l.b16 %v1614
      %v1647 = vunpack.c.l.b16 %v1615
      %v1648 = vunpack.c.l.b16 %v1616
      %v1649 = vunpack.c.l.b16 %v1617
      %v1650 = vunpack.c.l.b16 %v1618
      %v1651 = vunpack.c.l.b16 %v1619
      %v1652 = vunpack.c.l.b16 %v1620
      %v1653 = vunpack.c.l.b16 %v1621
      %v1654 = vunpack.c.l.b16 %v1622
      %v1655 = vunpack.c.l.b16 %v1623
      %v1656 = vunpack.c.l.b16 %v1624
      %v1657 = vunpack.c.l.b16 %v1625
      %v1658 = vunpack.c.l.b16 %v1626
      %v1659 = vunpack.c.l.b16 %v1627
      %v1660 = vunpack.c.l.b16 %v1628
      %v1661 = vunpack.c.l.b16 %v1629
      %v1662 = vunpack.c.l.b16 %v1630
      %v1663 = vunpack.c.l.b16 %v1631
      %v1664 = vunpack.c.l.b16 %v1632
      %v1665 = vunpack.c.l.b16 %v1633
      %v1666 = vunpack.c.l.b16 %v1634
      %v1667 = vunpack.c.l.b16 %v1635
      %v1668 = vunpack.c.l.b16 %v1636
      %v1669 = vunpack.c.l.b16 %v1637
      %v1670 = vpack.c.b16 %v1639, %v1638
      %v1671 = vpack.c.b16 %v1641, %v1640
      %v1672 = vpack.c.b16 %v1643, %v1642
      %v1673 = vpack.c.b16 %v1645, %v1644
      %v1674 = vpack.c.b16 %v1647, %v1646
      %v1675 = vpack.c.b16 %v1649, %v1648
      %v1676 = vpack.c.b16 %v1651, %v1650
      %v1677 = vpack.c.b16 %v1653, %v1652
      %v1678 = vpack.c.b16 %v1655, %v1654
      %v1679 = vpack.c.b16 %v1657, %v1656
      %v1680 = vpack.c.b16 %v1659, %v1658
      %v1681 = vpack.c.b16 %v1661, %v1660
      %v1682 = vpack.c.b16 %v1663, %v1662
      %v1683 = vpack.c.b16 %v1665, %v1664
      %v1684 = vpack.c.b16 %v1667, %v1666
      %v1685 = vpack.c.b16 %v1669, %v1668
      %v1686 = vrot.slane %v1670, 7
      %v1687 = vrot.slane %v1671, 7
      %v1688 = vsel %vm1307, %v1686, %v1687
      %v1689 = vrot.slane %v1672, 7
      %v1690 = vsel %vm1307, %v1687, %v1689
      %v1691 = vrot.slane %v1673, 7
      %v1692 = vsel %vm1307, %v1689, %v1691
      %v1693 = vrot.slane %v1674, 7
      %v1694 = vsel %vm1307, %v1691, %v1693
      %v1695 = vrot.slane %v1675, 7
      %v1696 = vsel %vm1307, %v1693, %v1695
      %v1697 = vrot.slane %v1676, 7
      %v1698 = vsel %vm1307, %v1695, %v1697
      %v1699 = vrot.slane %v1677, 7
      %v1700 = vsel %vm1307, %v1697, %v1699
      %v1701 = vrot.slane %v1678, 7
      %v1702 = vsel %vm1307, %v1699, %v1701
      %v1703 = vrot.slane %v1679, 7
      %v1704 = vsel %vm1307, %v1701, %v1703
      %v1705 = vrot.slane %v1680, 7
      %v1706 = vsel %vm1307, %v1703, %v1705
      %v1707 = vrot.slane %v1681, 7
      %v1708 = vsel %vm1307, %v1705, %v1707
      %v1709 = vrot.slane %v1682, 7
      %v1710 = vsel %vm1307, %v1707, %v1709
      %v1711 = vrot.slane %v1683, 7
      %v1712 = vsel %vm1307, %v1709, %v1711
      %v1713 = vrot.slane %v1684, 7
      %v1714 = vsel %vm1307, %v1711, %v1713
      %v1715 = vrot.slane %v1685, 7
      %v1716 = vsel %vm1307, %v1713, %v1715
      %vm1717 = vcmp.ne.s16.totalorder %v1688, 0
      %vm1718 = vcmp.ne.s16.totalorder %v1690, 0
      %vm1719 = vcmp.ne.s16.totalorder %v1692, 0
      %vm1720 = vcmp.ne.s16.totalorder %v1694, 0
      %vm1721 = vcmp.ne.s16.totalorder %v1696, 0
      %vm1722 = vcmp.ne.s16.totalorder %v1698, 0
      %vm1723 = vcmp.ne.s16.totalorder %v1700, 0
      %vm1724 = vcmp.ne.s16.totalorder %v1702, 0
      %vm1725 = vcmp.ne.s16.totalorder %v1704, 0
      %vm1726 = vcmp.ne.s16.totalorder %v1706, 0
      %vm1727 = vcmp.ne.s16.totalorder %v1708, 0
      %vm1728 = vcmp.ne.s16.totalorder %v1710, 0
      %vm1729 = vcmp.ne.s16.totalorder %v1712, 0
      %vm1730 = vcmp.ne.s16.totalorder %v1714, 0
      %vm1731 = vcmp.ne.s16.totalorder %v1716, 0
      %vm1732 = vcmp.ne.s16.totalorder %v1715, 0
      %v1733 = vsel %vm1717, %v1309, 0
      %v1734 = vsel %vm1718, %v1177, 0
      %v1735 = vsel %vm1719, %v1185, 0
      %v1736 = vsel %vm1720, %v1193, 0
      %v1737 = vsel %vm1721, %v1201, 0
      %v1738 = vsel %vm1722, %v1209, 0
      %v1739 = vsel %vm1723, %v1217, 0
      %v1740 = vsel %vm1724, %v1225, 0
      %v1741 = vsel %vm1725, %v1233, 0
      %v1742 = vsel %vm1726, %v1241, 0
      %v1743 = vsel %vm1727, %v1249, 0
      %v1744 = vsel %vm1728, %v1257, 0
      %v1745 = vsel %vm1729, %v1265, 0
      %v1746 = vsel %vm1730, %v1273, 0
      %v1747 = vsel %vm1731, %v1281, 0
      %v1748 = vsel %vm1732, %v1289, 0
      %vm1749 = vmpackc.low %vm1343, %vm1343
      %vm1750 = vmpackc.low %vm1344, %vm1344
      %v1751 = vsel %vm1749, 65537, 0
      %v1752 = vsel %vm1750, 65537, 0
      %v1753 = vunpack.c.l.b16 %v1751
      %v1754 = vunpack.c.l.b16 %v1752
      %v1755 = vpack.c.b16 %v1754, %v1753
      %vm1756 = vcmp.ne.s16.totalorder %v1755, 0
      %v1757 = vsel %vm1756, %v1309, 0
      %v1758 = vsel %vm1480, %v1177, 0
      %v1759 = vsel %vm1481, %v1185, 0
      %v1760 = vsel %vm1482, %v1193, 0
      %v1761 = vsel %vm1483, %v1201, 0
      %v1762 = vsel %vm1484, %v1209, 0
      %v1763 = vsel %vm1485, %v1217, 0
      %v1764 = vsel %vm1486, %v1225, 0
      %v1765 = vsel %vm1487, %v1233, 0
      %v1766 = vsel %vm1488, %v1241, 0
      %v1767 = vsel %vm1489, %v1249, 0
      %v1768 = vsel %vm1490, %v1257, 0
      %v1769 = vsel %vm1491, %v1265, 0
      %v1770 = vsel %vm1492, %v1273, 0
      %v1771 = vsel %vm1493, %v1281, 0
      %v1772 = vsel %vm1494, %v1289, 0
      %vm1773 = vcmp.ne.s16.totalorder %v1686, 0
      %v1774 = vsel %vm1773, %v1309, 0
      %v1775 = vsel %vm1717, %v1177, 0
      %v1776 = vsel %vm1718, %v1185, 0
      %v1777 = vsel %vm1719, %v1193, 0
      %v1778 = vsel %vm1720, %v1201, 0
      %v1779 = vsel %vm1721, %v1209, 0
      %v1780 = vsel %vm1722, %v1217, 0
      %v1781 = vsel %vm1723, %v1225, 0
      %v1782 = vsel %vm1724, %v1233, 0
      %v1783 = vsel %vm1725, %v1241, 0
      %v1784 = vsel %vm1726, %v1249, 0
      %v1785 = vsel %vm1727, %v1257, 0
      %v1786 = vsel %vm1728, %v1265, 0
      %v1787 = vsel %vm1729, %v1273, 0
      %v1788 = vsel %vm1730, %v1281, 0
      %v1789 = vsel %vm1731, %v1289, 0
      %v1790 = vsel %vm1732, %v1310, 0
      %v1791 = vsel %vm1756, %v1177, 0
      %v1792 = vsel %vm1480, %v1185, 0
      %v1793 = vsel %vm1481, %v1193, 0
      %v1794 = vsel %vm1482, %v1201, 0
      %v1795 = vsel %vm1483, %v1209, 0
      %v1796 = vsel %vm1484, %v1217, 0
      %v1797 = vsel %vm1485, %v1225, 0
      %v1798 = vsel %vm1486, %v1233, 0
      %v1799 = vsel %vm1487, %v1241, 0
      %v1800 = vsel %vm1488, %v1249, 0
      %v1801 = vsel %vm1489, %v1257, 0
      %v1802 = vsel %vm1490, %v1265, 0
      %v1803 = vsel %vm1491, %v1273, 0
      %v1804 = vsel %vm1492, %v1281, 0
      %v1805 = vsel %vm1493, %v1289, 0
      %v1806 = vsel %vm1494, %v1310, 0
      %v1807 = vsel %vm1773, %v1177, 0
      %v1808 = vsel %vm1717, %v1185, 0
      %v1809 = vsel %vm1718, %v1193, 0
      %v1810 = vsel %vm1719, %v1201, 0
      %v1811 = vsel %vm1720, %v1209, 0
      %v1812 = vsel %vm1721, %v1217, 0
      %v1813 = vsel %vm1722, %v1225, 0
      %v1814 = vsel %vm1723, %v1233, 0
      %v1815 = vsel %vm1724, %v1241, 0
      %v1816 = vsel %vm1725, %v1249, 0
      %v1817 = vsel %vm1726, %v1257, 0
      %v1818 = vsel %vm1727, %v1265, 0
      %v1819 = vsel %vm1728, %v1273, 0
      %v1820 = vsel %vm1729, %v1281, 0
      %v1821 = vsel %vm1730, %v1289, 0
      %v1822 = vsel %vm1731, %v1310, 0
      %vm1823 = vsmask.f32 7424
      %v1825 = vshrl.u32 0, 16
      %v1827 = vshll.u32 0, 16
      %v1829 = vrot.slane %v1827, 1
      %v1830 = vor.u32 %v1825, %v1829
      %v1832 = vshll.u32 %v1309, 16
      %v1834 = vrot.slane %v1832, 1
      %v1835 = vsel %vm1823, %v1830, %v1834
      %v1836 = vshrl.u32 %v1309, 16
      %v1838 = vor.u32 %v1836, %v1834
      %v1840 = vshll.u32 %v1177, 16
      %v1842 = vrot.slane %v1840, 1
      %v1843 = vsel %vm1823, %v1838, %v1842
      %v1844 = vshrl.u32 %v1177, 16
      %v1846 = vor.u32 %v1844, %v1842
      %v1848 = vshll.u32 %v1185, 16
      %v1850 = vrot.slane %v1848, 1
      %v1851 = vsel %vm1823, %v1846, %v1850
      %v1852 = vshrl.u32 %v1185, 16
      %v1854 = vor.u32 %v1852, %v1850
      %v1856 = vshll.u32 %v1193, 16
      %v1858 = vrot.slane %v1856, 1
      %v1859 = vsel %vm1823, %v1854, %v1858
      %v1860 = vshrl.u32 %v1193, 16
      %v1862 = vor.u32 %v1860, %v1858
      %v1864 = vshll.u32 %v1201, 16
      %v1866 = vrot.slane %v1864, 1
      %v1867 = vsel %vm1823, %v1862, %v1866
      %v1868 = vshrl.u32 %v1201, 16
      %v1870 = vor.u32 %v1868, %v1866
      %v1872 = vshll.u32 %v1209, 16
      %v1874 = vrot.slane %v1872, 1
      %v1875 = vsel %vm1823, %v1870, %v1874
      %v1876 = vshrl.u32 %v1209, 16
      %v1878 = vor.u32 %v1876, %v1874
      %v1880 = vshll.u32 %v1217, 16
      %v1882 = vrot.slane %v1880, 1
      %v1883 = vsel %vm1823, %v1878, %v1882
      %v1884 = vshrl.u32 %v1217, 16
      %v1886 = vor.u32 %v1884, %v1882
      %v1888 = vshll.u32 %v1225, 16
      %v1890 = vrot.slane %v1888, 1
      %v1891 = vsel %vm1823, %v1886, %v1890
      %v1892 = vshrl.u32 %v1225, 16
      %v1894 = vor.u32 %v1892, %v1890
      %v1896 = vshll.u32 %v1233, 16
      %v1898 = vrot.slane %v1896, 1
      %v1899 = vsel %vm1823, %v1894, %v1898
      %v1900 = vshrl.u32 %v1233, 16
      %v1902 = vor.u32 %v1900, %v1898
      %v1904 = vshll.u32 %v1241, 16
      %v1906 = vrot.slane %v1904, 1
      %v1907 = vsel %vm1823, %v1902, %v1906
      %v1908 = vshrl.u32 %v1241, 16
      %v1910 = vor.u32 %v1908, %v1906
      %v1912 = vshll.u32 %v1249, 16
      %v1914 = vrot.slane %v1912, 1
      %v1915 = vsel %vm1823, %v1910, %v1914
      %v1916 = vshrl.u32 %v1249, 16
      %v1918 = vor.u32 %v1916, %v1914
      %v1920 = vshll.u32 %v1257, 16
      %v1922 = vrot.slane %v1920, 1
      %v1923 = vsel %vm1823, %v1918, %v1922
      %v1924 = vshrl.u32 %v1257, 16
      %v1926 = vor.u32 %v1924, %v1922
      %v1928 = vshll.u32 %v1265, 16
      %v1930 = vrot.slane %v1928, 1
      %v1931 = vsel %vm1823, %v1926, %v1930
      %v1932 = vshrl.u32 %v1265, 16
      %v1934 = vor.u32 %v1932, %v1930
      %v1936 = vshll.u32 %v1273, 16
      %v1938 = vrot.slane %v1936, 1
      %v1939 = vsel %vm1823, %v1934, %v1938
      %v1940 = vshrl.u32 %v1273, 16
      %v1942 = vor.u32 %v1940, %v1938
      %v1944 = vshll.u32 %v1281, 16
      %v1946 = vrot.slane %v1944, 1
      %v1947 = vsel %vm1823, %v1942, %v1946
      %v1948 = vshrl.u32 %v1281, 16
      %v1950 = vor.u32 %v1948, %v1946
      %v1952 = vshll.u32 %v1289, 16
      %v1954 = vrot.slane %v1952, 1
      %v1955 = vsel %vm1823, %v1950, %v1954
      %1956 = vrot.lane.b32.xlu0 %v1835, 64
      %v1957 = vpop.permute.xlu0 %1956
      %1958 = vrot.lane.b32.xlu0 %v1843, 64
      %v1959 = vpop.permute.xlu0 %1958
      %1960 = vrot.lane.b32.xlu0 %v1851, 64
      %v1961 = vpop.permute.xlu0 %1960
      %1962 = vrot.lane.b32.xlu0 %v1859, 64
      %v1963 = vpop.permute.xlu0 %1962
      %1964 = vrot.lane.b32.xlu0 %v1867, 64
      %v1965 = vpop.permute.xlu0 %1964
      %1966 = vrot.lane.b32.xlu0 %v1875, 64
      %v1967 = vpop.permute.xlu0 %1966
      %1968 = vrot.lane.b32.xlu0 %v1883, 64
      %v1969 = vpop.permute.xlu0 %1968
      %1970 = vrot.lane.b32.xlu0 %v1891, 64
      %v1971 = vpop.permute.xlu0 %1970
      %1972 = vrot.lane.b32.xlu0 %v1899, 64
      %v1973 = vpop.permute.xlu0 %1972
      %1974 = vrot.lane.b32.xlu0 %v1907, 64
      %v1975 = vpop.permute.xlu0 %1974
      %1976 = vrot.lane.b32.xlu0 %v1915, 64
      %v1977 = vpop.permute.xlu0 %1976
      %1978 = vrot.lane.b32.xlu0 %v1923, 64
      %v1979 = vpop.permute.xlu0 %1978
      %1980 = vrot.lane.b32.xlu0 %v1931, 64
      %v1981 = vpop.permute.xlu0 %1980
      %1982 = vrot.lane.b32.xlu0 %v1939, 64
      %v1983 = vpop.permute.xlu0 %1982
      %1984 = vrot.lane.b32.xlu0 %v1947, 64
      %v1985 = vpop.permute.xlu0 %1984
      %1986 = vrot.lane.b32.xlu0 %v1955, 64
      %v1987 = vpop.permute.xlu0 %1986
      %vm2005 = vcmask 1046528
      %v2006 = vrot.slane 0, 1
      %v2007 = vrot.slane %v1733, 1
      %v2008 = vsel %vm2005, %v2006, %v2007
      %v2009 = vrot.slane %v1734, 1
      %v2010 = vsel %vm2005, %v2007, %v2009
      %v2011 = vrot.slane %v1735, 1
      %v2012 = vsel %vm2005, %v2009, %v2011
      %v2013 = vrot.slane %v1736, 1
      %v2014 = vsel %vm2005, %v2011, %v2013
      %v2015 = vrot.slane %v1737, 1
      %v2016 = vsel %vm2005, %v2013, %v2015
      %v2017 = vrot.slane %v1738, 1
      %v2018 = vsel %vm2005, %v2015, %v2017
      %v2019 = vrot.slane %v1739, 1
      %v2020 = vsel %vm2005, %v2017, %v2019
      %v2021 = vrot.slane %v1740, 1
      %v2022 = vsel %vm2005, %v2019, %v2021
      %v2023 = vrot.slane %v1741, 1
      %v2024 = vsel %vm2005, %v2021, %v2023
      %v2025 = vrot.slane %v1742, 1
      %v2026 = vsel %vm2005, %v2023, %v2025
      %v2027 = vrot.slane %v1743, 1
      %v2028 = vsel %vm2005, %v2025, %v2027
      %v2029 = vrot.slane %v1744, 1
      %v2030 = vsel %vm2005, %v2027, %v2029
      %v2031 = vrot.slane %v1745, 1
      %v2032 = vsel %vm2005, %v2029, %v2031
      %v2033 = vrot.slane %v1746, 1
      %v2034 = vsel %vm2005, %v2031, %v2033
      %v2035 = vrot.slane %v1747, 1
      %v2036 = vsel %vm2005, %v2033, %v2035
      %v2037 = vrot.slane %v1748, 1
      %v2038 = vsel %vm2005, %v2035, %v2037
      %2055 = vrot.lane.b32.xlu0 %v1757, 64
      %v2056 = vpop.permute.xlu0 %2055
      %2057 = vrot.lane.b32.xlu0 %v1758, 64
      %v2058 = vpop.permute.xlu0 %2057
      %2059 = vrot.lane.b32.xlu0 %v1759, 64
      %v2060 = vpop.permute.xlu0 %2059
      %2061 = vrot.lane.b32.xlu0 %v1760, 64
      %v2062 = vpop.permute.xlu0 %2061
      %2063 = vrot.lane.b32.xlu0 %v1761, 64
      %v2064 = vpop.permute.xlu0 %2063
      %2065 = vrot.lane.b32.xlu0 %v1762, 64
      %v2066 = vpop.permute.xlu0 %2065
      %2067 = vrot.lane.b32.xlu0 %v1763, 64
      %v2068 = vpop.permute.xlu0 %2067
      %2069 = vrot.lane.b32.xlu0 %v1764, 64
      %v2070 = vpop.permute.xlu0 %2069
      %2071 = vrot.lane.b32.xlu0 %v1765, 64
      %v2072 = vpop.permute.xlu0 %2071
      %2073 = vrot.lane.b32.xlu0 %v1766, 64
      %v2074 = vpop.permute.xlu0 %2073
      %2075 = vrot.lane.b32.xlu0 %v1767, 64
      %v2076 = vpop.permute.xlu0 %2075
      %2077 = vrot.lane.b32.xlu0 %v1768, 64
      %v2078 = vpop.permute.xlu0 %2077
      %2079 = vrot.lane.b32.xlu0 %v1769, 64
      %v2080 = vpop.permute.xlu0 %2079
      %2081 = vrot.lane.b32.xlu0 %v1770, 64
      %v2082 = vpop.permute.xlu0 %2081
      %2083 = vrot.lane.b32.xlu0 %v1771, 64
      %v2084 = vpop.permute.xlu0 %2083
      %2085 = vrot.lane.b32.xlu0 %v1772, 64
      %v2086 = vpop.permute.xlu0 %2085
      %v2087 = vshrl.u32 %v1289, 16
      %v2089 = vor.u32 %v2087, %v1954
      %v2091 = vshll.u32 %v1310, 16
      %v2093 = vrot.slane %v2091, 1
      %v2094 = vsel %vm1823, %v2089, %v2093
      %v2112 = vrot.slane %v1774, 1
      %v2113 = vrot.slane %v1775, 1
      %v2114 = vsel %vm2005, %v2112, %v2113
      %v2115 = vrot.slane %v1776, 1
      %v2116 = vsel %vm2005, %v2113, %v2115
      %v2117 = vrot.slane %v1777, 1
      %v2118 = vsel %vm2005, %v2115, %v2117
      %v2119 = vrot.slane %v1778, 1
      %v2120 = vsel %vm2005, %v2117, %v2119
      %v2121 = vrot.slane %v1779, 1
      %v2122 = vsel %vm2005, %v2119, %v2121
      %v2123 = vrot.slane %v1780, 1
      %v2124 = vsel %vm2005, %v2121, %v2123
      %v2125 = vrot.slane %v1781, 1
      %v2126 = vsel %vm2005, %v2123, %v2125
      %v2127 = vrot.slane %v1782, 1
      %v2128 = vsel %vm2005, %v2125, %v2127
      %v2129 = vrot.slane %v1783, 1
      %v2130 = vsel %vm2005, %v2127, %v2129
      %v2131 = vrot.slane %v1784, 1
      %v2132 = vsel %vm2005, %v2129, %v2131
      %v2133 = vrot.slane %v1785, 1
      %v2134 = vsel %vm2005, %v2131, %v2133
      %v2135 = vrot.slane %v1786, 1
      %v2136 = vsel %vm2005, %v2133, %v2135
      %v2137 = vrot.slane %v1787, 1
      %v2138 = vsel %vm2005, %v2135, %v2137
      %v2139 = vrot.slane %v1788, 1
      %v2140 = vsel %vm2005, %v2137, %v2139
      %v2141 = vrot.slane %v1789, 1
      %v2142 = vsel %vm2005, %v2139, %v2141
      %v2143 = vrot.slane %v1790, 1
      %v2144 = vsel %vm2005, %v2141, %v2143
      %2145 = vrot.lane.b32.xlu0 %v2114, 64
      %v2146 = vpop.permute.xlu0 %2145
      %2147 = vrot.lane.b32.xlu0 %v2116, 64
      %v2148 = vpop.permute.xlu0 %2147
      %2149 = vrot.lane.b32.xlu0 %v2118, 64
      %v2150 = vpop.permute.xlu0 %2149
      %2151 = vrot.lane.b32.xlu0 %v2120, 64
      %v2152 = vpop.permute.xlu0 %2151
      %2153 = vrot.lane.b32.xlu0 %v2122, 64
      %v2154 = vpop.permute.xlu0 %2153
      %2155 = vrot.lane.b32.xlu0 %v2124, 64
      %v2156 = vpop.permute.xlu0 %2155
      %2157 = vrot.lane.b32.xlu0 %v2126, 64
      %v2158 = vpop.permute.xlu0 %2157
      %2159 = vrot.lane.b32.xlu0 %v2128, 64
      %v2160 = vpop.permute.xlu0 %2159
      %2161 = vrot.lane.b32.xlu0 %v2130, 64
      %v2162 = vpop.permute.xlu0 %2161
      %2163 = vrot.lane.b32.xlu0 %v2132, 64
      %v2164 = vpop.permute.xlu0 %2163
      %2165 = vrot.lane.b32.xlu0 %v2134, 64
      %v2166 = vpop.permute.xlu0 %2165
      %2167 = vrot.lane.b32.xlu0 %v2136, 64
      %v2168 = vpop.permute.xlu0 %2167
      %2169 = vrot.lane.b32.xlu0 %v2138, 64
      %v2170 = vpop.permute.xlu0 %2169
      %2171 = vrot.lane.b32.xlu0 %v2140, 64
      %v2172 = vpop.permute.xlu0 %2171
      %2173 = vrot.lane.b32.xlu0 %v2142, 64
      %v2174 = vpop.permute.xlu0 %2173
      %2175 = vrot.lane.b32.xlu0 %v2144, 64
      %v2176 = vpop.permute.xlu0 %2175
      %v2177 = vshrl.u32 %v1310, 16
      %v2179 = vor.u32 %v2177, %v2093
      %v2180 = vsel %vm1823, %v2179, %v1829
      %2181 = vrot.lane.b32.xlu0 %v2094, 64
      %v2182 = vpop.permute.xlu0 %2181
      %2183 = vrot.lane.b32.xlu0 %v2180, 64
      %v2184 = vpop.permute.xlu0 %2183
      %v2201 = vrot.slane %v1807, 1
      %v2202 = vrot.slane %v1808, 1
      %v2203 = vsel %vm2005, %v2201, %v2202
      %v2204 = vrot.slane %v1809, 1
      %v2205 = vsel %vm2005, %v2202, %v2204
      %v2206 = vrot.slane %v1810, 1
      %v2207 = vsel %vm2005, %v2204, %v2206
      %v2208 = vrot.slane %v1811, 1
      %v2209 = vsel %vm2005, %v2206, %v2208
      %v2210 = vrot.slane %v1812, 1
      %v2211 = vsel %vm2005, %v2208, %v2210
      %v2212 = vrot.slane %v1813, 1
      %v2213 = vsel %vm2005, %v2210, %v2212
      %v2214 = vrot.slane %v1814, 1
      %v2215 = vsel %vm2005, %v2212, %v2214
      %v2216 = vrot.slane %v1815, 1
      %v2217 = vsel %vm2005, %v2214, %v2216
      %v2218 = vrot.slane %v1816, 1
      %v2219 = vsel %vm2005, %v2216, %v2218
      %v2220 = vrot.slane %v1817, 1
      %v2221 = vsel %vm2005, %v2218, %v2220
      %v2222 = vrot.slane %v1818, 1
      %v2223 = vsel %vm2005, %v2220, %v2222
      %v2224 = vrot.slane %v1819, 1
      %v2225 = vsel %vm2005, %v2222, %v2224
      %v2226 = vrot.slane %v1820, 1
      %v2227 = vsel %vm2005, %v2224, %v2226
      %v2228 = vrot.slane %v1821, 1
      %v2229 = vsel %vm2005, %v2226, %v2228
      %v2230 = vrot.slane %v1822, 1
      %v2231 = vsel %vm2005, %v2228, %v2230
      %v2232 = vsel %vm2005, %v2230, %v2006
      %vm2233 = vcmask 523264
      %v2235 = vsel %vm2233, 0, %v1957
      %v2239 = vsel %vm2233, %v1495, %v1959
      %v2243 = vsel %vm2233, %v1496, %v1961
      %v2247 = vsel %vm2233, %v1497, %v1963
      %v2251 = vsel %vm2233, %v1498, %v1965
      %v2255 = vsel %vm2233, %v1499, %v1967
      %v2259 = vsel %vm2233, %v1500, %v1969
      %v2263 = vsel %vm2233, %v1501, %v1971
      %v2267 = vsel %vm2233, %v1502, %v1973
      %v2271 = vsel %vm2233, %v1503, %v1975
      %v2275 = vsel %vm2233, %v1504, %v1977
      %v2279 = vsel %vm2233, %v1505, %v1979
      %v2283 = vsel %vm2233, %v1506, %v1981
      %v2287 = vsel %vm2233, %v1507, %v1983
      %v2291 = vsel %vm2233, %v1508, %v1985
      %v2295 = vsel %vm2233, %v1509, %v1987
      %v2299 = vsel %vm2233, %v2008, %v2056
      %v2303 = vsel %vm2233, %v2010, %v2058
      %v2307 = vsel %vm2233, %v2012, %v2060
      %v2311 = vsel %vm2233, %v2014, %v2062
      %v2315 = vsel %vm2233, %v2016, %v2064
      %v2319 = vsel %vm2233, %v2018, %v2066
      %v2323 = vsel %vm2233, %v2020, %v2068
      %v2327 = vsel %vm2233, %v2022, %v2070
      %v2331 = vsel %vm2233, %v2024, %v2072
      %v2335 = vsel %vm2233, %v2026, %v2074
      %v2339 = vsel %vm2233, %v2028, %v2076
      %v2343 = vsel %vm2233, %v2030, %v2078
      %v2347 = vsel %vm2233, %v2032, %v2080
      %v2351 = vsel %vm2233, %v2034, %v2082
      %v2355 = vsel %vm2233, %v2036, %v2084
      %v2359 = vsel %vm2233, %v2038, %v2086
      %v2363 = vsel %vm2233, %v1843, %v2146
      %v2367 = vsel %vm2233, %v1851, %v2148
      %v2371 = vsel %vm2233, %v1859, %v2150
      %v2375 = vsel %vm2233, %v1867, %v2152
      %v2379 = vsel %vm2233, %v1875, %v2154
      %v2383 = vsel %vm2233, %v1883, %v2156
      %v2387 = vsel %vm2233, %v1891, %v2158
      %v2391 = vsel %vm2233, %v1899, %v2160
      %v2395 = vsel %vm2233, %v1907, %v2162
      %v2399 = vsel %vm2233, %v1915, %v2164
      %v2403 = vsel %vm2233, %v1923, %v2166
      %v2407 = vsel %vm2233, %v1931, %v2168
      %v2411 = vsel %vm2233, %v1939, %v2170
      %v2415 = vsel %vm2233, %v1947, %v2172
      %v2419 = vsel %vm2233, %v1955, %v2174
      %v2423 = vsel %vm2233, %v2094, %v2176
      %v2426 = vsel %vm2233, %v1791, %v1961
      %v2429 = vsel %vm2233, %v1792, %v1963
      %v2432 = vsel %vm2233, %v1793, %v1965
      %v2435 = vsel %vm2233, %v1794, %v1967
      %v2438 = vsel %vm2233, %v1795, %v1969
      %v2441 = vsel %vm2233, %v1796, %v1971
      %v2444 = vsel %vm2233, %v1797, %v1973
      %v2447 = vsel %vm2233, %v1798, %v1975
      %v2450 = vsel %vm2233, %v1799, %v1977
      %v2453 = vsel %vm2233, %v1800, %v1979
      %v2456 = vsel %vm2233, %v1801, %v1981
      %v2459 = vsel %vm2233, %v1802, %v1983
      %v2462 = vsel %vm2233, %v1803, %v1985
      %v2465 = vsel %vm2233, %v1804, %v1987
      %v2469 = vsel %vm2233, %v1805, %v2182
      %v2473 = vsel %vm2233, %v1806, %v2184
      %v2475 = vld [vmem:[%s3] sm:$0xf]
      %v2476 = vld [vmem:[%s3 + $0x4] sm:$0xf]
      %v2477 = vld [vmem:[%s3 + $0x8] sm:$0xf]
      %v2478 = vld [vmem:[%s3 + $0xc] sm:$0xf]
      %v2479 = vld [vmem:[%s3 + $0x10] sm:$0xf]
      %v2480 = vld [vmem:[%s3 + $0x14] sm:$0xf]
      %v2481 = vld [vmem:[%s3 + $0x18] sm:$0xf]
      %v2482 = vld [vmem:[%s3 + $0x1c] sm:$0xf]
      %v2483 = vld [vmem:[%s3 + $0x20] sm:$0xf]
      %v2484 = vld [vmem:[%s3 + $0x24] sm:$0xf]
      %v2485 = vld [vmem:[%s3 + $0x28] sm:$0xf]
      %v2486 = vld [vmem:[%s3 + $0x2c] sm:$0xf]
      %v2487 = vld [vmem:[%s3 + $0x30] sm:$0xf]
      %v2488 = vld [vmem:[%s3 + $0x34] sm:$0xf]
      %v2489 = vld [vmem:[%s3 + $0x38] sm:$0xf]
      %v2490 = vld [vmem:[%s3 + $0x3c] sm:$0xf]
      %v2491 = vld [vmem:[%s3 + $0x40] sm:$0xf]
      %v2492 = vld [vmem:[%s3 + $0x44] sm:$0xf]
      %v2493 = vld [vmem:[%s3 + $0x48] sm:$0xf]
      %v2494 = vld [vmem:[%s3 + $0x4c] sm:$0xf]
      %v2495 = vld [vmem:[%s3 + $0x50] sm:$0xf]
      %v2496 = vld [vmem:[%s3 + $0x54] sm:$0xf]
      %v2497 = vld [vmem:[%s3 + $0x58] sm:$0xf]
      %v2498 = vld [vmem:[%s3 + $0x5c] sm:$0xf]
      %v2499 = vld [vmem:[%s3 + $0x60] sm:$0xf]
      %v2500 = vld [vmem:[%s3 + $0x64] sm:$0xf]
      %v2501 = vld [vmem:[%s3 + $0x68] sm:$0xf]
      %v2502 = vld [vmem:[%s3 + $0x6c] sm:$0xf]
      %v2503 = vld [vmem:[%s3 + $0x70] sm:$0xf]
      %v2504 = vld [vmem:[%s3 + $0x74] sm:$0xf]
      %v2505 = vld [vmem:[%s3 + $0x78] sm:$0xf]
      %v2506 = vld [vmem:[%s3 + $0x7c] sm:$0xf]
      %v2507 = vld [vmem:[%s3 + $0x80] sm:$0xf]
      %v2508 = vld [vmem:[%s3 + $0x84] sm:$0xf]
      %v2509 = vld [vmem:[%s3 + $0x88] sm:$0xf]
      %v2510 = vld [vmem:[%s3 + $0x8c] sm:$0xf]
      %v2511 = vld [vmem:[%s3 + $0x90] sm:$0xf]
      %v2512 = vld [vmem:[%s3 + $0x94] sm:$0xf]
      %v2513 = vld [vmem:[%s3 + $0x98] sm:$0xf]
      %v2514 = vld [vmem:[%s3 + $0x9c] sm:$0xf]
      %v2515 = vld [vmem:[%s3 + $0xa0] sm:$0xf]
      %v2516 = vld [vmem:[%s3 + $0xa4] sm:$0xf]
      %v2517 = vld [vmem:[%s3 + $0xa8] sm:$0xf]
      %v2518 = vld [vmem:[%s3 + $0xac] sm:$0xf]
      %v2519 = vld [vmem:[%s3 + $0xb0] sm:$0xf]
      %v2520 = vld [vmem:[%s3 + $0xb4] sm:$0xf]
      %v2521 = vld [vmem:[%s3 + $0xb8] sm:$0xf]
      %v2522 = vld [vmem:[%s3 + $0xbc] sm:$0xf]
      %v2523 = vld [vmem:[%s3 + $0xc0] sm:$0xf]
      %v2524 = vld [vmem:[%s3 + $0xc4] sm:$0xf]
      %v2525 = vld [vmem:[%s3 + $0xc8] sm:$0xf]
      %v2526 = vld [vmem:[%s3 + $0xcc] sm:$0xf]
      %v2527 = vld [vmem:[%s3 + $0xd0] sm:$0xf]
      %v2528 = vld [vmem:[%s3 + $0xd4] sm:$0xf]
      %v2529 = vld [vmem:[%s3 + $0xd8] sm:$0xf]
      %v2530 = vld [vmem:[%s3 + $0xdc] sm:$0xf]
      %v2531 = vld [vmem:[%s3 + $0xe0] sm:$0xf]
      %v2532 = vld [vmem:[%s3 + $0xe4] sm:$0xf]
      %v2533 = vld [vmem:[%s3 + $0xe8] sm:$0xf]
      %v2534 = vld [vmem:[%s3 + $0xec] sm:$0xf]
      %v2535 = vld [vmem:[%s3 + $0xf0] sm:$0xf]
      %v2536 = vld [vmem:[%s3 + $0xf4] sm:$0xf]
      %v2537 = vld [vmem:[%s3 + $0xf8] sm:$0xf]
      %v2538 = vld [vmem:[%s3 + $0xfc] sm:$0xf]
      %v2539 = vld [vmem:[%s3 + $0x100] sm:$0xf]
      %v2540 = vld [vmem:[%s3 + $0x104] sm:$0xf]
      %v2541 = vld [vmem:[%s3 + $0x108] sm:$0xf]
      %v2542 = vld [vmem:[%s3 + $0x10c] sm:$0xf]
      %v2543 = vld [vmem:[%s3 + $0x110] sm:$0xf]
      %v2544 = vld [vmem:[%s3 + $0x114] sm:$0xf]
      %v2545 = vld [vmem:[%s3 + $0x118] sm:$0xf]
      %v2546 = vld [vmem:[%s3 + $0x11c] sm:$0xf]
      %v2547 = vld [vmem:[%s4] sm:$0x1]
      %v2549 = vlaneseq
      %v2550 = vshrl.u32 %v2549, 7
      %v2551 = vsub.s32 0, %v2550
      %v2552 = vrot.slane %v2547, %v2551
      %v2626 = vunpack.c.l.b16 %v2475
      %v2627 = vunpack.c.l.b16 %v2476
      %v2628 = vunpack.c.l.b16 %v2477
      %v2629 = vunpack.c.l.b16 %v2478
      %v2630 = vunpack.c.l.b16 %v2479
      %v2631 = vunpack.c.l.b16 %v2480
      %v2632 = vunpack.c.l.b16 %v2481
      %v2633 = vunpack.c.l.b16 %v2482
      %v2634 = vunpack.c.l.b16 %v2483
      %v2635 = vunpack.c.l.b16 %v2484
      %v2636 = vunpack.c.l.b16 %v2485
      %v2637 = vunpack.c.l.b16 %v2486
      %v2638 = vunpack.c.l.b16 %v2487
      %v2639 = vunpack.c.l.b16 %v2488
      %v2640 = vunpack.c.l.b16 %v2489
      %v2641 = vunpack.c.l.b16 %v2490
      %v2642 = vunpack.c.l.b16 %v2491
      %v2643 = vunpack.c.l.b16 %v2492
      %v2644 = vunpack.c.l.b16 %v2493
      %v2645 = vunpack.c.l.b16 %v2494
      %v2646 = vunpack.c.l.b16 %v2495
      %v2647 = vunpack.c.l.b16 %v2496
      %v2648 = vunpack.c.l.b16 %v2497
      %v2649 = vunpack.c.l.b16 %v2498
      %v2650 = vunpack.c.l.b16 %v2499
      %v2651 = vunpack.c.l.b16 %v2500
      %v2652 = vunpack.c.l.b16 %v2501
      %v2653 = vunpack.c.l.b16 %v2502
      %v2654 = vunpack.c.l.b16 %v2503
      %v2655 = vunpack.c.l.b16 %v2504
      %v2656 = vunpack.c.l.b16 %v2505
      %v2657 = vunpack.c.l.b16 %v2506
      %v2658 = vunpack.c.l.b16 %v2507
      %v2659 = vunpack.c.l.b16 %v2508
      %v2660 = vunpack.c.l.b16 %v2509
      %v2661 = vunpack.c.l.b16 %v2510
      %v2662 = vunpack.c.l.b16 %v2511
      %v2663 = vunpack.c.l.b16 %v2512
      %v2664 = vunpack.c.l.b16 %v2513
      %v2665 = vunpack.c.l.b16 %v2514
      %v2666 = vunpack.c.l.b16 %v2515
      %v2667 = vunpack.c.l.b16 %v2516
      %v2668 = vunpack.c.l.b16 %v2517
      %v2669 = vunpack.c.l.b16 %v2518
      %v2670 = vunpack.c.l.b16 %v2519
      %v2671 = vunpack.c.l.b16 %v2520
      %v2672 = vunpack.c.l.b16 %v2521
      %v2673 = vunpack.c.l.b16 %v2522
      %v2674 = vunpack.c.l.b16 %v2523
      %v2675 = vunpack.c.l.b16 %v2524
      %v2676 = vunpack.c.l.b16 %v2525
      %v2677 = vunpack.c.l.b16 %v2526
      %v2678 = vunpack.c.l.b16 %v2527
      %v2679 = vunpack.c.l.b16 %v2528
      %v2680 = vunpack.c.l.b16 %v2529
      %v2681 = vunpack.c.l.b16 %v2530
      %v2682 = vunpack.c.l.b16 %v2531
      %v2683 = vunpack.c.l.b16 %v2532
      %v2684 = vunpack.c.l.b16 %v2533
      %v2685 = vunpack.c.l.b16 %v2534
      %v2686 = vunpack.c.l.b16 %v2535
      %v2687 = vunpack.c.l.b16 %v2536
      %v2688 = vunpack.c.l.b16 %v2537
      %v2689 = vunpack.c.l.b16 %v2538
      %v2690 = vunpack.c.l.b16 %v2539
      %v2691 = vunpack.c.l.b16 %v2540
      %v2692 = vunpack.c.l.b16 %v2541
      %v2693 = vunpack.c.l.b16 %v2542
      %v2694 = vunpack.c.l.b16 %v2543
      %v2695 = vunpack.c.l.b16 %v2544
      %v2696 = vunpack.c.l.b16 %v2545
      %v2697 = vunpack.c.l.b16 %v2546
      %v2698 = vpack.c.b16 %v2627, %v2626
      %v2699 = vpack.c.b16 %v2629, %v2628
      %v2700 = vpack.c.b16 %v2631, %v2630
      %v2701 = vpack.c.b16 %v2633, %v2632
      %v2702 = vpack.c.b16 %v2635, %v2634
      %v2703 = vpack.c.b16 %v2637, %v2636
      %v2704 = vpack.c.b16 %v2639, %v2638
      %v2705 = vpack.c.b16 %v2641, %v2640
      %v2706 = vpack.c.b16 %v2643, %v2642
      %v2707 = vpack.c.b16 %v2645, %v2644
      %v2708 = vpack.c.b16 %v2647, %v2646
      %v2709 = vpack.c.b16 %v2649, %v2648
      %v2710 = vpack.c.b16 %v2651, %v2650
      %v2711 = vpack.c.b16 %v2653, %v2652
      %v2712 = vpack.c.b16 %v2655, %v2654
      %v2713 = vpack.c.b16 %v2657, %v2656
      %v2714 = vpack.c.b16 %v2659, %v2658
      %v2715 = vpack.c.b16 %v2661, %v2660
      %v2716 = vpack.c.b16 %v2663, %v2662
      %v2717 = vpack.c.b16 %v2665, %v2664
      %v2718 = vpack.c.b16 %v2667, %v2666
      %v2719 = vpack.c.b16 %v2669, %v2668
      %v2720 = vpack.c.b16 %v2671, %v2670
      %v2721 = vpack.c.b16 %v2673, %v2672
      %v2722 = vpack.c.b16 %v2675, %v2674
      %v2723 = vpack.c.b16 %v2677, %v2676
      %v2724 = vpack.c.b16 %v2679, %v2678
      %v2725 = vpack.c.b16 %v2681, %v2680
      %v2726 = vpack.c.b16 %v2683, %v2682
      %v2727 = vpack.c.b16 %v2685, %v2684
      %v2728 = vpack.c.b16 %v2687, %v2686
      %v2729 = vpack.c.b16 %v2689, %v2688
      %v2730 = vpack.c.b16 %v2691, %v2690
      %v2731 = vpack.c.b16 %v2693, %v2692
      %v2732 = vpack.c.b16 %v2695, %v2694
      %v2733 = vpack.c.b16 %v2697, %v2696
      %v2771 = vsel %vm2233, %v2203, 0
      %v2774 = vsel %vm2233, %v2205, 0
      %v2777 = vsel %vm2233, %v2207, 0
      %v2780 = vsel %vm2233, %v2209, 0
      %v2783 = vsel %vm2233, %v2211, 0
      %v2786 = vsel %vm2233, %v2213, 0
      %v2789 = vsel %vm2233, %v2215, 0
      %v2792 = vsel %vm2233, %v2217, 0
      %v2795 = vsel %vm2233, %v2219, 0
      %v2798 = vsel %vm2233, %v2221, 0
      %v2801 = vsel %vm2233, %v2223, 0
      %v2804 = vsel %vm2233, %v2225, 0
      %v2807 = vsel %vm2233, %v2227, 0
      %v2810 = vsel %vm2233, %v2229, 0
      %v2813 = vsel %vm2233, %v2231, 0
      %v2816 = vsel %vm2233, %v2232, 0
      %2818 = vmatprep.subr.bf16.mxu0 0
      %2819 = vmatpush1.bf16.msra.mxu0 %v2698
      %2820 = vmatprep.subr.bf16.mxu0 0
      %2821 = vmatpush1.bf16.msra.mxu0 %v2699
      %2822 = vmatprep.subr.bf16.mxu0 0
      %2823 = vmatpush1.bf16.msra.mxu0 %v2700
      %2824 = vmatprep.subr.bf16.mxu0 0
      %2825 = vmatpush1.bf16.msra.mxu0 %v2701
      %2826 = vmatprep.subr.bf16.mxu0 0
      %2827 = vmatpush1.bf16.msra.mxu0 %v2702
      %2828 = vmatprep.subr.bf16.mxu0 0
      %2829 = vmatpush1.bf16.msra.mxu0 %v2703
      %2830 = vmatprep.subr.bf16.mxu0 0
      %2831 = vmatpush1.bf16.msra.mxu0 %v2704
      %2832 = vmatprep.subr.bf16.mxu0 0
      %2833 = vmatpush1.bf16.msra.mxu0 %v2705
      %2834 = vmatprep.subr.bf16.mxu0 0
      %2835 = vmatpush1.bf16.msra.mxu0 %v2706
      %2836 = vmatprep.subr.bf16.mxu0 0
      %2837 = vmatpush1.bf16.msra.mxu0 %v2707
      %2838 = vmatprep.subr.bf16.mxu0 0
      %2839 = vmatpush1.bf16.msra.mxu0 %v2708
      %2840 = vmatprep.subr.bf16.mxu0 0
      %2841 = vmatpush1.bf16.msra.mxu0 %v2709
      %2842 = vmatprep.subr.bf16.mxu0 0
      %2843 = vmatpush1.bf16.msra.mxu0 %v2710
      %2844 = vmatprep.subr.bf16.mxu0 0
      %2845 = vmatpush1.bf16.msra.mxu0 %v2711
      %2846 = vmatprep.subr.bf16.mxu0 0
      %2847 = vmatpush1.bf16.msra.mxu0 %v2712
      %2848 = vmatprep.subr.bf16.mxu0 0
      %2849 = vmatpush1.bf16.msra.mxu0 %v2713
      %2850 = vmatprep.mubr.bf16.mxu0 %v2299
      %2851 = vmatmul.mubr.bf16.gmra.mrb[0].mxu0 %v2235
      %v2852 = vpop.f32.mrb[0].mxu0
      %v2853 = vadd.f32 %v2552, %v2852
      %v2854 = vpop.f32.mrb[0].mxu0
      %v2855 = vpop.f32.mrb[0].mxu0
      %v2856 = vadd.f32 %v2552, %v2855
      %v2857 = vpop.f32.mrb[0].mxu0
      %2858 = vmatprep.mubr.bf16.mxu0 %v2303
      %2859 = vmatmul.mubr.bf16.gmra.mrb[0].mxu0 %v2239
      %v2860 = vpop.f32.mrb[0].mxu0
      %v2861 = vadd.f32 %v2552, %v2860
      %v2862 = vpop.f32.mrb[0].mxu0
      %v2863 = vpop.f32.mrb[0].mxu0
      %v2864 = vadd.f32 %v2552, %v2863
      %v2865 = vpop.f32.mrb[0].mxu0
      %2866 = vmatprep.mubr.bf16.mxu0 %v2307
      %2867 = vmatmul.mubr.bf16.gmra.mrb[0].mxu0 %v2243
      %v2868 = vpop.f32.mrb[0].mxu0
      %v2869 = vadd.f32 %v2552, %v2868
      %v2870 = vpop.f32.mrb[0].mxu0
      %v2871 = vpop.f32.mrb[0].mxu0
      %v2872 = vadd.f32 %v2552, %v2871
      %v2873 = vpop.f32.mrb[0].mxu0
      %2874 = vmatprep.mubr.bf16.mxu0 %v2311
      %2875 = vmatmul.mubr.bf16.gmra.mrb[0].mxu0 %v2247
      %v2876 = vpop.f32.mrb[0].mxu0
      %v2877 = vadd.f32 %v2552, %v2876
      %v2878 = vpop.f32.mrb[0].mxu0
      %v2879 = vpop.f32.mrb[0].mxu0
      %v2880 = vadd.f32 %v2552, %v2879
      %v2881 = vpop.f32.mrb[0].mxu0
      %2882 = vmatprep.mubr.bf16.mxu0 %v2315
      %2883 = vmatmul.mubr.bf16.gmra.mrb[0].mxu0 %v2251
      %v2884 = vpop.f32.mrb[0].mxu0
      %v2885 = vadd.f32 %v2552, %v2884
      %v2886 = vpop.f32.mrb[0].mxu0
      %v2887 = vpop.f32.mrb[0].mxu0
      %v2888 = vadd.f32 %v2552, %v2887
      %v2889 = vpop.f32.mrb[0].mxu0
      %2890 = vmatprep.mubr.bf16.mxu0 %v2319
      %2891 = vmatmul.mubr.bf16.gmra.mrb[0].mxu0 %v2255
      %v2892 = vpop.f32.mrb[0].mxu0
      %v2893 = vadd.f32 %v2552, %v2892
      %v2894 = vpop.f32.mrb[0].mxu0
      %v2895 = vpop.f32.mrb[0].mxu0
      %v2896 = vadd.f32 %v2552, %v2895
      %v2897 = vpop.f32.mrb[0].mxu0
      %2898 = vmatprep.mubr.bf16.mxu0 %v2323
      %2899 = vmatmul.mubr.bf16.gmra.mrb[0].mxu0 %v2259
      %v2900 = vpop.f32.mrb[0].mxu0
      %v2901 = vadd.f32 %v2552, %v2900
      %v2902 = vpop.f32.mrb[0].mxu0
      %v2903 = vpop.f32.mrb[0].mxu0
      %v2904 = vadd.f32 %v2552, %v2903
      %v2905 = vpop.f32.mrb[0].mxu0
      %2906 = vmatprep.mubr.bf16.mxu0 %v2327
      %2907 = vmatmul.mubr.bf16.gmra.mrb[0].mxu0 %v2263
      %v2908 = vpop.f32.mrb[0].mxu0
      %v2909 = vadd.f32 %v2552, %v2908
      %v2910 = vpop.f32.mrb[0].mxu0
      %v2911 = vpop.f32.mrb[0].mxu0
      %v2912 = vadd.f32 %v2552, %v2911
      %v2913 = vpop.f32.mrb[0].mxu0
      %2914 = vmatprep.mubr.bf16.mxu0 %v2331
      %2915 = vmatmul.mubr.bf16.gmra.mrb[0].mxu0 %v2267
      %v2916 = vpop.f32.mrb[0].mxu0
      %v2917 = vadd.f32 %v2552, %v2916
      %v2918 = vpop.f32.mrb[0].mxu0
      %v2919 = vpop.f32.mrb[0].mxu0
      %v2920 = vadd.f32 %v2552, %v2919
      %v2921 = vpop.f32.mrb[0].mxu0
      %2922 = vmatprep.mubr.bf16.mxu0 %v2335
      %2923 = vmatmul.mubr.bf16.gmra.mrb[0].mxu0 %v2271
      %v2924 = vpop.f32.mrb[0].mxu0
      %v2925 = vadd.f32 %v2552, %v2924
      %v2926 = vpop.f32.mrb[0].mxu0
      %v2927 = vpop.f32.mrb[0].mxu0
      %v2928 = vadd.f32 %v2552, %v2927
      %v2929 = vpop.f32.mrb[0].mxu0
      %2930 = vmatprep.mubr.bf16.mxu0 %v2339
      %2931 = vmatmul.mubr.bf16.gmra.mrb[0].mxu0 %v2275
      %v2932 = vpop.f32.mrb[0].mxu0
      %v2933 = vadd.f32 %v2552, %v2932
      %v2934 = vpop.f32.mrb[0].mxu0
      %v2935 = vpop.f32.mrb[0].mxu0
      %v2936 = vadd.f32 %v2552, %v2935
      %v2937 = vpop.f32.mrb[0].mxu0
      %2938 = vmatprep.mubr.bf16.mxu0 %v2343
      %2939 = vmatmul.mubr.bf16.gmra.mrb[0].mxu0 %v2279
      %v2940 = vpop.f32.mrb[0].mxu0
      %v2941 = vadd.f32 %v2552, %v2940
      %v2942 = vpop.f32.mrb[0].mxu0
      %v2943 = vpop.f32.mrb[0].mxu0
      %v2944 = vadd.f32 %v2552, %v2943
      %v2945 = vpop.f32.mrb[0].mxu0
      %2946 = vmatprep.mubr.bf16.mxu0 %v2347
      %2947 = vmatmul.mubr.bf16.gmra.mrb[0].mxu0 %v2283
      %v2948 = vpop.f32.mrb[0].mxu0
      %v2949 = vadd.f32 %v2552, %v2948
      %v2950 = vpop.f32.mrb[0].mxu0
      %v2951 = vpop.f32.mrb[0].mxu0
      %v2952 = vadd.f32 %v2552, %v2951
      %v2953 = vpop.f32.mrb[0].mxu0
      %2954 = vmatprep.mubr.bf16.mxu0 %v2351
      %2955 = vmatmul.mubr.bf16.gmra.mrb[0].mxu0 %v2287
      %v2956 = vpop.f32.mrb[0].mxu0
      %v2957 = vadd.f32 %v2552, %v2956
      %v2958 = vpop.f32.mrb[0].mxu0
      %v2959 = vpop.f32.mrb[0].mxu0
      %v2960 = vadd.f32 %v2552, %v2959
      %v2961 = vpop.f32.mrb[0].mxu0
      %2962 = vmatprep.mubr.bf16.mxu0 %v2355
      %2963 = vmatmul.mubr.bf16.gmra.mrb[0].mxu0 %v2291
      %v2964 = vpop.f32.mrb[0].mxu0
      %v2965 = vadd.f32 %v2552, %v2964
      %v2966 = vpop.f32.mrb[0].mxu0
      %v2967 = vpop.f32.mrb[0].mxu0
      %v2968 = vadd.f32 %v2552, %v2967
      %v2969 = vpop.f32.mrb[0].mxu0
      %2970 = vmatprep.mubr.bf16.mxu0 %v2359
      %2971 = vmatmul.mubr.bf16.gmra.mrb[0].mxu0 %v2295
      %v2972 = vpop.f32.mrb[0].mxu0
      %v2973 = vadd.f32 %v2552, %v2972
      %v2974 = vpop.f32.mrb[0].mxu0
      %v2975 = vpop.f32.mrb[0].mxu0
      %v2976 = vadd.f32 %v2552, %v2975
      %v2977 = vpop.f32.mrb[0].mxu0
      %2978 = vdwg.mxu0
      %2979 = vmatprep.subr.bf16.mxu0 0
      %2980 = vmatpush1.bf16.msra.mxu0 %v2714
      %2981 = vmatprep.subr.bf16.mxu0 0
      %2982 = vmatpush1.bf16.msra.mxu0 %v2715
      %2983 = vmatprep.subr.bf16.mxu0 0
      %2984 = vmatpush1.bf16.msra.mxu0 %v2716
      %2985 = vmatprep.subr.bf16.mxu0 0
      %2986 = vmatpush1.bf16.msra.mxu0 %v2717
      %2987 = vmatprep.subr.bf16.mxu0 0
      %2988 = vmatpush1.bf16.msra.mxu0 %v2718
      %2989 = vmatprep.subr.bf16.mxu0 0
      %2990 = vmatpush1.bf16.msra.mxu0 %v2719
      %2991 = vmatprep.subr.bf16.mxu0 0
      %2992 = vmatpush1.bf16.msra.mxu0 %v2720
      %2993 = vmatprep.subr.bf16.mxu0 0
      %2994 = vmatpush1.bf16.msra.mxu0 %v2721
      %2995 = vmatprep.subr.bf16.mxu0 0
      %2996 = vmatpush1.bf16.msra.mxu0 %v2722
      %2997 = vmatprep.subr.bf16.mxu0 0
      %2998 = vmatpush1.bf16.msra.mxu0 %v2723
      %2999 = vmatprep.subr.bf16.mxu0 0
      %3000 = vmatpush1.bf16.msra.mxu0 %v2724
      %3001 = vmatprep.subr.bf16.mxu0 0
      %3002 = vmatpush1.bf16.msra.mxu0 %v2725
      %3003 = vmatprep.subr.bf16.mxu0 0
      %3004 = vmatpush1.bf16.msra.mxu0 %v2726
      %3005 = vmatprep.subr.bf16.mxu0 0
      %3006 = vmatpush1.bf16.msra.mxu0 %v2727
      %3007 = vmatprep.subr.bf16.mxu0 0
      %3008 = vmatpush1.bf16.msra.mxu0 %v2728
      %3009 = vmatprep.subr.bf16.mxu0 0
      %3010 = vmatpush1.bf16.msra.mxu0 %v2729
      %3011 = vmatprep.mubr.bf16.mxu0 %v2426
      %3012 = vmatmul.mubr.bf16.gmra.mrb[0].mxu0 %v2363
      %v3013 = vpop.f32.mrb[0].mxu0
      %v3014 = vadd.f32 %v2853, %v3013
      %v3015 = vpop.f32.mrb[0].mxu0
      %v3016 = vpop.f32.mrb[0].mxu0
      %v3017 = vadd.f32 %v2856, %v3016
      %v3018 = vpop.f32.mrb[0].mxu0
      %3019 = vmatprep.mubr.bf16.mxu0 %v2429
      %3020 = vmatmul.mubr.bf16.gmra.mrb[0].mxu0 %v2367
      %v3021 = vpop.f32.mrb[0].mxu0
      %v3022 = vadd.f32 %v2861, %v3021
      %v3023 = vpop.f32.mrb[0].mxu0
      %v3024 = vpop.f32.mrb[0].mxu0
      %v3025 = vadd.f32 %v2864, %v3024
      %v3026 = vpop.f32.mrb[0].mxu0
      %3027 = vmatprep.mubr.bf16.mxu0 %v2432
      %3028 = vmatmul.mubr.bf16.gmra.mrb[0].mxu0 %v2371
      %v3029 = vpop.f32.mrb[0].mxu0
      %v3030 = vadd.f32 %v2869, %v3029
      %v3031 = vpop.f32.mrb[0].mxu0
      %v3032 = vpop.f32.mrb[0].mxu0
      %v3033 = vadd.f32 %v2872, %v3032
      %v3034 = vpop.f32.mrb[0].mxu0
      %3035 = vmatprep.mubr.bf16.mxu0 %v2435
      %3036 = vmatmul.mubr.bf16.gmra.mrb[0].mxu0 %v2375
      %v3037 = vpop.f32.mrb[0].mxu0
      %v3038 = vadd.f32 %v2877, %v3037
      %v3039 = vpop.f32.mrb[0].mxu0
      %v3040 = vpop.f32.mrb[0].mxu0
      %v3041 = vadd.f32 %v2880, %v3040
      %v3042 = vpop.f32.mrb[0].mxu0
      %3043 = vmatprep.mubr.bf16.mxu0 %v2438
      %3044 = vmatmul.mubr.bf16.gmra.mrb[0].mxu0 %v2379
      %v3045 = vpop.f32.mrb[0].mxu0
      %v3046 = vadd.f32 %v2885, %v3045
      %v3047 = vpop.f32.mrb[0].mxu0
      %v3048 = vpop.f32.mrb[0].mxu0
      %v3049 = vadd.f32 %v2888, %v3048
      %v3050 = vpop.f32.mrb[0].mxu0
      %3051 = vmatprep.mubr.bf16.mxu0 %v2441
      %3052 = vmatmul.mubr.bf16.gmra.mrb[0].mxu0 %v2383
      %v3053 = vpop.f32.mrb[0].mxu0
      %v3054 = vadd.f32 %v2893, %v3053
      %v3055 = vpop.f32.mrb[0].mxu0
      %v3056 = vpop.f32.mrb[0].mxu0
      %v3057 = vadd.f32 %v2896, %v3056
      %v3058 = vpop.f32.mrb[0].mxu0
      %3059 = vmatprep.mubr.bf16.mxu0 %v2444
      %3060 = vmatmul.mubr.bf16.gmra.mrb[0].mxu0 %v2387
      %v3061 = vpop.f32.mrb[0].mxu0
      %v3062 = vadd.f32 %v2901, %v3061
      %v3063 = vpop.f32.mrb[0].mxu0
      %v3064 = vpop.f32.mrb[0].mxu0
      %v3065 = vadd.f32 %v2904, %v3064
      %v3066 = vpop.f32.mrb[0].mxu0
      %3067 = vmatprep.mubr.bf16.mxu0 %v2447
      %3068 = vmatmul.mubr.bf16.gmra.mrb[0].mxu0 %v2391
      %v3069 = vpop.f32.mrb[0].mxu0
      %v3070 = vadd.f32 %v2909, %v3069
      %v3071 = vpop.f32.mrb[0].mxu0
      %v3072 = vpop.f32.mrb[0].mxu0
      %v3073 = vadd.f32 %v2912, %v3072
      %v3074 = vpop.f32.mrb[0].mxu0
      %3075 = vmatprep.mubr.bf16.mxu0 %v2450
      %3076 = vmatmul.mubr.bf16.gmra.mrb[0].mxu0 %v2395
      %v3077 = vpop.f32.mrb[0].mxu0
      %v3078 = vadd.f32 %v2917, %v3077
      %v3079 = vpop.f32.mrb[0].mxu0
      %v3080 = vpop.f32.mrb[0].mxu0
      %v3081 = vadd.f32 %v2920, %v3080
      %v3082 = vpop.f32.mrb[0].mxu0
      %3083 = vmatprep.mubr.bf16.mxu0 %v2453
      %3084 = vmatmul.mubr.bf16.gmra.mrb[0].mxu0 %v2399
      %v3085 = vpop.f32.mrb[0].mxu0
      %v3086 = vadd.f32 %v2925, %v3085
      %v3087 = vpop.f32.mrb[0].mxu0
      %v3088 = vpop.f32.mrb[0].mxu0
      %v3089 = vadd.f32 %v2928, %v3088
      %v3090 = vpop.f32.mrb[0].mxu0
      %3091 = vmatprep.mubr.bf16.mxu0 %v2456
      %3092 = vmatmul.mubr.bf16.gmra.mrb[0].mxu0 %v2403
      %v3093 = vpop.f32.mrb[0].mxu0
      %v3094 = vadd.f32 %v2933, %v3093
      %v3095 = vpop.f32.mrb[0].mxu0
      %v3096 = vpop.f32.mrb[0].mxu0
      %v3097 = vadd.f32 %v2936, %v3096
      %v3098 = vpop.f32.mrb[0].mxu0
      %3099 = vmatprep.mubr.bf16.mxu0 %v2459
      %3100 = vmatmul.mubr.bf16.gmra.mrb[0].mxu0 %v2407
      %v3101 = vpop.f32.mrb[0].mxu0
      %v3102 = vadd.f32 %v2941, %v3101
      %v3103 = vpop.f32.mrb[0].mxu0
      %v3104 = vpop.f32.mrb[0].mxu0
      %v3105 = vadd.f32 %v2944, %v3104
      %v3106 = vpop.f32.mrb[0].mxu0
      %3107 = vmatprep.mubr.bf16.mxu0 %v2462
      %3108 = vmatmul.mubr.bf16.gmra.mrb[0].mxu0 %v2411
      %v3109 = vpop.f32.mrb[0].mxu0
      %v3110 = vadd.f32 %v2949, %v3109
      %v3111 = vpop.f32.mrb[0].mxu0
      %v3112 = vpop.f32.mrb[0].mxu0
      %v3113 = vadd.f32 %v2952, %v3112
      %v3114 = vpop.f32.mrb[0].mxu0
      %3115 = vmatprep.mubr.bf16.mxu0 %v2465
      %3116 = vmatmul.mubr.bf16.gmra.mrb[0].mxu0 %v2415
      %v3117 = vpop.f32.mrb[0].mxu0
      %v3118 = vadd.f32 %v2957, %v3117
      %v3119 = vpop.f32.mrb[0].mxu0
      %v3120 = vpop.f32.mrb[0].mxu0
      %v3121 = vadd.f32 %v2960, %v3120
      %v3122 = vpop.f32.mrb[0].mxu0
      %3123 = vmatprep.mubr.bf16.mxu0 %v2469
      %3124 = vmatmul.mubr.bf16.gmra.mrb[0].mxu0 %v2419
      %v3125 = vpop.f32.mrb[0].mxu0
      %v3126 = vadd.f32 %v2965, %v3125
      %v3127 = vpop.f32.mrb[0].mxu0
      %v3128 = vpop.f32.mrb[0].mxu0
      %v3129 = vadd.f32 %v2968, %v3128
      %v3130 = vpop.f32.mrb[0].mxu0
      %3131 = vmatprep.mubr.bf16.mxu0 %v2473
      %3132 = vmatmul.mubr.bf16.gmra.mrb[0].mxu0 %v2423
      %v3133 = vpop.f32.mrb[0].mxu0
      %v3134 = vadd.f32 %v2973, %v3133
      %v3135 = vpop.f32.mrb[0].mxu0
      %v3136 = vpop.f32.mrb[0].mxu0
      %v3137 = vadd.f32 %v2976, %v3136
      %v3138 = vpop.f32.mrb[0].mxu0
      %3139 = vdwg.mxu0
      %3140 = vmatprep.subr.bf16.mxu0 0
      %3141 = vmatpush1.bf16.msra.mxu0 %v2730
      %3142 = vmatprep.subr.bf16.mxu0 0
      %3143 = vmatpush1.bf16.msra.mxu0 %v2731
      %3144 = vmatprep.subr.bf16.mxu0 0
      %3145 = vmatpush1.bf16.msra.mxu0 %v2732
      %3146 = vmatprep.subr.bf16.mxu0 0
      %3147 = vmatpush1.bf16.msra.mxu0 %v2733
      %3148 = vmatprep.subr.bf16.mxu0 0
      %3149 = vmatpush1.bf16.msra.mxu0 0
      %3150 = vmatprep.subr.bf16.mxu0 0
      %3151 = vmatpush1.bf16.msra.mxu0 0
      %3152 = vmatprep.subr.bf16.mxu0 0
      %3153 = vmatpush1.bf16.msra.mxu0 0
      %3154 = vmatprep.subr.bf16.mxu0 0
      %3155 = vmatpush1.bf16.msra.mxu0 0
      %3156 = vmatprep.subr.bf16.mxu0 0
      %3157 = vmatpush1.bf16.msra.mxu0 0
      %3158 = vmatprep.subr.bf16.mxu0 0
      %3159 = vmatpush1.bf16.msra.mxu0 0
      %3160 = vmatprep.subr.bf16.mxu0 0
      %3161 = vmatpush1.bf16.msra.mxu0 0
      %3162 = vmatprep.subr.bf16.mxu0 0
      %3163 = vmatpush1.bf16.msra.mxu0 0
      %3164 = vmatprep.subr.bf16.mxu0 0
      %3165 = vmatpush1.bf16.msra.mxu0 0
      %3166 = vmatprep.subr.bf16.mxu0 0
      %3167 = vmatpush1.bf16.msra.mxu0 0
      %3168 = vmatprep.subr.bf16.mxu0 0
      %3169 = vmatpush1.bf16.msra.mxu0 0
      %3170 = vmatprep.subr.bf16.mxu0 0
      %3171 = vmatpush1.bf16.msra.mxu0 0
      %3172 = vmatprep.mubr.bf16.mxu0 0
      %3173 = vmatmul.mubr.bf16.gmra.mrb[0].mxu0 %v2771
      %v3174 = vpop.f32.mrb[0].mxu0
      %v3175 = vadd.f32 %v3014, %v3174
      %v3176 = vpop.f32.mrb[0].mxu0
      %v3177 = vpop.f32.mrb[0].mxu0
      %v3178 = vadd.f32 %v3017, %v3177
      %v3179 = vpop.f32.mrb[0].mxu0
      %3180 = vmatprep.mubr.bf16.mxu0 0
      %3181 = vmatmul.mubr.bf16.gmra.mrb[0].mxu0 %v2774
      %v3182 = vpop.f32.mrb[0].mxu0
      %v3183 = vadd.f32 %v3022, %v3182
      %v3184 = vpop.f32.mrb[0].mxu0
      %v3185 = vpop.f32.mrb[0].mxu0
      %v3186 = vadd.f32 %v3025, %v3185
      %v3187 = vpop.f32.mrb[0].mxu0
      %3188 = vmatprep.mubr.bf16.mxu0 0
      %3189 = vmatmul.mubr.bf16.gmra.mrb[0].mxu0 %v2777
      %v3190 = vpop.f32.mrb[0].mxu0
      %v3191 = vadd.f32 %v3030, %v3190
      %v3192 = vpop.f32.mrb[0].mxu0
      %v3193 = vpop.f32.mrb[0].mxu0
      %v3194 = vadd.f32 %v3033, %v3193
      %v3195 = vpop.f32.mrb[0].mxu0
      %3196 = vmatprep.mubr.bf16.mxu0 0
      %3197 = vmatmul.mubr.bf16.gmra.mrb[0].mxu0 %v2780
      %v3198 = vpop.f32.mrb[0].mxu0
      %v3199 = vadd.f32 %v3038, %v3198
      %v3200 = vpop.f32.mrb[0].mxu0
      %v3201 = vpop.f32.mrb[0].mxu0
      %v3202 = vadd.f32 %v3041, %v3201
      %v3203 = vpop.f32.mrb[0].mxu0
      %3204 = vmatprep.mubr.bf16.mxu0 0
      %3205 = vmatmul.mubr.bf16.gmra.mrb[0].mxu0 %v2783
      %v3206 = vpop.f32.mrb[0].mxu0
      %v3207 = vadd.f32 %v3046, %v3206
      %v3208 = vpop.f32.mrb[0].mxu0
      %v3209 = vpop.f32.mrb[0].mxu0
      %v3210 = vadd.f32 %v3049, %v3209
      %v3211 = vpop.f32.mrb[0].mxu0
      %3212 = vmatprep.mubr.bf16.mxu0 0
      %3213 = vmatmul.mubr.bf16.gmra.mrb[0].mxu0 %v2786
      %v3214 = vpop.f32.mrb[0].mxu0
      %v3215 = vadd.f32 %v3054, %v3214
      %v3216 = vpop.f32.mrb[0].mxu0
      %v3217 = vpop.f32.mrb[0].mxu0
      %v3218 = vadd.f32 %v3057, %v3217
      %v3219 = vpop.f32.mrb[0].mxu0
      %3220 = vmatprep.mubr.bf16.mxu0 0
      %3221 = vmatmul.mubr.bf16.gmra.mrb[0].mxu0 %v2789
      %v3222 = vpop.f32.mrb[0].mxu0
      %v3223 = vadd.f32 %v3062, %v3222
      %v3224 = vpop.f32.mrb[0].mxu0
      %v3225 = vpop.f32.mrb[0].mxu0
      %v3226 = vadd.f32 %v3065, %v3225
      %v3227 = vpop.f32.mrb[0].mxu0
      %3228 = vmatprep.mubr.bf16.mxu0 0
      %3229 = vmatmul.mubr.bf16.gmra.mrb[0].mxu0 %v2792
      %v3230 = vpop.f32.mrb[0].mxu0
      %v3231 = vadd.f32 %v3070, %v3230
      %v3232 = vpop.f32.mrb[0].mxu0
      %v3233 = vpop.f32.mrb[0].mxu0
      %v3234 = vadd.f32 %v3073, %v3233
      %v3235 = vpop.f32.mrb[0].mxu0
      %3236 = vmatprep.mubr.bf16.mxu0 0
      %3237 = vmatmul.mubr.bf16.gmra.mrb[0].mxu0 %v2795
      %v3238 = vpop.f32.mrb[0].mxu0
      %v3239 = vadd.f32 %v3078, %v3238
      %v3240 = vpop.f32.mrb[0].mxu0
      %v3241 = vpop.f32.mrb[0].mxu0
      %v3242 = vadd.f32 %v3081, %v3241
      %v3243 = vpop.f32.mrb[0].mxu0
      %3244 = vmatprep.mubr.bf16.mxu0 0
      %3245 = vmatmul.mubr.bf16.gmra.mrb[0].mxu0 %v2798
      %v3246 = vpop.f32.mrb[0].mxu0
      %v3247 = vadd.f32 %v3086, %v3246
      %v3248 = vpop.f32.mrb[0].mxu0
      %v3249 = vpop.f32.mrb[0].mxu0
      %v3250 = vadd.f32 %v3089, %v3249
      %v3251 = vpop.f32.mrb[0].mxu0
      %3252 = vmatprep.mubr.bf16.mxu0 0
      %3253 = vmatmul.mubr.bf16.gmra.mrb[0].mxu0 %v2801
      %v3254 = vpop.f32.mrb[0].mxu0
      %v3255 = vadd.f32 %v3094, %v3254
      %v3256 = vpop.f32.mrb[0].mxu0
      %v3257 = vpop.f32.mrb[0].mxu0
      %v3258 = vadd.f32 %v3097, %v3257
      %v3259 = vpop.f32.mrb[0].mxu0
      %3260 = vmatprep.mubr.bf16.mxu0 0
      %3261 = vmatmul.mubr.bf16.gmra.mrb[0].mxu0 %v2804
      %v3262 = vpop.f32.mrb[0].mxu0
      %v3263 = vadd.f32 %v3102, %v3262
      %v3264 = vpop.f32.mrb[0].mxu0
      %v3265 = vpop.f32.mrb[0].mxu0
      %v3266 = vadd.f32 %v3105, %v3265
      %v3267 = vpop.f32.mrb[0].mxu0
      %3268 = vmatprep.mubr.bf16.mxu0 0
      %3269 = vmatmul.mubr.bf16.gmra.mrb[0].mxu0 %v2807
      %v3270 = vpop.f32.mrb[0].mxu0
      %v3271 = vadd.f32 %v3110, %v3270
      %v3272 = vpop.f32.mrb[0].mxu0
      %v3273 = vpop.f32.mrb[0].mxu0
      %v3274 = vadd.f32 %v3113, %v3273
      %v3275 = vpop.f32.mrb[0].mxu0
      %3276 = vmatprep.mubr.bf16.mxu0 0
      %3277 = vmatmul.mubr.bf16.gmra.mrb[0].mxu0 %v2810
      %v3278 = vpop.f32.mrb[0].mxu0
      %v3279 = vadd.f32 %v3118, %v3278
      %v3280 = vpop.f32.mrb[0].mxu0
      %v3281 = vpop.f32.mrb[0].mxu0
      %v3282 = vadd.f32 %v3121, %v3281
      %v3283 = vpop.f32.mrb[0].mxu0
      %3284 = vmatprep.mubr.bf16.mxu0 0
      %3285 = vmatmul.mubr.bf16.gmra.mrb[0].mxu0 %v2813
      %v3286 = vpop.f32.mrb[0].mxu0
      %v3287 = vadd.f32 %v3126, %v3286
      %v3288 = vpop.f32.mrb[0].mxu0
      %v3289 = vpop.f32.mrb[0].mxu0
      %v3290 = vadd.f32 %v3129, %v3289
      %v3291 = vpop.f32.mrb[0].mxu0
      %3292 = vmatprep.mubr.bf16.mxu0 0
      %3293 = vmatmul.mubr.bf16.gmra.mrb[0].mxu0 %v2816
      %v3294 = vpop.f32.mrb[0].mxu0
      %v3295 = vadd.f32 %v3134, %v3294
      %v3296 = vpop.f32.mrb[0].mxu0
      %v3297 = vpop.f32.mrb[0].mxu0
      %v3298 = vadd.f32 %v3137, %v3297
      %v3299 = vpop.f32.mrb[0].mxu0
      %3300 = vdwg.mxu0
      %v3301 = vmax.f32 %v3175, 0.0
      %v3302 = vmax.f32 %v3178, 0.0
      %v3303 = vmax.f32 %v3183, 0.0
      %v3304 = vmax.f32 %v3186, 0.0
      %v3305 = vmax.f32 %v3191, 0.0
      %v3306 = vmax.f32 %v3194, 0.0
      %v3307 = vmax.f32 %v3199, 0.0
      %v3308 = vmax.f32 %v3202, 0.0
      %v3309 = vmax.f32 %v3207, 0.0
      %v3310 = vmax.f32 %v3210, 0.0
      %v3311 = vmax.f32 %v3215, 0.0
      %v3312 = vmax.f32 %v3218, 0.0
      %v3313 = vmax.f32 %v3223, 0.0
      %v3314 = vmax.f32 %v3226, 0.0
      %v3315 = vmax.f32 %v3231, 0.0
      %v3316 = vmax.f32 %v3234, 0.0
      %v3317 = vmax.f32 %v3239, 0.0
      %v3318 = vmax.f32 %v3242, 0.0
      %v3319 = vmax.f32 %v3247, 0.0
      %v3320 = vmax.f32 %v3250, 0.0
      %v3321 = vmax.f32 %v3255, 0.0
      %v3322 = vmax.f32 %v3258, 0.0
      %v3323 = vmax.f32 %v3263, 0.0
      %v3324 = vmax.f32 %v3266, 0.0
      %v3325 = vmax.f32 %v3271, 0.0
      %v3326 = vmax.f32 %v3274, 0.0
      %v3327 = vmax.f32 %v3279, 0.0
      %v3328 = vmax.f32 %v3282, 0.0
      %v3329 = vmax.f32 %v3287, 0.0
      %v3330 = vmax.f32 %v3290, 0.0
      %v3331 = vmax.f32 %v3295, 0.0
      %v3332 = vmax.f32 %v3298, 0.0
      %v3333 = vpack.c.bf16 %v3302, %v3301
      %v3334 = vpack.c.bf16 %v3304, %v3303
      %v3335 = vpack.c.bf16 %v3306, %v3305
      %v3336 = vpack.c.bf16 %v3308, %v3307
      %v3337 = vpack.c.bf16 %v3310, %v3309
      %v3338 = vpack.c.bf16 %v3312, %v3311
      %v3339 = vpack.c.bf16 %v3314, %v3313
      %v3340 = vpack.c.bf16 %v3316, %v3315
      %v3341 = vpack.c.bf16 %v3318, %v3317
      %v3342 = vpack.c.bf16 %v3320, %v3319
      %v3343 = vpack.c.bf16 %v3322, %v3321
      %v3344 = vpack.c.bf16 %v3324, %v3323
      %v3345 = vpack.c.bf16 %v3326, %v3325
      %v3346 = vpack.c.bf16 %v3328, %v3327
      %v3347 = vpack.c.bf16 %v3330, %v3329
      %v3348 = vpack.c.bf16 %v3332, %v3331
      %v3350 = vshrl.u32 %v3333, 16
      %v3352 = vrot.slane %v3350, 7
      %v3353 = vshll.u32 %v3333, 16
      %v3355 = vor.u32 %v3352, %v3353
      %v3357 = vshrl.u32 %v3334, 16
      %v3359 = vrot.slane %v3357, 7
      %v3360 = vshll.u32 %v3334, 16
      %v3362 = vor.u32 %v3359, %v3360
      %v3363 = vsel %vm1162, %v3352, %v3362
      %v3365 = vshrl.u32 %v3335, 16
      %v3367 = vrot.slane %v3365, 7
      %v3368 = vshll.u32 %v3335, 16
      %v3370 = vor.u32 %v3367, %v3368
      %v3371 = vsel %vm1162, %v3359, %v3370
      %v3373 = vshrl.u32 %v3336, 16
      %v3375 = vrot.slane %v3373, 7
      %v3376 = vshll.u32 %v3336, 16
      %v3378 = vor.u32 %v3375, %v3376
      %v3379 = vsel %vm1162, %v3367, %v3378
      %v3381 = vshrl.u32 %v3337, 16
      %v3383 = vrot.slane %v3381, 7
      %v3384 = vshll.u32 %v3337, 16
      %v3386 = vor.u32 %v3383, %v3384
      %v3387 = vsel %vm1162, %v3375, %v3386
      %v3389 = vshrl.u32 %v3338, 16
      %v3391 = vrot.slane %v3389, 7
      %v3392 = vshll.u32 %v3338, 16
      %v3394 = vor.u32 %v3391, %v3392
      %v3395 = vsel %vm1162, %v3383, %v3394
      %v3397 = vshrl.u32 %v3339, 16
      %v3399 = vrot.slane %v3397, 7
      %v3400 = vshll.u32 %v3339, 16
      %v3402 = vor.u32 %v3399, %v3400
      %v3403 = vsel %vm1162, %v3391, %v3402
      %v3405 = vshrl.u32 %v3340, 16
      %v3407 = vrot.slane %v3405, 7
      %v3408 = vshll.u32 %v3340, 16
      %v3410 = vor.u32 %v3407, %v3408
      %v3411 = vsel %vm1162, %v3399, %v3410
      %v3413 = vshrl.u32 %v3341, 16
      %v3415 = vrot.slane %v3413, 7
      %v3416 = vshll.u32 %v3341, 16
      %v3418 = vor.u32 %v3415, %v3416
      %v3419 = vsel %vm1162, %v3407, %v3418
      %v3421 = vshrl.u32 %v3342, 16
      %v3423 = vrot.slane %v3421, 7
      %v3424 = vshll.u32 %v3342, 16
      %v3426 = vor.u32 %v3423, %v3424
      %v3427 = vsel %vm1162, %v3415, %v3426
      %v3429 = vshrl.u32 %v3343, 16
      %v3431 = vrot.slane %v3429, 7
      %v3432 = vshll.u32 %v3343, 16
      %v3434 = vor.u32 %v3431, %v3432
      %v3435 = vsel %vm1162, %v3423, %v3434
      %v3437 = vshrl.u32 %v3344, 16
      %v3439 = vrot.slane %v3437, 7
      %v3440 = vshll.u32 %v3344, 16
      %v3442 = vor.u32 %v3439, %v3440
      %v3443 = vsel %vm1162, %v3431, %v3442
      %v3445 = vshrl.u32 %v3345, 16
      %v3447 = vrot.slane %v3445, 7
      %v3448 = vshll.u32 %v3345, 16
      %v3450 = vor.u32 %v3447, %v3448
      %v3451 = vsel %vm1162, %v3439, %v3450
      %v3453 = vshrl.u32 %v3346, 16
      %v3455 = vrot.slane %v3453, 7
      %v3456 = vshll.u32 %v3346, 16
      %v3458 = vor.u32 %v3455, %v3456
      %v3459 = vsel %vm1162, %v3447, %v3458
      %v3461 = vshrl.u32 %v3347, 16
      %v3463 = vrot.slane %v3461, 7
      %v3464 = vshll.u32 %v3347, 16
      %v3466 = vor.u32 %v3463, %v3464
      %v3467 = vsel %vm1162, %v3455, %v3466
      %v3469 = vshrl.u32 %v3348, 16
      %v3471 = vrot.slane %v3469, 7
      %v3472 = vshll.u32 %v3348, 16
      %v3474 = vor.u32 %v3471, %v3472
      %v3475 = vsel %vm1162, %v3463, %v3474
      %v3493 = vsel %vm1308, 0, %v3355
      %v3494 = vsel %vm1308, %v3471, 0
      %v3495 = vsel %vm1480, %v3493, 0
      %v3496 = vsel %vm1481, %v3363, 0
      %v3497 = vsel %vm1482, %v3371, 0
      %v3498 = vsel %vm1483, %v3379, 0
      %v3499 = vsel %vm1484, %v3387, 0
      %v3500 = vsel %vm1485, %v3395, 0
      %v3501 = vsel %vm1486, %v3403, 0
      %v3502 = vsel %vm1487, %v3411, 0
      %v3503 = vsel %vm1488, %v3419, 0
      %v3504 = vsel %vm1489, %v3427, 0
      %v3505 = vsel %vm1490, %v3435, 0
      %v3506 = vsel %vm1491, %v3443, 0
      %v3507 = vsel %vm1492, %v3451, 0
      %v3508 = vsel %vm1493, %v3459, 0
      %v3509 = vsel %vm1494, %v3467, 0
      %v3510 = vsel %vm1717, %v3493, 0
      %v3511 = vsel %vm1718, %v3363, 0
      %v3512 = vsel %vm1719, %v3371, 0
      %v3513 = vsel %vm1720, %v3379, 0
      %v3514 = vsel %vm1721, %v3387, 0
      %v3515 = vsel %vm1722, %v3395, 0
      %v3516 = vsel %vm1723, %v3403, 0
      %v3517 = vsel %vm1724, %v3411, 0
      %v3518 = vsel %vm1725, %v3419, 0
      %v3519 = vsel %vm1726, %v3427, 0
      %v3520 = vsel %vm1727, %v3435, 0
      %v3521 = vsel %vm1728, %v3443, 0
      %v3522 = vsel %vm1729, %v3451, 0
      %v3523 = vsel %vm1730, %v3459, 0
      %v3524 = vsel %vm1731, %v3467, 0
      %v3525 = vsel %vm1732, %v3475, 0
      %v3526 = vsel %vm1756, %v3493, 0
      %v3527 = vsel %vm1480, %v3363, 0
      %v3528 = vsel %vm1481, %v3371, 0
      %v3529 = vsel %vm1482, %v3379, 0
      %v3530 = vsel %vm1483, %v3387, 0
      %v3531 = vsel %vm1484, %v3395, 0
      %v3532 = vsel %vm1485, %v3403, 0
      %v3533 = vsel %vm1486, %v3411, 0
      %v3534 = vsel %vm1487, %v3419, 0
      %v3535 = vsel %vm1488, %v3427, 0
      %v3536 = vsel %vm1489, %v3435, 0
      %v3537 = vsel %vm1490, %v3443, 0
      %v3538 = vsel %vm1491, %v3451, 0
      %v3539 = vsel %vm1492, %v3459, 0
      %v3540 = vsel %vm1493, %v3467, 0
      %v3541 = vsel %vm1494, %v3475, 0
      %v3542 = vsel %vm1773, %v3493, 0
      %v3543 = vsel %vm1717, %v3363, 0
      %v3544 = vsel %vm1718, %v3371, 0
      %v3545 = vsel %vm1719, %v3379, 0
      %v3546 = vsel %vm1720, %v3387, 0
      %v3547 = vsel %vm1721, %v3395, 0
      %v3548 = vsel %vm1722, %v3403, 0
      %v3549 = vsel %vm1723, %v3411, 0
      %v3550 = vsel %vm1724, %v3419, 0
      %v3551 = vsel %vm1725, %v3427, 0
      %v3552 = vsel %vm1726, %v3435, 0
      %v3553 = vsel %vm1727, %v3443, 0
      %v3554 = vsel %vm1728, %v3451, 0
      %v3555 = vsel %vm1729, %v3459, 0
      %v3556 = vsel %vm1730, %v3467, 0
      %v3557 = vsel %vm1731, %v3475, 0
      %v3558 = vsel %vm1732, %v3494, 0
      %v3559 = vsel %vm1756, %v3363, 0
      %v3560 = vsel %vm1480, %v3371, 0
      %v3561 = vsel %vm1481, %v3379, 0
      %v3562 = vsel %vm1482, %v3387, 0
      %v3563 = vsel %vm1483, %v3395, 0
      %v3564 = vsel %vm1484, %v3403, 0
      %v3565 = vsel %vm1485, %v3411, 0
      %v3566 = vsel %vm1486, %v3419, 0
      %v3567 = vsel %vm1487, %v3427, 0
      %v3568 = vsel %vm1488, %v3435, 0
      %v3569 = vsel %vm1489, %v3443, 0
      %v3570 = vsel %vm1490, %v3451, 0
      %v3571 = vsel %vm1491, %v3459, 0
      %v3572 = vsel %vm1492, %v3467, 0
      %v3573 = vsel %vm1493, %v3475, 0
      %v3574 = vsel %vm1494, %v3494, 0
      %v3575 = vsel %vm1773, %v3363, 0
      %v3576 = vsel %vm1717, %v3371, 0
      %v3577 = vsel %vm1718, %v3379, 0
      %v3578 = vsel %vm1719, %v3387, 0
      %v3579 = vsel %vm1720, %v3395, 0
      %v3580 = vsel %vm1721, %v3403, 0
      %v3581 = vsel %vm1722, %v3411, 0
      %v3582 = vsel %vm1723, %v3419, 0
      %v3583 = vsel %vm1724, %v3427, 0
      %v3584 = vsel %vm1725, %v3435, 0
      %v3585 = vsel %vm1726, %v3443, 0
      %v3586 = vsel %vm1727, %v3451, 0
      %v3587 = vsel %vm1728, %v3459, 0
      %v3588 = vsel %vm1729, %v3467, 0
      %v3589 = vsel %vm1730, %v3475, 0
      %v3590 = vsel %vm1731, %v3494, 0
      %v3592 = vshll.u32 %v3493, 16
      %v3594 = vrot.slane %v3592, 1
      %v3595 = vsel %vm1823, %v1830, %v3594
      %v3596 = vshrl.u32 %v3493, 16
      %v3598 = vor.u32 %v3596, %v3594
      %v3600 = vshll.u32 %v3363, 16
      %v3602 = vrot.slane %v3600, 1
      %v3603 = vsel %vm1823, %v3598, %v3602
      %v3604 = vshrl.u32 %v3363, 16
      %v3606 = vor.u32 %v3604, %v3602
      %v3608 = vshll.u32 %v3371, 16
      %v3610 = vrot.slane %v3608, 1
      %v3611 = vsel %vm1823, %v3606, %v3610
      %v3612 = vshrl.u32 %v3371, 16
      %v3614 = vor.u32 %v3612, %v3610
      %v3616 = vshll.u32 %v3379, 16
      %v3618 = vrot.slane %v3616, 1
      %v3619 = vsel %vm1823, %v3614, %v3618
      %v3620 = vshrl.u32 %v3379, 16
      %v3622 = vor.u32 %v3620, %v3618
      %v3624 = vshll.u32 %v3387, 16
      %v3626 = vrot.slane %v3624, 1
      %v3627 = vsel %vm1823, %v3622, %v3626
      %v3628 = vshrl.u32 %v3387, 16
      %v3630 = vor.u32 %v3628, %v3626
      %v3632 = vshll.u32 %v3395, 16
      %v3634 = vrot.slane %v3632, 1
      %v3635 = vsel %vm1823, %v3630, %v3634
      %v3636 = vshrl.u32 %v3395, 16
      %v3638 = vor.u32 %v3636, %v3634
      %v3640 = vshll.u32 %v3403, 16
      %v3642 = vrot.slane %v3640, 1
      %v3643 = vsel %vm1823, %v3638, %v3642
      %v3644 = vshrl.u32 %v3403, 16
      %v3646 = vor.u32 %v3644, %v3642
      %v3648 = vshll.u32 %v3411, 16
      %v3650 = vrot.slane %v3648, 1
      %v3651 = vsel %vm1823, %v3646, %v3650
      %v3652 = vshrl.u32 %v3411, 16
      %v3654 = vor.u32 %v3652, %v3650
      %v3656 = vshll.u32 %v3419, 16
      %v3658 = vrot.slane %v3656, 1
      %v3659 = vsel %vm1823, %v3654, %v3658
      %v3660 = vshrl.u32 %v3419, 16
      %v3662 = vor.u32 %v3660, %v3658
      %v3664 = vshll.u32 %v3427, 16
      %v3666 = vrot.slane %v3664, 1
      %v3667 = vsel %vm1823, %v3662, %v3666
      %v3668 = vshrl.u32 %v3427, 16
      %v3670 = vor.u32 %v3668, %v3666
      %v3672 = vshll.u32 %v3435, 16
      %v3674 = vrot.slane %v3672, 1
      %v3675 = vsel %vm1823, %v3670, %v3674
      %v3676 = vshrl.u32 %v3435, 16
      %v3678 = vor.u32 %v3676, %v3674
      %v3680 = vshll.u32 %v3443, 16
      %v3682 = vrot.slane %v3680, 1
      %v3683 = vsel %vm1823, %v3678, %v3682
      %v3684 = vshrl.u32 %v3443, 16
      %v3686 = vor.u32 %v3684, %v3682
      %v3688 = vshll.u32 %v3451, 16
      %v3690 = vrot.slane %v3688, 1
      %v3691 = vsel %vm1823, %v3686, %v3690
      %v3692 = vshrl.u32 %v3451, 16
      %v3694 = vor.u32 %v3692, %v3690
      %v3696 = vshll.u32 %v3459, 16
      %v3698 = vrot.slane %v3696, 1
      %v3699 = vsel %vm1823, %v3694, %v3698
      %v3700 = vshrl.u32 %v3459, 16
      %v3702 = vor.u32 %v3700, %v3698
      %v3704 = vshll.u32 %v3467, 16
      %v3706 = vrot.slane %v3704, 1
      %v3707 = vsel %vm1823, %v3702, %v3706
      %v3708 = vshrl.u32 %v3467, 16
      %v3710 = vor.u32 %v3708, %v3706
      %v3712 = vshll.u32 %v3475, 16
      %v3714 = vrot.slane %v3712, 1
      %v3715 = vsel %vm1823, %v3710, %v3714
      %v3748 = vrot.slane %v3510, 1
      %v3749 = vsel %vm2005, %v2006, %v3748
      %v3750 = vrot.slane %v3511, 1
      %v3751 = vsel %vm2005, %v3748, %v3750
      %v3752 = vrot.slane %v3512, 1
      %v3753 = vsel %vm2005, %v3750, %v3752
      %v3754 = vrot.slane %v3513, 1
      %v3755 = vsel %vm2005, %v3752, %v3754
      %v3756 = vrot.slane %v3514, 1
      %v3757 = vsel %vm2005, %v3754, %v3756
      %v3758 = vrot.slane %v3515, 1
      %v3759 = vsel %vm2005, %v3756, %v3758
      %v3760 = vrot.slane %v3516, 1
      %v3761 = vsel %vm2005, %v3758, %v3760
      %v3762 = vrot.slane %v3517, 1
      %v3763 = vsel %vm2005, %v3760, %v3762
      %v3764 = vrot.slane %v3518, 1
      %v3765 = vsel %vm2005, %v3762, %v3764
      %v3766 = vrot.slane %v3519, 1
      %v3767 = vsel %vm2005, %v3764, %v3766
      %v3768 = vrot.slane %v3520, 1
      %v3769 = vsel %vm2005, %v3766, %v3768
      %v3770 = vrot.slane %v3521, 1
      %v3771 = vsel %vm2005, %v3768, %v3770
      %v3772 = vrot.slane %v3522, 1
      %v3773 = vsel %vm2005, %v3770, %v3772
      %v3774 = vrot.slane %v3523, 1
      %v3775 = vsel %vm2005, %v3772, %v3774
      %v3776 = vrot.slane %v3524, 1
      %v3777 = vsel %vm2005, %v3774, %v3776
      %v3778 = vrot.slane %v3525, 1
      %v3779 = vsel %vm2005, %v3776, %v3778
      %v3796 = vshrl.u32 %v3475, 16
      %v3798 = vor.u32 %v3796, %v3714
      %v3800 = vshll.u32 %v3494, 16
      %v3802 = vrot.slane %v3800, 1
      %v3803 = vsel %vm1823, %v3798, %v3802
      %v3822 = vrot.slane %v3542, 1
      %v3823 = vrot.slane %v3543, 1
      %v3824 = vsel %vm2005, %v3822, %v3823
      %v3825 = vrot.slane %v3544, 1
      %v3826 = vsel %vm2005, %v3823, %v3825
      %v3827 = vrot.slane %v3545, 1
      %v3828 = vsel %vm2005, %v3825, %v3827
      %v3829 = vrot.slane %v3546, 1
      %v3830 = vsel %vm2005, %v3827, %v3829
      %v3831 = vrot.slane %v3547, 1
      %v3832 = vsel %vm2005, %v3829, %v3831
      %v3833 = vrot.slane %v3548, 1
      %v3834 = vsel %vm2005, %v3831, %v3833
      %v3835 = vrot.slane %v3549, 1
      %v3836 = vsel %vm2005, %v3833, %v3835
      %v3837 = vrot.slane %v3550, 1
      %v3838 = vsel %vm2005, %v3835, %v3837
      %v3839 = vrot.slane %v3551, 1
      %v3840 = vsel %vm2005, %v3837, %v3839
      %v3841 = vrot.slane %v3552, 1
      %v3842 = vsel %vm2005, %v3839, %v3841
      %v3843 = vrot.slane %v3553, 1
      %v3844 = vsel %vm2005, %v3841, %v3843
      %v3845 = vrot.slane %v3554, 1
      %v3846 = vsel %vm2005, %v3843, %v3845
      %v3847 = vrot.slane %v3555, 1
      %v3848 = vsel %vm2005, %v3845, %v3847
      %v3849 = vrot.slane %v3556, 1
      %v3850 = vsel %vm2005, %v3847, %v3849
      %v3851 = vrot.slane %v3557, 1
      %v3852 = vsel %vm2005, %v3849, %v3851
      %v3853 = vrot.slane %v3558, 1
      %v3854 = vsel %vm2005, %v3851, %v3853
      %v3871 = vshrl.u32 %v3494, 16
      %v3873 = vor.u32 %v3871, %v3802
      %v3874 = vsel %vm1823, %v3873, %v1829
      %v3892 = vrot.slane %v3575, 1
      %v3893 = vrot.slane %v3576, 1
      %v3894 = vsel %vm2005, %v3892, %v3893
      %v3895 = vrot.slane %v3577, 1
      %v3896 = vsel %vm2005, %v3893, %v3895
      %v3897 = vrot.slane %v3578, 1
      %v3898 = vsel %vm2005, %v3895, %v3897
      %v3899 = vrot.slane %v3579, 1
      %v3900 = vsel %vm2005, %v3897, %v3899
      %v3901 = vrot.slane %v3580, 1
      %v3902 = vsel %vm2005, %v3899, %v3901
      %v3903 = vrot.slane %v3581, 1
      %v3904 = vsel %vm2005, %v3901, %v3903
      %v3905 = vrot.slane %v3582, 1
      %v3906 = vsel %vm2005, %v3903, %v3905
      %v3907 = vrot.slane %v3583, 1
      %v3908 = vsel %vm2005, %v3905, %v3907
      %v3909 = vrot.slane %v3584, 1
      %v3910 = vsel %vm2005, %v3907, %v3909
      %v3911 = vrot.slane %v3585, 1
      %v3912 = vsel %vm2005, %v3909, %v3911
      %v3913 = vrot.slane %v3586, 1
      %v3914 = vsel %vm2005, %v3911, %v3913
      %v3915 = vrot.slane %v3587, 1
      %v3916 = vsel %vm2005, %v3913, %v3915
      %v3917 = vrot.slane %v3588, 1
      %v3918 = vsel %vm2005, %v3915, %v3917
      %v3919 = vrot.slane %v3589, 1
      %v3920 = vsel %vm2005, %v3917, %v3919
      %v3921 = vrot.slane %v3590, 1
      %v3922 = vsel %vm2005, %v3919, %v3921
      %v3923 = vsel %vm2005, %v3921, %v2006
      %v3940 = vld [vmem:[%s5] sm:$0xf]
      %v3941 = vld [vmem:[%s5 + $0x4] sm:$0xf]
      %v3942 = vld [vmem:[%s5 + $0x8] sm:$0xf]
      %v3943 = vld [vmem:[%s5 + $0xc] sm:$0xf]
      %v3944 = vld [vmem:[%s5 + $0x10] sm:$0xf]
      %v3945 = vld [vmem:[%s5 + $0x14] sm:$0xf]
      %v3946 = vld [vmem:[%s5 + $0x18] sm:$0xf]
      %v3947 = vld [vmem:[%s5 + $0x1c] sm:$0xf]
      %v3948 = vld [vmem:[%s5 + $0x20] sm:$0xf]
      %v3949 = vld [vmem:[%s5 + $0x24] sm:$0xf]
      %v3950 = vld [vmem:[%s5 + $0x28] sm:$0xf]
      %v3951 = vld [vmem:[%s5 + $0x2c] sm:$0xf]
      %v3952 = vld [vmem:[%s5 + $0x30] sm:$0xf]
      %v3953 = vld [vmem:[%s5 + $0x34] sm:$0xf]
      %v3954 = vld [vmem:[%s5 + $0x38] sm:$0xf]
      %v3955 = vld [vmem:[%s5 + $0x3c] sm:$0xf]
      %v3956 = vld [vmem:[%s5 + $0x40] sm:$0xf]
      %v3957 = vld [vmem:[%s5 + $0x44] sm:$0xf]
      %v3958 = vld [vmem:[%s5 + $0x48] sm:$0xf]
      %v3959 = vld [vmem:[%s5 + $0x4c] sm:$0xf]
      %v3960 = vld [vmem:[%s5 + $0x50] sm:$0xf]
      %v3961 = vld [vmem:[%s5 + $0x54] sm:$0xf]
      %v3962 = vld [vmem:[%s5 + $0x58] sm:$0xf]
      %v3963 = vld [vmem:[%s5 + $0x5c] sm:$0xf]
      %v3964 = vld [vmem:[%s5 + $0x60] sm:$0xf]
      %v3965 = vld [vmem:[%s5 + $0x64] sm:$0xf]
      %v3966 = vld [vmem:[%s5 + $0x68] sm:$0xf]
      %v3967 = vld [vmem:[%s5 + $0x6c] sm:$0xf]
      %v3968 = vld [vmem:[%s5 + $0x70] sm:$0xf]
      %v3969 = vld [vmem:[%s5 + $0x74] sm:$0xf]
      %v3970 = vld [vmem:[%s5 + $0x78] sm:$0xf]
      %v3971 = vld [vmem:[%s5 + $0x7c] sm:$0xf]
      %v3972 = vld [vmem:[%s5 + $0x80] sm:$0xf]
      %v3973 = vld [vmem:[%s5 + $0x84] sm:$0xf]
      %v3974 = vld [vmem:[%s5 + $0x88] sm:$0xf]
      %v3975 = vld [vmem:[%s5 + $0x8c] sm:$0xf]
      %v3976 = vld [vmem:[%s5 + $0x90] sm:$0xf]
      %v3977 = vld [vmem:[%s5 + $0x94] sm:$0xf]
      %v3978 = vld [vmem:[%s5 + $0x98] sm:$0xf]
      %v3979 = vld [vmem:[%s5 + $0x9c] sm:$0xf]
      %v3980 = vld [vmem:[%s5 + $0xa0] sm:$0xf]
      %v3981 = vld [vmem:[%s5 + $0xa4] sm:$0xf]
      %v3982 = vld [vmem:[%s5 + $0xa8] sm:$0xf]
      %v3983 = vld [vmem:[%s5 + $0xac] sm:$0xf]
      %v3984 = vld [vmem:[%s5 + $0xb0] sm:$0xf]
      %v3985 = vld [vmem:[%s5 + $0xb4] sm:$0xf]
      %v3986 = vld [vmem:[%s5 + $0xb8] sm:$0xf]
      %v3987 = vld [vmem:[%s5 + $0xbc] sm:$0xf]
      %v3988 = vld [vmem:[%s5 + $0xc0] sm:$0xf]
      %v3989 = vld [vmem:[%s5 + $0xc4] sm:$0xf]
      %v3990 = vld [vmem:[%s5 + $0xc8] sm:$0xf]
      %v3991 = vld [vmem:[%s5 + $0xcc] sm:$0xf]
      %v3992 = vld [vmem:[%s5 + $0xd0] sm:$0xf]
      %v3993 = vld [vmem:[%s5 + $0xd4] sm:$0xf]
      %v3994 = vld [vmem:[%s5 + $0xd8] sm:$0xf]
      %v3995 = vld [vmem:[%s5 + $0xdc] sm:$0xf]
      %v3996 = vld [vmem:[%s5 + $0xe0] sm:$0xf]
      %v3997 = vld [vmem:[%s5 + $0xe4] sm:$0xf]
      %v3998 = vld [vmem:[%s5 + $0xe8] sm:$0xf]
      %v3999 = vld [vmem:[%s5 + $0xec] sm:$0xf]
      %v4000 = vld [vmem:[%s5 + $0xf0] sm:$0xf]
      %v4001 = vld [vmem:[%s5 + $0xf4] sm:$0xf]
      %v4002 = vld [vmem:[%s5 + $0xf8] sm:$0xf]
      %v4003 = vld [vmem:[%s5 + $0xfc] sm:$0xf]
      %v4004 = vld [vmem:[%s5 + $0x100] sm:$0xf]
      %v4005 = vld [vmem:[%s5 + $0x104] sm:$0xf]
      %v4006 = vld [vmem:[%s5 + $0x108] sm:$0xf]
      %v4007 = vld [vmem:[%s5 + $0x10c] sm:$0xf]
      %v4008 = vld [vmem:[%s5 + $0x110] sm:$0xf]
      %v4009 = vld [vmem:[%s5 + $0x114] sm:$0xf]
      %v4010 = vld [vmem:[%s5 + $0x118] sm:$0xf]
      %v4011 = vld [vmem:[%s5 + $0x11c] sm:$0xf]
      %v4012 = vld [vmem:[%s5 + $0x120] sm:$0xf]
      %v4013 = vld [vmem:[%s5 + $0x124] sm:$0xf]
      %v4014 = vld [vmem:[%s5 + $0x128] sm:$0xf]
      %v4015 = vld [vmem:[%s5 + $0x12c] sm:$0xf]
      %v4016 = vld [vmem:[%s5 + $0x130] sm:$0xf]
      %v4017 = vld [vmem:[%s5 + $0x134] sm:$0xf]
      %v4018 = vld [vmem:[%s5 + $0x138] sm:$0xf]
      %v4019 = vld [vmem:[%s5 + $0x13c] sm:$0xf]
      %v4020 = vld [vmem:[%s5 + $0x140] sm:$0xf]
      %v4021 = vld [vmem:[%s5 + $0x144] sm:$0xf]
      %v4022 = vld [vmem:[%s5 + $0x148] sm:$0xf]
      %v4023 = vld [vmem:[%s5 + $0x14c] sm:$0xf]
      %v4024 = vld [vmem:[%s5 + $0x150] sm:$0xf]
      %v4025 = vld [vmem:[%s5 + $0x154] sm:$0xf]
      %v4026 = vld [vmem:[%s5 + $0x158] sm:$0xf]
      %v4027 = vld [vmem:[%s5 + $0x15c] sm:$0xf]
      %v4028 = vld [vmem:[%s5 + $0x160] sm:$0xf]
      %v4029 = vld [vmem:[%s5 + $0x164] sm:$0xf]
      %v4030 = vld [vmem:[%s5 + $0x168] sm:$0xf]
      %v4031 = vld [vmem:[%s5 + $0x16c] sm:$0xf]
      %v4032 = vld [vmem:[%s5 + $0x170] sm:$0xf]
      %v4033 = vld [vmem:[%s5 + $0x174] sm:$0xf]
      %v4034 = vld [vmem:[%s5 + $0x178] sm:$0xf]
      %v4035 = vld [vmem:[%s5 + $0x17c] sm:$0xf]
      %v4036 = vld [vmem:[%s5 + $0x180] sm:$0xf]
      %v4037 = vld [vmem:[%s5 + $0x184] sm:$0xf]
      %v4038 = vld [vmem:[%s5 + $0x188] sm:$0xf]
      %v4039 = vld [vmem:[%s5 + $0x18c] sm:$0xf]
      %v4040 = vld [vmem:[%s5 + $0x190] sm:$0xf]
      %v4041 = vld [vmem:[%s5 + $0x194] sm:$0xf]
      %v4042 = vld [vmem:[%s5 + $0x198] sm:$0xf]
      %v4043 = vld [vmem:[%s5 + $0x19c] sm:$0xf]
      %v4044 = vld [vmem:[%s5 + $0x1a0] sm:$0xf]
      %v4045 = vld [vmem:[%s5 + $0x1a4] sm:$0xf]
      %v4046 = vld [vmem:[%s5 + $0x1a8] sm:$0xf]
      %v4047 = vld [vmem:[%s5 + $0x1ac] sm:$0xf]
      %v4048 = vld [vmem:[%s5 + $0x1b0] sm:$0xf]
      %v4049 = vld [vmem:[%s5 + $0x1b4] sm:$0xf]
      %v4050 = vld [vmem:[%s5 + $0x1b8] sm:$0xf]
      %v4051 = vld [vmem:[%s5 + $0x1bc] sm:$0xf]
      %v4052 = vld [vmem:[%s5 + $0x1c0] sm:$0xf]
      %v4053 = vld [vmem:[%s5 + $0x1c4] sm:$0xf]
      %v4054 = vld [vmem:[%s5 + $0x1c8] sm:$0xf]
      %v4055 = vld [vmem:[%s5 + $0x1cc] sm:$0xf]
      %v4056 = vld [vmem:[%s5 + $0x1d0] sm:$0xf]
      %v4057 = vld [vmem:[%s5 + $0x1d4] sm:$0xf]
      %v4058 = vld [vmem:[%s5 + $0x1d8] sm:$0xf]
      %v4059 = vld [vmem:[%s5 + $0x1dc] sm:$0xf]
      %v4060 = vld [vmem:[%s5 + $0x1e0] sm:$0xf]
      %v4061 = vld [vmem:[%s5 + $0x1e4] sm:$0xf]
      %v4062 = vld [vmem:[%s5 + $0x1e8] sm:$0xf]
      %v4063 = vld [vmem:[%s5 + $0x1ec] sm:$0xf]
      %v4064 = vld [vmem:[%s5 + $0x1f0] sm:$0xf]
      %v4065 = vld [vmem:[%s5 + $0x1f4] sm:$0xf]
      %v4066 = vld [vmem:[%s5 + $0x1f8] sm:$0xf]
      %v4067 = vld [vmem:[%s5 + $0x1fc] sm:$0xf]
      %v4068 = vld [vmem:[%s5 + $0x200] sm:$0xf]
      %v4069 = vld [vmem:[%s5 + $0x204] sm:$0xf]
      %v4070 = vld [vmem:[%s5 + $0x208] sm:$0xf]
      %v4071 = vld [vmem:[%s5 + $0x20c] sm:$0xf]
      %v4072 = vld [vmem:[%s5 + $0x210] sm:$0xf]
      %v4073 = vld [vmem:[%s5 + $0x214] sm:$0xf]
      %v4074 = vld [vmem:[%s5 + $0x218] sm:$0xf]
      %v4075 = vld [vmem:[%s5 + $0x21c] sm:$0xf]
      %v4076 = vld [vmem:[%s5 + $0x220] sm:$0xf]
      %v4077 = vld [vmem:[%s5 + $0x224] sm:$0xf]
      %v4078 = vld [vmem:[%s5 + $0x228] sm:$0xf]
      %v4079 = vld [vmem:[%s5 + $0x22c] sm:$0xf]
      %v4080 = vld [vmem:[%s5 + $0x230] sm:$0xf]
      %v4081 = vld [vmem:[%s5 + $0x234] sm:$0xf]
      %v4082 = vld [vmem:[%s5 + $0x238] sm:$0xf]
      %v4083 = vld [vmem:[%s5 + $0x23c] sm:$0xf]
      %v4084 = vld [vmem:[%s6] sm:$0x1]
      %v4086 = vlaneseq
      %v4087 = vshrl.u32 %v4086, 7
      %v4088 = vsub.s32 0, %v4087
      %v4089 = vrot.slane %v4084, %v4088
      %v4235 = vunpack.c.l.b16 %v3940
      %v4236 = vunpack.c.l.b16 %v3941
      %v4237 = vunpack.c.l.b16 %v3942
      %v4238 = vunpack.c.l.b16 %v3943
      %v4239 = vunpack.c.l.b16 %v3944
      %v4240 = vunpack.c.l.b16 %v3945
      %v4241 = vunpack.c.l.b16 %v3946
      %v4242 = vunpack.c.l.b16 %v3947
      %v4243 = vunpack.c.l.b16 %v3948
      %v4244 = vunpack.c.l.b16 %v3949
      %v4245 = vunpack.c.l.b16 %v3950
      %v4246 = vunpack.c.l.b16 %v3951
      %v4247 = vunpack.c.l.b16 %v3952
      %v4248 = vunpack.c.l.b16 %v3953
      %v4249 = vunpack.c.l.b16 %v3954
      %v4250 = vunpack.c.l.b16 %v3955
      %v4251 = vunpack.c.l.b16 %v3956
      %v4252 = vunpack.c.l.b16 %v3957
      %v4253 = vunpack.c.l.b16 %v3958
      %v4254 = vunpack.c.l.b16 %v3959
      %v4255 = vunpack.c.l.b16 %v3960
      %v4256 = vunpack.c.l.b16 %v3961
      %v4257 = vunpack.c.l.b16 %v3962
      %v4258 = vunpack.c.l.b16 %v3963
      %v4259 = vunpack.c.l.b16 %v3964
      %v4260 = vunpack.c.l.b16 %v3965
      %v4261 = vunpack.c.l.b16 %v3966
      %v4262 = vunpack.c.l.b16 %v3967
      %v4263 = vunpack.c.l.b16 %v3968
      %v4264 = vunpack.c.l.b16 %v3969
      %v4265 = vunpack.c.l.b16 %v3970
      %v4266 = vunpack.c.l.b16 %v3971
      %v4267 = vunpack.c.l.b16 %v3972
      %v4268 = vunpack.c.l.b16 %v3973
      %v4269 = vunpack.c.l.b16 %v3974
      %v4270 = vunpack.c.l.b16 %v3975
      %v4271 = vunpack.c.l.b16 %v3976
      %v4272 = vunpack.c.l.b16 %v3977
      %v4273 = vunpack.c.l.b16 %v3978
      %v4274 = vunpack.c.l.b16 %v3979
      %v4275 = vunpack.c.l.b16 %v3980
      %v4276 = vunpack.c.l.b16 %v3981
      %v4277 = vunpack.c.l.b16 %v3982
      %v4278 = vunpack.c.l.b16 %v3983
      %v4279 = vunpack.c.l.b16 %v3984
      %v4280 = vunpack.c.l.b16 %v3985
      %v4281 = vunpack.c.l.b16 %v3986
      %v4282 = vunpack.c.l.b16 %v3987
      %v4283 = vunpack.c.l.b16 %v3988
      %v4284 = vunpack.c.l.b16 %v3989
      %v4285 = vunpack.c.l.b16 %v3990
      %v4286 = vunpack.c.l.b16 %v3991
      %v4287 = vunpack.c.l.b16 %v3992
      %v4288 = vunpack.c.l.b16 %v3993
      %v4289 = vunpack.c.l.b16 %v3994
      %v4290 = vunpack.c.l.b16 %v3995
      %v4291 = vunpack.c.l.b16 %v3996
      %v4292 = vunpack.c.l.b16 %v3997
      %v4293 = vunpack.c.l.b16 %v3998
      %v4294 = vunpack.c.l.b16 %v3999
      %v4295 = vunpack.c.l.b16 %v4000
      %v4296 = vunpack.c.l.b16 %v4001
      %v4297 = vunpack.c.l.b16 %v4002
      %v4298 = vunpack.c.l.b16 %v4003
      %v4299 = vunpack.c.l.b16 %v4004
      %v4300 = vunpack.c.l.b16 %v4005
      %v4301 = vunpack.c.l.b16 %v4006
      %v4302 = vunpack.c.l.b16 %v4007
      %v4303 = vunpack.c.l.b16 %v4008
      %v4304 = vunpack.c.l.b16 %v4009
      %v4305 = vunpack.c.l.b16 %v4010
      %v4306 = vunpack.c.l.b16 %v4011
      %v4307 = vunpack.c.l.b16 %v4012
      %v4308 = vunpack.c.l.b16 %v4013
      %v4309 = vunpack.c.l.b16 %v4014
      %v4310 = vunpack.c.l.b16 %v4015
      %v4311 = vunpack.c.l.b16 %v4016
      %v4312 = vunpack.c.l.b16 %v4017
      %v4313 = vunpack.c.l.b16 %v4018
      %v4314 = vunpack.c.l.b16 %v4019
      %v4315 = vunpack.c.l.b16 %v4020
      %v4316 = vunpack.c.l.b16 %v4021
      %v4317 = vunpack.c.l.b16 %v4022
      %v4318 = vunpack.c.l.b16 %v4023
      %v4319 = vunpack.c.l.b16 %v4024
      %v4320 = vunpack.c.l.b16 %v4025
      %v4321 = vunpack.c.l.b16 %v4026
      %v4322 = vunpack.c.l.b16 %v4027
      %v4323 = vunpack.c.l.b16 %v4028
      %v4324 = vunpack.c.l.b16 %v4029
      %v4325 = vunpack.c.l.b16 %v4030
      %v4326 = vunpack.c.l.b16 %v4031
      %v4327 = vunpack.c.l.b16 %v4032
      %v4328 = vunpack.c.l.b16 %v4033
      %v4329 = vunpack.c.l.b16 %v4034
      %v4330 = vunpack.c.l.b16 %v4035
      %v4331 = vunpack.c.l.b16 %v4036
      %v4332 = vunpack.c.l.b16 %v4037
      %v4333 = vunpack.c.l.b16 %v4038
      %v4334 = vunpack.c.l.b16 %v4039
      %v4335 = vunpack.c.l.b16 %v4040
      %v4336 = vunpack.c.l.b16 %v4041
      %v4337 = vunpack.c.l.b16 %v4042
      %v4338 = vunpack.c.l.b16 %v4043
      %v4339 = vunpack.c.l.b16 %v4044
      %v4340 = vunpack.c.l.b16 %v4045
      %v4341 = vunpack.c.l.b16 %v4046
      %v4342 = vunpack.c.l.b16 %v4047
      %v4343 = vunpack.c.l.b16 %v4048
      %v4344 = vunpack.c.l.b16 %v4049
      %v4345 = vunpack.c.l.b16 %v4050
      %v4346 = vunpack.c.l.b16 %v4051
      %v4347 = vunpack.c.l.b16 %v4052
      %v4348 = vunpack.c.l.b16 %v4053
      %v4349 = vunpack.c.l.b16 %v4054
      %v4350 = vunpack.c.l.b16 %v4055
      %v4351 = vunpack.c.l.b16 %v4056
      %v4352 = vunpack.c.l.b16 %v4057
      %v4353 = vunpack.c.l.b16 %v4058
      %v4354 = vunpack.c.l.b16 %v4059
      %v4355 = vunpack.c.l.b16 %v4060
      %v4356 = vunpack.c.l.b16 %v4061
      %v4357 = vunpack.c.l.b16 %v4062
      %v4358 = vunpack.c.l.b16 %v4063
      %v4359 = vunpack.c.l.b16 %v4064
      %v4360 = vunpack.c.l.b16 %v4065
      %v4361 = vunpack.c.l.b16 %v4066
      %v4362 = vunpack.c.l.b16 %v4067
      %v4363 = vunpack.c.l.b16 %v4068
      %v4364 = vunpack.c.l.b16 %v4069
      %v4365 = vunpack.c.l.b16 %v4070
      %v4366 = vunpack.c.l.b16 %v4071
      %v4367 = vunpack.c.l.b16 %v4072
      %v4368 = vunpack.c.l.b16 %v4073
      %v4369 = vunpack.c.l.b16 %v4074
      %v4370 = vunpack.c.l.b16 %v4075
      %v4371 = vunpack.c.l.b16 %v4076
      %v4372 = vunpack.c.l.b16 %v4077
      %v4373 = vunpack.c.l.b16 %v4078
      %v4374 = vunpack.c.l.b16 %v4079
      %v4375 = vunpack.c.l.b16 %v4080
      %v4376 = vunpack.c.l.b16 %v4081
      %v4377 = vunpack.c.l.b16 %v4082
      %v4378 = vunpack.c.l.b16 %v4083
      %v4379 = vpack.c.b16 %v4236, %v4235
      %v4380 = vpack.c.b16 %v4238, %v4237
      %v4381 = vpack.c.b16 %v4240, %v4239
      %v4382 = vpack.c.b16 %v4242, %v4241
      %v4383 = vpack.c.b16 %v4244, %v4243
      %v4384 = vpack.c.b16 %v4246, %v4245
      %v4385 = vpack.c.b16 %v4248, %v4247
      %v4386 = vpack.c.b16 %v4250, %v4249
      %v4387 = vpack.c.b16 %v4252, %v4251
      %v4388 = vpack.c.b16 %v4254, %v4253
      %v4389 = vpack.c.b16 %v4256, %v4255
      %v4390 = vpack.c.b16 %v4258, %v4257
      %v4391 = vpack.c.b16 %v4260, %v4259
      %v4392 = vpack.c.b16 %v4262, %v4261
      %v4393 = vpack.c.b16 %v4264, %v4263
      %v4394 = vpack.c.b16 %v4266, %v4265
      %v4395 = vpack.c.b16 %v4268, %v4267
      %v4396 = vpack.c.b16 %v4270, %v4269
      %v4397 = vpack.c.b16 %v4272, %v4271
      %v4398 = vpack.c.b16 %v4274, %v4273
      %v4399 = vpack.c.b16 %v4276, %v4275
      %v4400 = vpack.c.b16 %v4278, %v4277
      %v4401 = vpack.c.b16 %v4280, %v4279
      %v4402 = vpack.c.b16 %v4282, %v4281
      %v4403 = vpack.c.b16 %v4284, %v4283
      %v4404 = vpack.c.b16 %v4286, %v4285
      %v4405 = vpack.c.b16 %v4288, %v4287
      %v4406 = vpack.c.b16 %v4290, %v4289
      %v4407 = vpack.c.b16 %v4292, %v4291
      %v4408 = vpack.c.b16 %v4294, %v4293
      %v4409 = vpack.c.b16 %v4296, %v4295
      %v4410 = vpack.c.b16 %v4298, %v4297
      %v4411 = vpack.c.b16 %v4300, %v4299
      %v4412 = vpack.c.b16 %v4302, %v4301
      %v4413 = vpack.c.b16 %v4304, %v4303
      %v4414 = vpack.c.b16 %v4306, %v4305
      %v4415 = vpack.c.b16 %v4308, %v4307
      %v4416 = vpack.c.b16 %v4310, %v4309
      %v4417 = vpack.c.b16 %v4312, %v4311
      %v4418 = vpack.c.b16 %v4314, %v4313
      %v4419 = vpack.c.b16 %v4316, %v4315
      %v4420 = vpack.c.b16 %v4318, %v4317
      %v4421 = vpack.c.b16 %v4320, %v4319
      %v4422 = vpack.c.b16 %v4322, %v4321
      %v4423 = vpack.c.b16 %v4324, %v4323
      %v4424 = vpack.c.b16 %v4326, %v4325
      %v4425 = vpack.c.b16 %v4328, %v4327
      %v4426 = vpack.c.b16 %v4330, %v4329
      %v4427 = vpack.c.b16 %v4332, %v4331
      %v4428 = vpack.c.b16 %v4334, %v4333
      %v4429 = vpack.c.b16 %v4336, %v4335
      %v4430 = vpack.c.b16 %v4338, %v4337
      %v4431 = vpack.c.b16 %v4340, %v4339
      %v4432 = vpack.c.b16 %v4342, %v4341
      %v4433 = vpack.c.b16 %v4344, %v4343
      %v4434 = vpack.c.b16 %v4346, %v4345
      %v4435 = vpack.c.b16 %v4348, %v4347
      %v4436 = vpack.c.b16 %v4350, %v4349
      %v4437 = vpack.c.b16 %v4352, %v4351
      %v4438 = vpack.c.b16 %v4354, %v4353
      %v4439 = vpack.c.b16 %v4356, %v4355
      %v4440 = vpack.c.b16 %v4358, %v4357
      %v4441 = vpack.c.b16 %v4360, %v4359
      %v4442 = vpack.c.b16 %v4362, %v4361
      %v4443 = vpack.c.b16 %v4364, %v4363
      %v4444 = vpack.c.b16 %v4366, %v4365
      %v4445 = vpack.c.b16 %v4368, %v4367
      %v4446 = vpack.c.b16 %v4370, %v4369
      %v4447 = vpack.c.b16 %v4372, %v4371
      %v4448 = vpack.c.b16 %v4374, %v4373
      %v4449 = vpack.c.b16 %v4376, %v4375
      %v4450 = vpack.c.b16 %v4378, %v4377
      %4523 = vmatprep.subr.bf16.mxu0 0
      %4524 = vmatpush1.bf16.msra.mxu0 %v4379
      %4525 = vmatprep.subr.bf16.mxu0 0
      %4526 = vmatpush1.bf16.msra.mxu0 %v4380
      %4527 = vmatprep.subr.bf16.mxu0 0
      %4528 = vmatpush1.bf16.msra.mxu0 %v4381
      %4529 = vmatprep.subr.bf16.mxu0 0
      %4530 = vmatpush1.bf16.msra.mxu0 %v4382
      %4531 = vmatprep.subr.bf16.mxu0 0
      %4532 = vmatpush1.bf16.msra.mxu0 %v4383
      %4533 = vmatprep.subr.bf16.mxu0 0
      %4534 = vmatpush1.bf16.msra.mxu0 %v4384
      %4535 = vmatprep.subr.bf16.mxu0 0
      %4536 = vmatpush1.bf16.msra.mxu0 %v4385
      %4537 = vmatprep.subr.bf16.mxu0 0
      %4538 = vmatpush1.bf16.msra.mxu0 %v4386
      %4539 = vmatprep.subr.bf16.mxu0 0
      %4540 = vmatpush1.bf16.msra.mxu0 %v4387
      %4541 = vmatprep.subr.bf16.mxu0 0
      %4542 = vmatpush1.bf16.msra.mxu0 %v4388
      %4543 = vmatprep.subr.bf16.mxu0 0
      %4544 = vmatpush1.bf16.msra.mxu0 %v4389
      %4545 = vmatprep.subr.bf16.mxu0 0
      %4546 = vmatpush1.bf16.msra.mxu0 %v4390
      %4547 = vmatprep.subr.bf16.mxu0 0
      %4548 = vmatpush1.bf16.msra.mxu0 %v4391
      %4549 = vmatprep.subr.bf16.mxu0 0
      %4550 = vmatpush1.bf16.msra.mxu0 %v4392
      %4551 = vmatprep.subr.bf16.mxu0 0
      %4552 = vmatpush1.bf16.msra.mxu0 %v4393
      %4553 = vmatprep.subr.bf16.mxu0 0
      %4554 = vmatpush1.bf16.msra.mxu0 %v4394
      %4555 = vmatprep.mubr.bf16.mxu0 %v3595
      %4556 = vmatmul.mubr.bf16.gmra.mrb[0].mxu0 0
      %v4557 = vpop.f32.mrb[0].mxu0
      %v4558 = vadd.f32 %v4089, %v4557
      %v4559 = vpop.f32.mrb[0].mxu0
      %v4560 = vpop.f32.mrb[0].mxu0
      %v4561 = vadd.f32 %v4089, %v4560
      %v4562 = vpop.f32.mrb[0].mxu0
      %4563 = vmatprep.mubr.bf16.mxu0 %v3603
      %4564 = vmatmul.mubr.bf16.gmra.mrb[0].mxu0 %v3495
      %v4565 = vpop.f32.mrb[0].mxu0
      %v4566 = vadd.f32 %v4089, %v4565
      %v4567 = vpop.f32.mrb[0].mxu0
      %v4568 = vpop.f32.mrb[0].mxu0
      %v4569 = vadd.f32 %v4089, %v4568
      %v4570 = vpop.f32.mrb[0].mxu0
      %4571 = vmatprep.mubr.bf16.mxu0 %v3611
      %4572 = vmatmul.mubr.bf16.gmra.mrb[0].mxu0 %v3496
      %v4573 = vpop.f32.mrb[0].mxu0
      %v4574 = vadd.f32 %v4089, %v4573
      %v4575 = vpop.f32.mrb[0].mxu0
      %v4576 = vpop.f32.mrb[0].mxu0
      %v4577 = vadd.f32 %v4089, %v4576
      %v4578 = vpop.f32.mrb[0].mxu0
      %4579 = vmatprep.mubr.bf16.mxu0 %v3619
      %4580 = vmatmul.mubr.bf16.gmra.mrb[0].mxu0 %v3497
      %v4581 = vpop.f32.mrb[0].mxu0
      %v4582 = vadd.f32 %v4089, %v4581
      %v4583 = vpop.f32.mrb[0].mxu0
      %v4584 = vpop.f32.mrb[0].mxu0
      %v4585 = vadd.f32 %v4089, %v4584
      %v4586 = vpop.f32.mrb[0].mxu0
      %4587 = vmatprep.mubr.bf16.mxu0 %v3627
      %4588 = vmatmul.mubr.bf16.gmra.mrb[0].mxu0 %v3498
      %v4589 = vpop.f32.mrb[0].mxu0
      %v4590 = vadd.f32 %v4089, %v4589
      %v4591 = vpop.f32.mrb[0].mxu0
      %v4592 = vpop.f32.mrb[0].mxu0
      %v4593 = vadd.f32 %v4089, %v4592
      %v4594 = vpop.f32.mrb[0].mxu0
      %4595 = vmatprep.mubr.bf16.mxu0 %v3635
      %4596 = vmatmul.mubr.bf16.gmra.mrb[0].mxu0 %v3499
      %v4597 = vpop.f32.mrb[0].mxu0
      %v4598 = vadd.f32 %v4089, %v4597
      %v4599 = vpop.f32.mrb[0].mxu0
      %v4600 = vpop.f32.mrb[0].mxu0
      %v4601 = vadd.f32 %v4089, %v4600
      %v4602 = vpop.f32.mrb[0].mxu0
      %4603 = vmatprep.mubr.bf16.mxu0 %v3643
      %4604 = vmatmul.mubr.bf16.gmra.mrb[0].mxu0 %v3500
      %v4605 = vpop.f32.mrb[0].mxu0
      %v4606 = vadd.f32 %v4089, %v4605
      %v4607 = vpop.f32.mrb[0].mxu0
      %v4608 = vpop.f32.mrb[0].mxu0
      %v4609 = vadd.f32 %v4089, %v4608
      %v4610 = vpop.f32.mrb[0].mxu0
      %4611 = vmatprep.mubr.bf16.mxu0 %v3651
      %4612 = vmatmul.mubr.bf16.gmra.mrb[0].mxu0 %v3501
      %v4613 = vpop.f32.mrb[0].mxu0
      %v4614 = vadd.f32 %v4089, %v4613
      %v4615 = vpop.f32.mrb[0].mxu0
      %v4616 = vpop.f32.mrb[0].mxu0
      %v4617 = vadd.f32 %v4089, %v4616
      %v4618 = vpop.f32.mrb[0].mxu0
      %4619 = vmatprep.mubr.bf16.mxu0 %v3659
      %4620 = vmatmul.mubr.bf16.gmra.mrb[0].mxu0 %v3502
      %v4621 = vpop.f32.mrb[0].mxu0
      %v4622 = vadd.f32 %v4089, %v4621
      %v4623 = vpop.f32.mrb[0].mxu0
      %v4624 = vpop.f32.mrb[0].mxu0
      %v4625 = vadd.f32 %v4089, %v4624
      %v4626 = vpop.f32.mrb[0].mxu0
      %4627 = vmatprep.mubr.bf16.mxu0 %v3667
      %4628 = vmatmul.mubr.bf16.gmra.mrb[0].mxu0 %v3503
      %v4629 = vpop.f32.mrb[0].mxu0
      %v4630 = vadd.f32 %v4089, %v4629
      %v4631 = vpop.f32.mrb[0].mxu0
      %v4632 = vpop.f32.mrb[0].mxu0
      %v4633 = vadd.f32 %v4089, %v4632
      %v4634 = vpop.f32.mrb[0].mxu0
      %4635 = vmatprep.mubr.bf16.mxu0 %v3675
      %4636 = vmatmul.mubr.bf16.gmra.mrb[0].mxu0 %v3504
      %v4637 = vpop.f32.mrb[0].mxu0
      %v4638 = vadd.f32 %v4089, %v4637
      %v4639 = vpop.f32.mrb[0].mxu0
      %v4640 = vpop.f32.mrb[0].mxu0
      %v4641 = vadd.f32 %v4089, %v4640
      %v4642 = vpop.f32.mrb[0].mxu0
      %4643 = vmatprep.mubr.bf16.mxu0 %v3683
      %4644 = vmatmul.mubr.bf16.gmra.mrb[0].mxu0 %v3505
      %v4645 = vpop.f32.mrb[0].mxu0
      %v4646 = vadd.f32 %v4089, %v4645
      %v4647 = vpop.f32.mrb[0].mxu0
      %v4648 = vpop.f32.mrb[0].mxu0
      %v4649 = vadd.f32 %v4089, %v4648
      %v4650 = vpop.f32.mrb[0].mxu0
      %4651 = vmatprep.mubr.bf16.mxu0 %v3691
      %4652 = vmatmul.mubr.bf16.gmra.mrb[0].mxu0 %v3506
      %v4653 = vpop.f32.mrb[0].mxu0
      %v4654 = vadd.f32 %v4089, %v4653
      %v4655 = vpop.f32.mrb[0].mxu0
      %v4656 = vpop.f32.mrb[0].mxu0
      %v4657 = vadd.f32 %v4089, %v4656
      %v4658 = vpop.f32.mrb[0].mxu0
      %4659 = vmatprep.mubr.bf16.mxu0 %v3699
      %4660 = vmatmul.mubr.bf16.gmra.mrb[0].mxu0 %v3507
      %v4661 = vpop.f32.mrb[0].mxu0
      %v4662 = vadd.f32 %v4089, %v4661
      %v4663 = vpop.f32.mrb[0].mxu0
      %v4664 = vpop.f32.mrb[0].mxu0
      %v4665 = vadd.f32 %v4089, %v4664
      %v4666 = vpop.f32.mrb[0].mxu0
      %4667 = vmatprep.mubr.bf16.mxu0 %v3707
      %4668 = vmatmul.mubr.bf16.gmra.mrb[0].mxu0 %v3508
      %v4669 = vpop.f32.mrb[0].mxu0
      %v4670 = vadd.f32 %v4089, %v4669
      %v4671 = vpop.f32.mrb[0].mxu0
      %v4672 = vpop.f32.mrb[0].mxu0
      %v4673 = vadd.f32 %v4089, %v4672
      %v4674 = vpop.f32.mrb[0].mxu0
      %4675 = vmatprep.mubr.bf16.mxu0 %v3715
      %4676 = vmatmul.mubr.bf16.gmra.mrb[0].mxu0 %v3509
      %v4677 = vpop.f32.mrb[0].mxu0
      %v4678 = vadd.f32 %v4089, %v4677
      %v4679 = vpop.f32.mrb[0].mxu0
      %v4680 = vpop.f32.mrb[0].mxu0
      %v4681 = vadd.f32 %v4089, %v4680
      %v4682 = vpop.f32.mrb[0].mxu0
      %4683 = vdwg.mxu0
      %4684 = vmatprep.subr.bf16.mxu0 0
      %4685 = vmatpush1.bf16.msra.mxu0 %v4395
      %4686 = vmatprep.subr.bf16.mxu0 0
      %4687 = vmatpush1.bf16.msra.mxu0 %v4396
      %4688 = vmatprep.subr.bf16.mxu0 0
      %4689 = vmatpush1.bf16.msra.mxu0 %v4397
      %4690 = vmatprep.subr.bf16.mxu0 0
      %4691 = vmatpush1.bf16.msra.mxu0 %v4398
      %4692 = vmatprep.subr.bf16.mxu0 0
      %4693 = vmatpush1.bf16.msra.mxu0 %v4399
      %4694 = vmatprep.subr.bf16.mxu0 0
      %4695 = vmatpush1.bf16.msra.mxu0 %v4400
      %4696 = vmatprep.subr.bf16.mxu0 0
      %4697 = vmatpush1.bf16.msra.mxu0 %v4401
      %4698 = vmatprep.subr.bf16.mxu0 0
      %4699 = vmatpush1.bf16.msra.mxu0 %v4402
      %4700 = vmatprep.subr.bf16.mxu0 0
      %4701 = vmatpush1.bf16.msra.mxu0 %v4403
      %4702 = vmatprep.subr.bf16.mxu0 0
      %4703 = vmatpush1.bf16.msra.mxu0 %v4404
      %4704 = vmatprep.subr.bf16.mxu0 0
      %4705 = vmatpush1.bf16.msra.mxu0 %v4405
      %4706 = vmatprep.subr.bf16.mxu0 0
      %4707 = vmatpush1.bf16.msra.mxu0 %v4406
      %4708 = vmatprep.subr.bf16.mxu0 0
      %4709 = vmatpush1.bf16.msra.mxu0 %v4407
      %4710 = vmatprep.subr.bf16.mxu0 0
      %4711 = vmatpush1.bf16.msra.mxu0 %v4408
      %4712 = vmatprep.subr.bf16.mxu0 0
      %4713 = vmatpush1.bf16.msra.mxu0 %v4409
      %4714 = vmatprep.subr.bf16.mxu0 0
      %4715 = vmatpush1.bf16.msra.mxu0 %v4410
      %4716 = vmatprep.mubr.bf16.mxu0 %v3526
      %4717 = vmatmul.mubr.bf16.gmra.mrb[0].mxu0 %v3749
      %v4718 = vpop.f32.mrb[0].mxu0
      %v4719 = vadd.f32 %v4558, %v4718
      %v4720 = vpop.f32.mrb[0].mxu0
      %v4721 = vpop.f32.mrb[0].mxu0
      %v4722 = vadd.f32 %v4561, %v4721
      %v4723 = vpop.f32.mrb[0].mxu0
      %4724 = vmatprep.mubr.bf16.mxu0 %v3527
      %4725 = vmatmul.mubr.bf16.gmra.mrb[0].mxu0 %v3751
      %v4726 = vpop.f32.mrb[0].mxu0
      %v4727 = vadd.f32 %v4566, %v4726
      %v4728 = vpop.f32.mrb[0].mxu0
      %v4729 = vpop.f32.mrb[0].mxu0
      %v4730 = vadd.f32 %v4569, %v4729
      %v4731 = vpop.f32.mrb[0].mxu0
      %4732 = vmatprep.mubr.bf16.mxu0 %v3528
      %4733 = vmatmul.mubr.bf16.gmra.mrb[0].mxu0 %v3753
      %v4734 = vpop.f32.mrb[0].mxu0
      %v4735 = vadd.f32 %v4574, %v4734
      %v4736 = vpop.f32.mrb[0].mxu0
      %v4737 = vpop.f32.mrb[0].mxu0
      %v4738 = vadd.f32 %v4577, %v4737
      %v4739 = vpop.f32.mrb[0].mxu0
      %4740 = vmatprep.mubr.bf16.mxu0 %v3529
      %4741 = vmatmul.mubr.bf16.gmra.mrb[0].mxu0 %v3755
      %v4742 = vpop.f32.mrb[0].mxu0
      %v4743 = vadd.f32 %v4582, %v4742
      %v4744 = vpop.f32.mrb[0].mxu0
      %v4745 = vpop.f32.mrb[0].mxu0
      %v4746 = vadd.f32 %v4585, %v4745
      %v4747 = vpop.f32.mrb[0].mxu0
      %4748 = vmatprep.mubr.bf16.mxu0 %v3530
      %4749 = vmatmul.mubr.bf16.gmra.mrb[0].mxu0 %v3757
      %v4750 = vpop.f32.mrb[0].mxu0
      %v4751 = vadd.f32 %v4590, %v4750
      %v4752 = vpop.f32.mrb[0].mxu0
      %v4753 = vpop.f32.mrb[0].mxu0
      %v4754 = vadd.f32 %v4593, %v4753
      %v4755 = vpop.f32.mrb[0].mxu0
      %4756 = vmatprep.mubr.bf16.mxu0 %v3531
      %4757 = vmatmul.mubr.bf16.gmra.mrb[0].mxu0 %v3759
      %v4758 = vpop.f32.mrb[0].mxu0
      %v4759 = vadd.f32 %v4598, %v4758
      %v4760 = vpop.f32.mrb[0].mxu0
      %v4761 = vpop.f32.mrb[0].mxu0
      %v4762 = vadd.f32 %v4601, %v4761
      %v4763 = vpop.f32.mrb[0].mxu0
      %4764 = vmatprep.mubr.bf16.mxu0 %v3532
      %4765 = vmatmul.mubr.bf16.gmra.mrb[0].mxu0 %v3761
      %v4766 = vpop.f32.mrb[0].mxu0
      %v4767 = vadd.f32 %v4606, %v4766
      %v4768 = vpop.f32.mrb[0].mxu0
      %v4769 = vpop.f32.mrb[0].mxu0
      %v4770 = vadd.f32 %v4609, %v4769
      %v4771 = vpop.f32.mrb[0].mxu0
      %4772 = vmatprep.mubr.bf16.mxu0 %v3533
      %4773 = vmatmul.mubr.bf16.gmra.mrb[0].mxu0 %v3763
      %v4774 = vpop.f32.mrb[0].mxu0
      %v4775 = vadd.f32 %v4614, %v4774
      %v4776 = vpop.f32.mrb[0].mxu0
      %v4777 = vpop.f32.mrb[0].mxu0
      %v4778 = vadd.f32 %v4617, %v4777
      %v4779 = vpop.f32.mrb[0].mxu0
      %4780 = vmatprep.mubr.bf16.mxu0 %v3534
      %4781 = vmatmul.mubr.bf16.gmra.mrb[0].mxu0 %v3765
      %v4782 = vpop.f32.mrb[0].mxu0
      %v4783 = vadd.f32 %v4622, %v4782
      %v4784 = vpop.f32.mrb[0].mxu0
      %v4785 = vpop.f32.mrb[0].mxu0
      %v4786 = vadd.f32 %v4625, %v4785
      %v4787 = vpop.f32.mrb[0].mxu0
      %4788 = vmatprep.mubr.bf16.mxu0 %v3535
      %4789 = vmatmul.mubr.bf16.gmra.mrb[0].mxu0 %v3767
      %v4790 = vpop.f32.mrb[0].mxu0
      %v4791 = vadd.f32 %v4630, %v4790
      %v4792 = vpop.f32.mrb[0].mxu0
      %v4793 = vpop.f32.mrb[0].mxu0
      %v4794 = vadd.f32 %v4633, %v4793
      %v4795 = vpop.f32.mrb[0].mxu0
      %4796 = vmatprep.mubr.bf16.mxu0 %v3536
      %4797 = vmatmul.mubr.bf16.gmra.mrb[0].mxu0 %v3769
      %v4798 = vpop.f32.mrb[0].mxu0
      %v4799 = vadd.f32 %v4638, %v4798
      %v4800 = vpop.f32.mrb[0].mxu0
      %v4801 = vpop.f32.mrb[0].mxu0
      %v4802 = vadd.f32 %v4641, %v4801
      %v4803 = vpop.f32.mrb[0].mxu0
      %4804 = vmatprep.mubr.bf16.mxu0 %v3537
      %4805 = vmatmul.mubr.bf16.gmra.mrb[0].mxu0 %v3771
      %v4806 = vpop.f32.mrb[0].mxu0
      %v4807 = vadd.f32 %v4646, %v4806
      %v4808 = vpop.f32.mrb[0].mxu0
      %v4809 = vpop.f32.mrb[0].mxu0
      %v4810 = vadd.f32 %v4649, %v4809
      %v4811 = vpop.f32.mrb[0].mxu0
      %4812 = vmatprep.mubr.bf16.mxu0 %v3538
      %4813 = vmatmul.mubr.bf16.gmra.mrb[0].mxu0 %v3773
      %v4814 = vpop.f32.mrb[0].mxu0
      %v4815 = vadd.f32 %v4654, %v4814
      %v4816 = vpop.f32.mrb[0].mxu0
      %v4817 = vpop.f32.mrb[0].mxu0
      %v4818 = vadd.f32 %v4657, %v4817
      %v4819 = vpop.f32.mrb[0].mxu0
      %4820 = vmatprep.mubr.bf16.mxu0 %v3539
      %4821 = vmatmul.mubr.bf16.gmra.mrb[0].mxu0 %v3775
      %v4822 = vpop.f32.mrb[0].mxu0
      %v4823 = vadd.f32 %v4662, %v4822
      %v4824 = vpop.f32.mrb[0].mxu0
      %v4825 = vpop.f32.mrb[0].mxu0
      %v4826 = vadd.f32 %v4665, %v4825
      %v4827 = vpop.f32.mrb[0].mxu0
      %4828 = vmatprep.mubr.bf16.mxu0 %v3540
      %4829 = vmatmul.mubr.bf16.gmra.mrb[0].mxu0 %v3777
      %v4830 = vpop.f32.mrb[0].mxu0
      %v4831 = vadd.f32 %v4670, %v4830
      %v4832 = vpop.f32.mrb[0].mxu0
      %v4833 = vpop.f32.mrb[0].mxu0
      %v4834 = vadd.f32 %v4673, %v4833
      %v4835 = vpop.f32.mrb[0].mxu0
      %4836 = vmatprep.mubr.bf16.mxu0 %v3541
      %4837 = vmatmul.mubr.bf16.gmra.mrb[0].mxu0 %v3779
      %v4838 = vpop.f32.mrb[0].mxu0
      %v4839 = vadd.f32 %v4678, %v4838
      %v4840 = vpop.f32.mrb[0].mxu0
      %v4841 = vpop.f32.mrb[0].mxu0
      %v4842 = vadd.f32 %v4681, %v4841
      %v4843 = vpop.f32.mrb[0].mxu0
      %4844 = vdwg.mxu0
      %4845 = vmatprep.subr.bf16.mxu0 0
      %4846 = vmatpush1.bf16.msra.mxu0 %v4411
      %4847 = vmatprep.subr.bf16.mxu0 0
      %4848 = vmatpush1.bf16.msra.mxu0 %v4412
      %4849 = vmatprep.subr.bf16.mxu0 0
      %4850 = vmatpush1.bf16.msra.mxu0 %v4413
      %4851 = vmatprep.subr.bf16.mxu0 0
      %4852 = vmatpush1.bf16.msra.mxu0 %v4414
      %4853 = vmatprep.subr.bf16.mxu0 0
      %4854 = vmatpush1.bf16.msra.mxu0 %v4415
      %4855 = vmatprep.subr.bf16.mxu0 0
      %4856 = vmatpush1.bf16.msra.mxu0 %v4416
      %4857 = vmatprep.subr.bf16.mxu0 0
      %4858 = vmatpush1.bf16.msra.mxu0 %v4417
      %4859 = vmatprep.subr.bf16.mxu0 0
      %4860 = vmatpush1.bf16.msra.mxu0 %v4418
      %4861 = vmatprep.subr.bf16.mxu0 0
      %4862 = vmatpush1.bf16.msra.mxu0 %v4419
      %4863 = vmatprep.subr.bf16.mxu0 0
      %4864 = vmatpush1.bf16.msra.mxu0 %v4420
      %4865 = vmatprep.subr.bf16.mxu0 0
      %4866 = vmatpush1.bf16.msra.mxu0 %v4421
      %4867 = vmatprep.subr.bf16.mxu0 0
      %4868 = vmatpush1.bf16.msra.mxu0 %v4422
      %4869 = vmatprep.subr.bf16.mxu0 0
      %4870 = vmatpush1.bf16.msra.mxu0 %v4423
      %4871 = vmatprep.subr.bf16.mxu0 0
      %4872 = vmatpush1.bf16.msra.mxu0 %v4424
      %4873 = vmatprep.subr.bf16.mxu0 0
      %4874 = vmatpush1.bf16.msra.mxu0 %v4425
      %4875 = vmatprep.subr.bf16.mxu0 0
      %4876 = vmatpush1.bf16.msra.mxu0 %v4426
      %4877 = vmatprep.mubr.bf16.mxu0 %v3824
      %4878 = vmatmul.mubr.bf16.gmra.mrb[0].mxu0 %v3603
      %v4879 = vpop.f32.mrb[0].mxu0
      %v4880 = vadd.f32 %v4719, %v4879
      %v4881 = vpop.f32.mrb[0].mxu0
      %v4882 = vpop.f32.mrb[0].mxu0
      %v4883 = vadd.f32 %v4722, %v4882
      %v4884 = vpop.f32.mrb[0].mxu0
      %4885 = vmatprep.mubr.bf16.mxu0 %v3826
      %4886 = vmatmul.mubr.bf16.gmra.mrb[0].mxu0 %v3611
      %v4887 = vpop.f32.mrb[0].mxu0
      %v4888 = vadd.f32 %v4727, %v4887
      %v4889 = vpop.f32.mrb[0].mxu0
      %v4890 = vpop.f32.mrb[0].mxu0
      %v4891 = vadd.f32 %v4730, %v4890
      %v4892 = vpop.f32.mrb[0].mxu0
      %4893 = vmatprep.mubr.bf16.mxu0 %v3828
      %4894 = vmatmul.mubr.bf16.gmra.mrb[0].mxu0 %v3619
      %v4895 = vpop.f32.mrb[0].mxu0
      %v4896 = vadd.f32 %v4735, %v4895
      %v4897 = vpop.f32.mrb[0].mxu0
      %v4898 = vpop.f32.mrb[0].mxu0
      %v4899 = vadd.f32 %v4738, %v4898
      %v4900 = vpop.f32.mrb[0].mxu0
      %4901 = vmatprep.mubr.bf16.mxu0 %v3830
      %4902 = vmatmul.mubr.bf16.gmra.mrb[0].mxu0 %v3627
      %v4903 = vpop.f32.mrb[0].mxu0
      %v4904 = vadd.f32 %v4743, %v4903
      %v4905 = vpop.f32.mrb[0].mxu0
      %v4906 = vpop.f32.mrb[0].mxu0
      %v4907 = vadd.f32 %v4746, %v4906
      %v4908 = vpop.f32.mrb[0].mxu0
      %4909 = vmatprep.mubr.bf16.mxu0 %v3832
      %4910 = vmatmul.mubr.bf16.gmra.mrb[0].mxu0 %v3635
      %v4911 = vpop.f32.mrb[0].mxu0
      %v4912 = vadd.f32 %v4751, %v4911
      %v4913 = vpop.f32.mrb[0].mxu0
      %v4914 = vpop.f32.mrb[0].mxu0
      %v4915 = vadd.f32 %v4754, %v4914
      %v4916 = vpop.f32.mrb[0].mxu0
      %4917 = vmatprep.mubr.bf16.mxu0 %v3834
      %4918 = vmatmul.mubr.bf16.gmra.mrb[0].mxu0 %v3643
      %v4919 = vpop.f32.mrb[0].mxu0
      %v4920 = vadd.f32 %v4759, %v4919
      %v4921 = vpop.f32.mrb[0].mxu0
      %v4922 = vpop.f32.mrb[0].mxu0
      %v4923 = vadd.f32 %v4762, %v4922
      %v4924 = vpop.f32.mrb[0].mxu0
      %4925 = vmatprep.mubr.bf16.mxu0 %v3836
      %4926 = vmatmul.mubr.bf16.gmra.mrb[0].mxu0 %v3651
      %v4927 = vpop.f32.mrb[0].mxu0
      %v4928 = vadd.f32 %v4767, %v4927
      %v4929 = vpop.f32.mrb[0].mxu0
      %v4930 = vpop.f32.mrb[0].mxu0
      %v4931 = vadd.f32 %v4770, %v4930
      %v4932 = vpop.f32.mrb[0].mxu0
      %4933 = vmatprep.mubr.bf16.mxu0 %v3838
      %4934 = vmatmul.mubr.bf16.gmra.mrb[0].mxu0 %v3659
      %v4935 = vpop.f32.mrb[0].mxu0
      %v4936 = vadd.f32 %v4775, %v4935
      %v4937 = vpop.f32.mrb[0].mxu0
      %v4938 = vpop.f32.mrb[0].mxu0
      %v4939 = vadd.f32 %v4778, %v4938
      %v4940 = vpop.f32.mrb[0].mxu0
      %4941 = vmatprep.mubr.bf16.mxu0 %v3840
      %4942 = vmatmul.mubr.bf16.gmra.mrb[0].mxu0 %v3667
      %v4943 = vpop.f32.mrb[0].mxu0
      %v4944 = vadd.f32 %v4783, %v4943
      %v4945 = vpop.f32.mrb[0].mxu0
      %v4946 = vpop.f32.mrb[0].mxu0
      %v4947 = vadd.f32 %v4786, %v4946
      %v4948 = vpop.f32.mrb[0].mxu0
      %4949 = vmatprep.mubr.bf16.mxu0 %v3842
      %4950 = vmatmul.mubr.bf16.gmra.mrb[0].mxu0 %v3675
      %v4951 = vpop.f32.mrb[0].mxu0
      %v4952 = vadd.f32 %v4791, %v4951
      %v4953 = vpop.f32.mrb[0].mxu0
      %v4954 = vpop.f32.mrb[0].mxu0
      %v4955 = vadd.f32 %v4794, %v4954
      %v4956 = vpop.f32.mrb[0].mxu0
      %4957 = vmatprep.mubr.bf16.mxu0 %v3844
      %4958 = vmatmul.mubr.bf16.gmra.mrb[0].mxu0 %v3683
      %v4959 = vpop.f32.mrb[0].mxu0
      %v4960 = vadd.f32 %v4799, %v4959
      %v4961 = vpop.f32.mrb[0].mxu0
      %v4962 = vpop.f32.mrb[0].mxu0
      %v4963 = vadd.f32 %v4802, %v4962
      %v4964 = vpop.f32.mrb[0].mxu0
      %4965 = vmatprep.mubr.bf16.mxu0 %v3846
      %4966 = vmatmul.mubr.bf16.gmra.mrb[0].mxu0 %v3691
      %v4967 = vpop.f32.mrb[0].mxu0
      %v4968 = vadd.f32 %v4807, %v4967
      %v4969 = vpop.f32.mrb[0].mxu0
      %v4970 = vpop.f32.mrb[0].mxu0
      %v4971 = vadd.f32 %v4810, %v4970
      %v4972 = vpop.f32.mrb[0].mxu0
      %4973 = vmatprep.mubr.bf16.mxu0 %v3848
      %4974 = vmatmul.mubr.bf16.gmra.mrb[0].mxu0 %v3699
      %v4975 = vpop.f32.mrb[0].mxu0
      %v4976 = vadd.f32 %v4815, %v4975
      %v4977 = vpop.f32.mrb[0].mxu0
      %v4978 = vpop.f32.mrb[0].mxu0
      %v4979 = vadd.f32 %v4818, %v4978
      %v4980 = vpop.f32.mrb[0].mxu0
      %4981 = vmatprep.mubr.bf16.mxu0 %v3850
      %4982 = vmatmul.mubr.bf16.gmra.mrb[0].mxu0 %v3707
      %v4983 = vpop.f32.mrb[0].mxu0
      %v4984 = vadd.f32 %v4823, %v4983
      %v4985 = vpop.f32.mrb[0].mxu0
      %v4986 = vpop.f32.mrb[0].mxu0
      %v4987 = vadd.f32 %v4826, %v4986
      %v4988 = vpop.f32.mrb[0].mxu0
      %4989 = vmatprep.mubr.bf16.mxu0 %v3852
      %4990 = vmatmul.mubr.bf16.gmra.mrb[0].mxu0 %v3715
      %v4991 = vpop.f32.mrb[0].mxu0
      %v4992 = vadd.f32 %v4831, %v4991
      %v4993 = vpop.f32.mrb[0].mxu0
      %v4994 = vpop.f32.mrb[0].mxu0
      %v4995 = vadd.f32 %v4834, %v4994
      %v4996 = vpop.f32.mrb[0].mxu0
      %4997 = vmatprep.mubr.bf16.mxu0 %v3854
      %4998 = vmatmul.mubr.bf16.gmra.mrb[0].mxu0 %v3803
      %v4999 = vpop.f32.mrb[0].mxu0
      %v5000 = vadd.f32 %v4839, %v4999
      %v5001 = vpop.f32.mrb[0].mxu0
      %v5002 = vpop.f32.mrb[0].mxu0
      %v5003 = vadd.f32 %v4842, %v5002
      %v5004 = vpop.f32.mrb[0].mxu0
      %5005 = vdwg.mxu0
      %5006 = vmatprep.subr.bf16.mxu0 0
      %5007 = vmatpush1.bf16.msra.mxu0 %v4427
      %5008 = vmatprep.subr.bf16.mxu0 0
      %5009 = vmatpush1.bf16.msra.mxu0 %v4428
      %5010 = vmatprep.subr.bf16.mxu0 0
      %5011 = vmatpush1.bf16.msra.mxu0 %v4429
      %5012 = vmatprep.subr.bf16.mxu0 0
      %5013 = vmatpush1.bf16.msra.mxu0 %v4430
      %5014 = vmatprep.subr.bf16.mxu0 0
      %5015 = vmatpush1.bf16.msra.mxu0 %v4431
      %5016 = vmatprep.subr.bf16.mxu0 0
      %5017 = vmatpush1.bf16.msra.mxu0 %v4432
      %5018 = vmatprep.subr.bf16.mxu0 0
      %5019 = vmatpush1.bf16.msra.mxu0 %v4433
      %5020 = vmatprep.subr.bf16.mxu0 0
      %5021 = vmatpush1.bf16.msra.mxu0 %v4434
      %5022 = vmatprep.subr.bf16.mxu0 0
      %5023 = vmatpush1.bf16.msra.mxu0 %v4435
      %5024 = vmatprep.subr.bf16.mxu0 0
      %5025 = vmatpush1.bf16.msra.mxu0 %v4436
      %5026 = vmatprep.subr.bf16.mxu0 0
      %5027 = vmatpush1.bf16.msra.mxu0 %v4437
      %5028 = vmatprep.subr.bf16.mxu0 0
      %5029 = vmatpush1.bf16.msra.mxu0 %v4438
      %5030 = vmatprep.subr.bf16.mxu0 0
      %5031 = vmatpush1.bf16.msra.mxu0 %v4439
      %5032 = vmatprep.subr.bf16.mxu0 0
      %5033 = vmatpush1.bf16.msra.mxu0 %v4440
      %5034 = vmatprep.subr.bf16.mxu0 0
      %5035 = vmatpush1.bf16.msra.mxu0 %v4441
      %5036 = vmatprep.subr.bf16.mxu0 0
      %5037 = vmatpush1.bf16.msra.mxu0 %v4442
      %5038 = vmatprep.mubr.bf16.mxu0 %v3611
      %5039 = vmatmul.mubr.bf16.gmra.mrb[0].mxu0 %v3559
      %v5040 = vpop.f32.mrb[0].mxu0
      %v5041 = vadd.f32 %v4880, %v5040
      %v5042 = vpop.f32.mrb[0].mxu0
      %v5043 = vpop.f32.mrb[0].mxu0
      %v5044 = vadd.f32 %v4883, %v5043
      %v5045 = vpop.f32.mrb[0].mxu0
      %5046 = vmatprep.mubr.bf16.mxu0 %v3619
      %5047 = vmatmul.mubr.bf16.gmra.mrb[0].mxu0 %v3560
      %v5048 = vpop.f32.mrb[0].mxu0
      %v5049 = vadd.f32 %v4888, %v5048
      %v5050 = vpop.f32.mrb[0].mxu0
      %v5051 = vpop.f32.mrb[0].mxu0
      %v5052 = vadd.f32 %v4891, %v5051
      %v5053 = vpop.f32.mrb[0].mxu0
      %5054 = vmatprep.mubr.bf16.mxu0 %v3627
      %5055 = vmatmul.mubr.bf16.gmra.mrb[0].mxu0 %v3561
      %v5056 = vpop.f32.mrb[0].mxu0
      %v5057 = vadd.f32 %v4896, %v5056
      %v5058 = vpop.f32.mrb[0].mxu0
      %v5059 = vpop.f32.mrb[0].mxu0
      %v5060 = vadd.f32 %v4899, %v5059
      %v5061 = vpop.f32.mrb[0].mxu0
      %5062 = vmatprep.mubr.bf16.mxu0 %v3635
      %5063 = vmatmul.mubr.bf16.gmra.mrb[0].mxu0 %v3562
      %v5064 = vpop.f32.mrb[0].mxu0
      %v5065 = vadd.f32 %v4904, %v5064
      %v5066 = vpop.f32.mrb[0].mxu0
      %v5067 = vpop.f32.mrb[0].mxu0
      %v5068 = vadd.f32 %v4907, %v5067
      %v5069 = vpop.f32.mrb[0].mxu0
      %5070 = vmatprep.mubr.bf16.mxu0 %v3643
      %5071 = vmatmul.mubr.bf16.gmra.mrb[0].mxu0 %v3563
      %v5072 = vpop.f32.mrb[0].mxu0
      %v5073 = vadd.f32 %v4912, %v5072
      %v5074 = vpop.f32.mrb[0].mxu0
      %v5075 = vpop.f32.mrb[0].mxu0
      %v5076 = vadd.f32 %v4915, %v5075
      %v5077 = vpop.f32.mrb[0].mxu0
      %5078 = vmatprep.mubr.bf16.mxu0 %v3651
      %5079 = vmatmul.mubr.bf16.gmra.mrb[0].mxu0 %v3564
      %v5080 = vpop.f32.mrb[0].mxu0
      %v5081 = vadd.f32 %v4920, %v5080
      %v5082 = vpop.f32.mrb[0].mxu0
      %v5083 = vpop.f32.mrb[0].mxu0
      %v5084 = vadd.f32 %v4923, %v5083
      %v5085 = vpop.f32.mrb[0].mxu0
      %5086 = vmatprep.mubr.bf16.mxu0 %v3659
      %5087 = vmatmul.mubr.bf16.gmra.mrb[0].mxu0 %v3565
      %v5088 = vpop.f32.mrb[0].mxu0
      %v5089 = vadd.f32 %v4928, %v5088
      %v5090 = vpop.f32.mrb[0].mxu0
      %v5091 = vpop.f32.mrb[0].mxu0
      %v5092 = vadd.f32 %v4931, %v5091
      %v5093 = vpop.f32.mrb[0].mxu0
      %5094 = vmatprep.mubr.bf16.mxu0 %v3667
      %5095 = vmatmul.mubr.bf16.gmra.mrb[0].mxu0 %v3566
      %v5096 = vpop.f32.mrb[0].mxu0
      %v5097 = vadd.f32 %v4936, %v5096
      %v5098 = vpop.f32.mrb[0].mxu0
      %v5099 = vpop.f32.mrb[0].mxu0
      %v5100 = vadd.f32 %v4939, %v5099
      %v5101 = vpop.f32.mrb[0].mxu0
      %5102 = vmatprep.mubr.bf16.mxu0 %v3675
      %5103 = vmatmul.mubr.bf16.gmra.mrb[0].mxu0 %v3567
      %v5104 = vpop.f32.mrb[0].mxu0
      %v5105 = vadd.f32 %v4944, %v5104
      %v5106 = vpop.f32.mrb[0].mxu0
      %v5107 = vpop.f32.mrb[0].mxu0
      %v5108 = vadd.f32 %v4947, %v5107
      %v5109 = vpop.f32.mrb[0].mxu0
      %5110 = vmatprep.mubr.bf16.mxu0 %v3683
      %5111 = vmatmul.mubr.bf16.gmra.mrb[0].mxu0 %v3568
      %v5112 = vpop.f32.mrb[0].mxu0
      %v5113 = vadd.f32 %v4952, %v5112
      %v5114 = vpop.f32.mrb[0].mxu0
      %v5115 = vpop.f32.mrb[0].mxu0
      %v5116 = vadd.f32 %v4955, %v5115
      %v5117 = vpop.f32.mrb[0].mxu0
      %5118 = vmatprep.mubr.bf16.mxu0 %v3691
      %5119 = vmatmul.mubr.bf16.gmra.mrb[0].mxu0 %v3569
      %v5120 = vpop.f32.mrb[0].mxu0
      %v5121 = vadd.f32 %v4960, %v5120
      %v5122 = vpop.f32.mrb[0].mxu0
      %v5123 = vpop.f32.mrb[0].mxu0
      %v5124 = vadd.f32 %v4963, %v5123
      %v5125 = vpop.f32.mrb[0].mxu0
      %5126 = vmatprep.mubr.bf16.mxu0 %v3699
      %5127 = vmatmul.mubr.bf16.gmra.mrb[0].mxu0 %v3570
      %v5128 = vpop.f32.mrb[0].mxu0
      %v5129 = vadd.f32 %v4968, %v5128
      %v5130 = vpop.f32.mrb[0].mxu0
      %v5131 = vpop.f32.mrb[0].mxu0
      %v5132 = vadd.f32 %v4971, %v5131
      %v5133 = vpop.f32.mrb[0].mxu0
      %5134 = vmatprep.mubr.bf16.mxu0 %v3707
      %5135 = vmatmul.mubr.bf16.gmra.mrb[0].mxu0 %v3571
      %v5136 = vpop.f32.mrb[0].mxu0
      %v5137 = vadd.f32 %v4976, %v5136
      %v5138 = vpop.f32.mrb[0].mxu0
      %v5139 = vpop.f32.mrb[0].mxu0
      %v5140 = vadd.f32 %v4979, %v5139
      %v5141 = vpop.f32.mrb[0].mxu0
      %5142 = vmatprep.mubr.bf16.mxu0 %v3715
      %5143 = vmatmul.mubr.bf16.gmra.mrb[0].mxu0 %v3572
      %v5144 = vpop.f32.mrb[0].mxu0
      %v5145 = vadd.f32 %v4984, %v5144
      %v5146 = vpop.f32.mrb[0].mxu0
      %v5147 = vpop.f32.mrb[0].mxu0
      %v5148 = vadd.f32 %v4987, %v5147
      %v5149 = vpop.f32.mrb[0].mxu0
      %5150 = vmatprep.mubr.bf16.mxu0 %v3803
      %5151 = vmatmul.mubr.bf16.gmra.mrb[0].mxu0 %v3573
      %v5152 = vpop.f32.mrb[0].mxu0
      %v5153 = vadd.f32 %v4992, %v5152
      %v5154 = vpop.f32.mrb[0].mxu0
      %v5155 = vpop.f32.mrb[0].mxu0
      %v5156 = vadd.f32 %v4995, %v5155
      %v5157 = vpop.f32.mrb[0].mxu0
      %5158 = vmatprep.mubr.bf16.mxu0 %v3874
      %5159 = vmatmul.mubr.bf16.gmra.mrb[0].mxu0 %v3574
      %v5160 = vpop.f32.mrb[0].mxu0
      %v5161 = vadd.f32 %v5000, %v5160
      %v5162 = vpop.f32.mrb[0].mxu0
      %v5163 = vpop.f32.mrb[0].mxu0
      %v5164 = vadd.f32 %v5003, %v5163
      %v5165 = vpop.f32.mrb[0].mxu0
      %5166 = vdwg.mxu0
      %5167 = vmatprep.subr.bf16.mxu0 0
      %5168 = vmatpush1.bf16.msra.mxu0 %v4443
      %5169 = vmatprep.subr.bf16.mxu0 0
      %5170 = vmatpush1.bf16.msra.mxu0 %v4444
      %5171 = vmatprep.subr.bf16.mxu0 0
      %5172 = vmatpush1.bf16.msra.mxu0 %v4445
      %5173 = vmatprep.subr.bf16.mxu0 0
      %5174 = vmatpush1.bf16.msra.mxu0 %v4446
      %5175 = vmatprep.subr.bf16.mxu0 0
      %5176 = vmatpush1.bf16.msra.mxu0 %v4447
      %5177 = vmatprep.subr.bf16.mxu0 0
      %5178 = vmatpush1.bf16.msra.mxu0 %v4448
      %5179 = vmatprep.subr.bf16.mxu0 0
      %5180 = vmatpush1.bf16.msra.mxu0 %v4449
      %5181 = vmatprep.subr.bf16.mxu0 0
      %5182 = vmatpush1.bf16.msra.mxu0 %v4450
      %5183 = vmatprep.subr.bf16.mxu0 0
      %5184 = vmatpush1.bf16.msra.mxu0 0
      %5185 = vmatprep.subr.bf16.mxu0 0
      %5186 = vmatpush1.bf16.msra.mxu0 0
      %5187 = vmatprep.subr.bf16.mxu0 0
      %5188 = vmatpush1.bf16.msra.mxu0 0
      %5189 = vmatprep.subr.bf16.mxu0 0
      %5190 = vmatpush1.bf16.msra.mxu0 0
      %5191 = vmatprep.subr.bf16.mxu0 0
      %5192 = vmatpush1.bf16.msra.mxu0 0
      %5193 = vmatprep.subr.bf16.mxu0 0
      %5194 = vmatpush1.bf16.msra.mxu0 0
      %5195 = vmatprep.subr.bf16.mxu0 0
      %5196 = vmatpush1.bf16.msra.mxu0 0
      %5197 = vmatprep.subr.bf16.mxu0 0
      %5198 = vmatpush1.bf16.msra.mxu0 0
      %5199 = vmatprep.mubr.bf16.mxu0 0
      %5200 = vmatmul.mubr.bf16.gmra.mrb[0].mxu0 %v3894
      %v5201 = vpop.f32.mrb[0].mxu0
      %v5202 = vadd.f32 %v5041, %v5201
      %v5203 = vpop.f32.mrb[0].mxu0
      %v5204 = vpop.f32.mrb[0].mxu0
      %v5205 = vadd.f32 %v5044, %v5204
      %v5206 = vpop.f32.mrb[0].mxu0
      %5207 = vmatprep.mubr.bf16.mxu0 0
      %5208 = vmatmul.mubr.bf16.gmra.mrb[0].mxu0 %v3896
      %v5209 = vpop.f32.mrb[0].mxu0
      %v5210 = vadd.f32 %v5049, %v5209
      %v5211 = vpop.f32.mrb[0].mxu0
      %v5212 = vpop.f32.mrb[0].mxu0
      %v5213 = vadd.f32 %v5052, %v5212
      %v5214 = vpop.f32.mrb[0].mxu0
      %5215 = vmatprep.mubr.bf16.mxu0 0
      %5216 = vmatmul.mubr.bf16.gmra.mrb[0].mxu0 %v3898
      %v5217 = vpop.f32.mrb[0].mxu0
      %v5218 = vadd.f32 %v5057, %v5217
      %v5219 = vpop.f32.mrb[0].mxu0
      %v5220 = vpop.f32.mrb[0].mxu0
      %v5221 = vadd.f32 %v5060, %v5220
      %v5222 = vpop.f32.mrb[0].mxu0
      %5223 = vmatprep.mubr.bf16.mxu0 0
      %5224 = vmatmul.mubr.bf16.gmra.mrb[0].mxu0 %v3900
      %v5225 = vpop.f32.mrb[0].mxu0
      %v5226 = vadd.f32 %v5065, %v5225
      %v5227 = vpop.f32.mrb[0].mxu0
      %v5228 = vpop.f32.mrb[0].mxu0
      %v5229 = vadd.f32 %v5068, %v5228
      %v5230 = vpop.f32.mrb[0].mxu0
      %5231 = vmatprep.mubr.bf16.mxu0 0
      %5232 = vmatmul.mubr.bf16.gmra.mrb[0].mxu0 %v3902
      %v5233 = vpop.f32.mrb[0].mxu0
      %v5234 = vadd.f32 %v5073, %v5233
      %v5235 = vpop.f32.mrb[0].mxu0
      %v5236 = vpop.f32.mrb[0].mxu0
      %v5237 = vadd.f32 %v5076, %v5236
      %v5238 = vpop.f32.mrb[0].mxu0
      %5239 = vmatprep.mubr.bf16.mxu0 0
      %5240 = vmatmul.mubr.bf16.gmra.mrb[0].mxu0 %v3904
      %v5241 = vpop.f32.mrb[0].mxu0
      %v5242 = vadd.f32 %v5081, %v5241
      %v5243 = vpop.f32.mrb[0].mxu0
      %v5244 = vpop.f32.mrb[0].mxu0
      %v5245 = vadd.f32 %v5084, %v5244
      %v5246 = vpop.f32.mrb[0].mxu0
      %5247 = vmatprep.mubr.bf16.mxu0 0
      %5248 = vmatmul.mubr.bf16.gmra.mrb[0].mxu0 %v3906
      %v5249 = vpop.f32.mrb[0].mxu0
      %v5250 = vadd.f32 %v5089, %v5249
      %v5251 = vpop.f32.mrb[0].mxu0
      %v5252 = vpop.f32.mrb[0].mxu0
      %v5253 = vadd.f32 %v5092, %v5252
      %v5254 = vpop.f32.mrb[0].mxu0
      %5255 = vmatprep.mubr.bf16.mxu0 0
      %5256 = vmatmul.mubr.bf16.gmra.mrb[0].mxu0 %v3908
      %v5257 = vpop.f32.mrb[0].mxu0
      %v5258 = vadd.f32 %v5097, %v5257
      %v5259 = vpop.f32.mrb[0].mxu0
      %v5260 = vpop.f32.mrb[0].mxu0
      %v5261 = vadd.f32 %v5100, %v5260
      %v5262 = vpop.f32.mrb[0].mxu0
      %5263 = vmatprep.mubr.bf16.mxu0 0
      %5264 = vmatmul.mubr.bf16.gmra.mrb[0].mxu0 %v3910
      %v5265 = vpop.f32.mrb[0].mxu0
      %v5266 = vadd.f32 %v5105, %v5265
      %v5267 = vpop.f32.mrb[0].mxu0
      %v5268 = vpop.f32.mrb[0].mxu0
      %v5269 = vadd.f32 %v5108, %v5268
      %v5270 = vpop.f32.mrb[0].mxu0
      %5271 = vmatprep.mubr.bf16.mxu0 0
      %5272 = vmatmul.mubr.bf16.gmra.mrb[0].mxu0 %v3912
      %v5273 = vpop.f32.mrb[0].mxu0
      %v5274 = vadd.f32 %v5113, %v5273
      %v5275 = vpop.f32.mrb[0].mxu0
      %v5276 = vpop.f32.mrb[0].mxu0
      %v5277 = vadd.f32 %v5116, %v5276
      %v5278 = vpop.f32.mrb[0].mxu0
      %5279 = vmatprep.mubr.bf16.mxu0 0
      %5280 = vmatmul.mubr.bf16.gmra.mrb[0].mxu0 %v3914
      %v5281 = vpop.f32.mrb[0].mxu0
      %v5282 = vadd.f32 %v5121, %v5281
      %v5283 = vpop.f32.mrb[0].mxu0
      %v5284 = vpop.f32.mrb[0].mxu0
      %v5285 = vadd.f32 %v5124, %v5284
      %v5286 = vpop.f32.mrb[0].mxu0
      %5287 = vmatprep.mubr.bf16.mxu0 0
      %5288 = vmatmul.mubr.bf16.gmra.mrb[0].mxu0 %v3916
      %v5289 = vpop.f32.mrb[0].mxu0
      %v5290 = vadd.f32 %v5129, %v5289
      %v5291 = vpop.f32.mrb[0].mxu0
      %v5292 = vpop.f32.mrb[0].mxu0
      %v5293 = vadd.f32 %v5132, %v5292
      %v5294 = vpop.f32.mrb[0].mxu0
      %5295 = vmatprep.mubr.bf16.mxu0 0
      %5296 = vmatmul.mubr.bf16.gmra.mrb[0].mxu0 %v3918
      %v5297 = vpop.f32.mrb[0].mxu0
      %v5298 = vadd.f32 %v5137, %v5297
      %v5299 = vpop.f32.mrb[0].mxu0
      %v5300 = vpop.f32.mrb[0].mxu0
      %v5301 = vadd.f32 %v5140, %v5300
      %v5302 = vpop.f32.mrb[0].mxu0
      %5303 = vmatprep.mubr.bf16.mxu0 0
      %5304 = vmatmul.mubr.bf16.gmra.mrb[0].mxu0 %v3920
      %v5305 = vpop.f32.mrb[0].mxu0
      %v5306 = vadd.f32 %v5145, %v5305
      %v5307 = vpop.f32.mrb[0].mxu0
      %v5308 = vpop.f32.mrb[0].mxu0
      %v5309 = vadd.f32 %v5148, %v5308
      %v5310 = vpop.f32.mrb[0].mxu0
      %5311 = vmatprep.mubr.bf16.mxu0 0
      %5312 = vmatmul.mubr.bf16.gmra.mrb[0].mxu0 %v3922
      %v5313 = vpop.f32.mrb[0].mxu0
      %v5314 = vadd.f32 %v5153, %v5313
      %v5315 = vpop.f32.mrb[0].mxu0
      %v5316 = vpop.f32.mrb[0].mxu0
      %v5317 = vadd.f32 %v5156, %v5316
      %v5318 = vpop.f32.mrb[0].mxu0
      %5319 = vmatprep.mubr.bf16.mxu0 0
      %5320 = vmatmul.mubr.bf16.gmra.mrb[0].mxu0 %v3923
      %v5321 = vpop.f32.mrb[0].mxu0
      %v5322 = vadd.f32 %v5161, %v5321
      %v5323 = vpop.f32.mrb[0].mxu0
      %v5324 = vpop.f32.mrb[0].mxu0
      %v5325 = vadd.f32 %v5164, %v5324
      %v5326 = vpop.f32.mrb[0].mxu0
      %5327 = vdwg.mxu0
      %vm5328 = vcmask 23552
      %5329 = vst.msk [vmem:[%s278] sm:$0xff] %vm5328, %v5202
      %5330 = vst.msk [vmem:[%s278 + $0x8] sm:$0xff] %vm5328, %v5205
      %5331 = vst.msk [vmem:[%s278 + $0x10] sm:$0xff] %vm5328, %v5210
      %5332 = vst.msk [vmem:[%s278 + $0x18] sm:$0xff] %vm5328, %v5213
      %5333 = vst.msk [vmem:[%s278 + $0x20] sm:$0xff] %vm5328, %v5218
      %5334 = vst.msk [vmem:[%s278 + $0x28] sm:$0xff] %vm5328, %v5221
      %5335 = vst.msk [vmem:[%s278 + $0x30] sm:$0xff] %vm5328, %v5226
      %5336 = vst.msk [vmem:[%s278 + $0x38] sm:$0xff] %vm5328, %v5229
      %5337 = vst.msk [vmem:[%s278 + $0x40] sm:$0xff] %vm5328, %v5234
      %5338 = vst.msk [vmem:[%s278 + $0x48] sm:$0xff] %vm5328, %v5237
      %5339 = vst.msk [vmem:[%s278 + $0x50] sm:$0xff] %vm5328, %v5242
      %5340 = vst.msk [vmem:[%s278 + $0x58] sm:$0xff] %vm5328, %v5245
      %5341 = vst.msk [vmem:[%s278 + $0x60] sm:$0xff] %vm5328, %v5250
      %5342 = vst.msk [vmem:[%s278 + $0x68] sm:$0xff] %vm5328, %v5253
      %5343 = vst.msk [vmem:[%s278 + $0x70] sm:$0xff] %vm5328, %v5258
      %5344 = vst.msk [vmem:[%s278 + $0x78] sm:$0xff] %vm5328, %v5261
      %5345 = vst.msk [vmem:[%s278 + $0x80] sm:$0xff] %vm5328, %v5266
      %5346 = vst.msk [vmem:[%s278 + $0x88] sm:$0xff] %vm5328, %v5269
      %5347 = vst.msk [vmem:[%s278 + $0x90] sm:$0xff] %vm5328, %v5274
      %5348 = vst.msk [vmem:[%s278 + $0x98] sm:$0xff] %vm5328, %v5277
      %5349 = vst.msk [vmem:[%s278 + $0xa0] sm:$0xff] %vm5328, %v5282
      %5350 = vst.msk [vmem:[%s278 + $0xa8] sm:$0xff] %vm5328, %v5285
      %5351 = vst.msk [vmem:[%s278 + $0xb0] sm:$0xff] %vm5328, %v5290
      %5352 = vst.msk [vmem:[%s278 + $0xb8] sm:$0xff] %vm5328, %v5293
      %5353 = vst.msk [vmem:[%s278 + $0xc0] sm:$0xff] %vm5328, %v5298
      %5354 = vst.msk [vmem:[%s278 + $0xc8] sm:$0xff] %vm5328, %v5301
      %5355 = vst.msk [vmem:[%s278 + $0xd0] sm:$0xff] %vm5328, %v5306
      %5356 = vst.msk [vmem:[%s278 + $0xd8] sm:$0xff] %vm5328, %v5309
      %5357 = vst.msk [vmem:[%s278 + $0xe0] sm:$0xff] %vm5328, %v5314
      %5358 = vst.msk [vmem:[%s278 + $0xe8] sm:$0xff] %vm5328, %v5317
      %5359 = vst.msk [vmem:[%s278 + $0xf0] sm:$0xff] %vm5328, %v5322
      %5360 = vst.msk [vmem:[%s278 + $0xf8] sm:$0xff] %vm5328, %v5325
      %p5361 = scmp.lt.s32.totalorder %s18, 1
      %s5362 = scalar_select %p5361, %s18, 1
      %s5363 = smul.addr %s5362, 32
      %s5364 = smul.addr %s5363, 8
      %s5365 = scalar_lea.vmem %s7, %s5364
      // Predicated region
      $region49: #{dip_model_forward.1} parent=47 // pred_check
        %p5366 = pneg %p188
      $region50: #{dip_model_forward.1} parent=47 // pred_check_branch
        %5368 = sbr.rel (%p5366) target = $region52
      $region51: #{dip_model_forward.1} parent=47 // pred_region
        _
      $region52: #{dip_model_forward.1} parent=47 // pred_fallthru
        _
    $region48: #{dip_model_forward.1} parent=5 // pred_fallthru
      _
    %p5369 = scmp.le.s32.totalorder 2, %s13
    // Predicated region
    $region53: #{dip_model_forward.1} parent=5 // pred_check
      %p5370 = pneg %p5369
    $region54: #{dip_model_forward.1} parent=5 // pred_check_branch
      %5372 = sbr.rel (%p5370) target = $region56
    $region55: #{dip_model_forward.1} parent=5 // pred_region
      %s5373 = ssub.s32 %s13, 2
      // Predicated region
      $region57: #{dip_model_forward.1} parent=55 // pred_check
        %p5374 = pneg %p194
      $region58: #{dip_model_forward.1} parent=55 // pred_check_branch
        %5376 = sbr.rel (%p5374) target = $region60
      $region59: #{dip_model_forward.1} parent=55 // pred_region
        %p5377 = scmp.lt.s32.totalorder %s19, 1
        %s5378 = scalar_select %p5377, %s19, 1
        %s5379 = smul.addr %s5378, 32
        %s5380 = smul.addr %s5379, 8
        %s5381 = scalar_lea.vmem %s7, %s5380
      $region60: #{dip_model_forward.1} parent=55 // pred_fallthru
        _
    $region56: #{dip_model_forward.1} parent=5 // pred_fallthru
      _
  $region6: #{dip_model_forward.1} parent=0 // loop_footer
    %s17 = sadd.s32 1, %s13
  $region7: #{dip_model_forward.1} parent=0 // loop_footer_branch
    %12 = sbr.rel target = $region3
  $region8: #{dip_model_forward.1} parent=0 // loop_exit
    _

</llo_original>
